<compile_context>
chip_gen: v6e
topology: v6e:2x2x1
jax: 0.10.0
libtpu: 0.0.40
codegen_flags: <defaults>
</compile_context>

<pallas_src>
import jax
import jax.numpy as jnp
from jax import lax
from jax.experimental import pallas as pl
from jax.experimental.pallas import tpu as pltpu

LN_EPS = 1e-5  # PyTorch nn.LayerNorm default


def _layernorm(x, gamma, beta):
    mu = jnp.mean(x, axis=-1, keepdims=True)
    var = jnp.mean(jnp.square(x - mu), axis=-1, keepdims=True)
    return (x - mu) * lax.rsqrt(var + LN_EPS) * gamma + beta


def ssm_layer_kernel(
    x_ref,                       # (TB, TL, D) f32/bf16  input chunk
    g1_ref, b1_ref,              # (1, D) f32            LayerNorm1 weight/bias
    lam_pow_ref,                 # (TL, P) f32           row t = lam**(t+1)
    bmat_ref,                    # (D, P) bf16           B^T
    cmat_ref,                    # (P, D) bf16           C^T
    dvec_ref,                    # (1, D) f32            feedthrough D
    g2_ref, b2_ref,              # (1, D) f32            LayerNorm2 weight/bias
    w1_ref, bi1_ref,             # (D, D) bf16, (1, D) f32   MLP linear1 (W^T, bias)
    w2_ref, bi2_ref,             # (D, D) bf16, (1, D) f32   MLP linear2 (W^T, bias)
    o_ref,                       # (TB, TL, D)            output chunk (same dtype as x)
    h_ref,                       # (TB, P) f32            scratch: SSM state carried across L-chunks
):
    TB, TL, D = x_ref.shape
    P = h_ref.shape[1]
    M = TB * TL

    # Reset the carried SSM state at the first sequence chunk of every batch chunk.
    @pl.when(pl.program_id(1) == 0)
    def _():
        h_ref[...] = jnp.zeros_like(h_ref)

    # ---- hoisted parameter loads (JAX does not CSE broadcasts; load once) ----
    g1 = g1_ref[...]; b1 = b1_ref[...]
    g2 = g2_ref[...]; b2 = b2_ref[...]
    dvec = dvec_ref[...]
    bi1 = bi1_ref[...]; bi2 = bi2_ref[...]
    lam_pow = lam_pow_ref[...]                                   # (TL, P) f32

    # Flatten (batch-chunk, seq-chunk) rows so the MXU sees M = TB*TL rows.
    # All elementwise / LN / scan math stays f32 regardless of the I/O dtype.
    x = x_ref[...].astype(jnp.float32).reshape(M, D)

    # ---------------- LayerNorm 1 (f32) ----------------
    xn = _layernorm(x, g1, b1)

    # ---------------- S5: diagonal SSM ----------------
    # Input projection on the MXU: bf16 operands, f32 accumulation.
    bu = jnp.dot(xn.astype(jnp.bfloat16), bmat_ref[...],
                 preferred_element_type=jnp.float32)             # (M, P) f32

    # Weighted Hillis-Steele prefix scan over time: after all steps
    #   s[b, t] = sum_{u<=t} lam**(t-u) * bu[b, u]
    # log2(TL) steps; each is one sublane roll (XLU) + full (M, P) VPU work, in f32.
    t_idx = lax.broadcasted_iota(jnp.int32, (TB, TL, 1), 1).reshape(M, 1)
    s = bu
    d = 1
    while d < TL:                                # static Python loop, log2(TL) iters
        lam_d = lam_pow[d - 1:d, :]              # (1, P) == lam**d  (precomputed)
        rolled = pltpu.roll(s, shift=d, axis=0)  # s[r - d]; wrap / cross-sequence rows masked
        s = s + lam_d * jnp.where(t_idx >= d, rolled, 0.0)
        d *= 2

    # Fold in the state carried from the previous L-chunk: h_t += lam**(t+1) * h_carry.
    # Done on the (TB, TL, P) view with broadcasting (no materialized (M, P) copy of h0).
    s3 = s.reshape(TB, TL, P) + lam_pow[None, :, :] * h_ref[...][:, None, :]
    h_ref[...] = s3[:, TL - 1, :]                # new carry = last state per sequence
    s = s3.reshape(M, P)

    # Output projection + feedthrough.
    y = (jnp.dot(s.astype(jnp.bfloat16), cmat_ref[...],
                 preferred_element_type=jnp.float32)
         + xn * dvec)                                            # (M, D)

    x1 = x + y                                   # residual 1 (dropout == identity in eval)

    # ---------------- LayerNorm 2 + MLP ----------------
    xn2 = _layernorm(x1, g2, b2)
    hmid = jnp.dot(xn2.astype(jnp.bfloat16), w1_ref[...],
                   preferred_element_type=jnp.float32) + bi1
    hmid = jax.nn.gelu(hmid, approximate=True)   # TODO(synk): PyTorch nn.GELU is exact erf
    mlp = jnp.dot(hmid.astype(jnp.bfloat16), w2_ref[...],
                  preferred_element_type=jnp.float32) + bi2

    o_ref[...] = (x1 + mlp).reshape(TB, TL, D).astype(o_ref.dtype)   # residual 2


# ---------------------------------------------------------------------------
# Tiling / VMEM heuristics
# ---------------------------------------------------------------------------

def _tiling_defaults():
    """Per-chip row target and scoped-VMEM budget."""
    try:
        kind = jax.devices()[0].device_kind.lower()
    except Exception:
        kind = ""
    if "v7" in kind:            # 64 MiB VMEM / TensorCore: smaller blocks, tighter limit
        return dict(row_target=256, vmem_budget=40 * 1024 * 1024)
    return dict(row_target=512, vmem_budget=96 * 1024 * 1024)     # v5e / v6e: 128 MiB physical


def _choose_tl(L, cap=64):
    """Small TL keeps the serial log2(TL) scan phase short; multiple of 8 (or full L) so the
    in-kernel (TB,TL,D)->(TB*TL,D) reshape never crosses (8,128) tile boundaries."""
    if L <= cap:
        return L
    for c in range(cap, 7, -1):
        if L % c == 0 and c % 8 == 0:
            return c
    for c in range(min(L, cap), 0, -1):   # correctness fallback: any divisor (perf warning)
        if L % c == 0:
            return c
    return L


def _vmem_estimate(TB, TL, D, P, io_itemsize, single_buffer_params):
    M = TB * TL
    act = 2 * 2 * (TB * TL * D * io_itemsize)          # double-buffered x and o blocks
    params = (TL * P * 4                                # lam_pow (f32)
              + 2 * (D * P * 2)                         # bmat, cmat (bf16)
              + 2 * (D * D * 2)                         # w1, w2 (bf16)
              + 7 * (D * 4))                            # (1, D) f32 vectors
    if not single_buffer_params:
        params *= 2
    scratch = TB * P * 4
    interm = 8 * M * max(D, P) * 4                      # ~8 live f32 (M, D)/(M, P) temporaries
    return act + params + scratch + interm


def _choose_tb(B, TL, D, P, io_itemsize, row_target, vmem_budget):
    cap = max(1, row_target // max(TL, 1))
    if B >= 2:
        cap = min(cap, B // 2)      # keep nb >= 2 blocks on the parallel axis (v7x 2-TC occupancy)
    cap = max(1, min(cap, B))
    for tb in range(cap, 0, -1):
        if B % tb == 0 and _vmem_estimate(tb, TL, D, P, io_itemsize, True) <= vmem_budget:
            return tb
    return 1


# ---------------------------------------------------------------------------
# Wrapper
# ---------------------------------------------------------------------------

def ssm_layer(x, params, *, row_target=None, vmem_budget_bytes=None):
    """x: (B, L, D) float32 or bfloat16.  Output has the same dtype as x."""
    B, L, D = x.shape
    P = D

    defaults = _tiling_defaults()
    row_target = row_target or defaults["row_target"]
    vmem_budget = int(vmem_budget_bytes or defaults["vmem_budget"])
    io_itemsize = jnp.dtype(x.dtype).itemsize

    TL = _choose_tl(L)
    TB = _choose_tb(B, TL, D, P, io_itemsize, row_target, vmem_budget)
    nb, nl = B // TB, L // TL

    # ---- wrapper-side parameter preprocessing (cheap, done once per call) ----
    lam = params["lam"].reshape(1, P).astype(jnp.float32)
    lam_pow = jnp.cumprod(jnp.broadcast_to(lam, (TL, P)), axis=0)   # (TL, P): row t = lam**(t+1)

    bmat = params["bmat"].astype(jnp.bfloat16)          # bf16 weights: 2x less DMA / VMEM,
    cmat = params["cmat"].astype(jnp.bfloat16)          # MXU-native on v6e/v7x
    w1 = params["w1"].astype(jnp.bfloat16)
    w2 = params["w2"].astype(jnp.bfloat16)

    param_arrays = [
        params["g1"], params["b1"], lam_pow, bmat, cmat, params["dvec"],
        params["g2"], params["b2"], w1, params["bi1"], w2, params["bi2"],
    ]

    const_map = lambda b, l: (0, 0)                     # invariant params: same block every step

    def build(single_buffer_params):
        extra = {}
        if single_buffer_params:
            extra = dict(pipeline_mode=pl.Buffered(1))  # invariant -> no double-buffer VMEM waste
        in_specs = [pl.BlockSpec((TB, TL, D), lambda b, l: (b, l, 0))]
        in_specs += [pl.BlockSpec(p.shape, const_map, **extra) for p in param_arrays]
        return pl.pallas_call(
            ssm_layer_kernel,
            out_shape=jax.ShapeDtypeStruct((B, L, D), x.dtype),
            grid_spec=pltpu.PrefetchScalarGridSpec(
                num_scalar_prefetch=0,
                grid=(nb, nl),
                in_specs=in_specs,
                out_specs=pl.BlockSpec((TB, TL, D), lambda b, l: (b, l, 0)),
                scratch_shapes=[pltpu.VMEM((TB, P), jnp.float32)],   # cross-chunk SSM state carry
            ),
            compiler_params=pltpu.CompilerParams(
                dimension_semantics=("parallel", "arbitrary"),
                vmem_limit_bytes=vmem_budget,
            ),
        )

    try:
        return build(True)(x, *param_arrays)
    except Exception:
        # Fallback if this JAX build rejects single-buffered (Buffered(1)) invariant inputs.
        return build(False)(x, *param_arrays)


# ---------------------------------------------------------------------------
# Pure-JAX reference + synthetic params + self-test
# ---------------------------------------------------------------------------

def ssm_layer_ref(x, params):
    """Pure-JAX f32 reference (same simplified S5 + tanh GELU) for a sanity check."""
    B, L, D = x.shape

    def ln(v, g, b):
        mu = v.mean(-1, keepdims=True)
        var = ((v - mu) ** 2).mean(-1, keepdims=True)
        return (v - mu) * lax.rsqrt(var + LN_EPS) * g + b

    xn = ln(x, params["g1"], params["b1"])                       # (B, L, D)
    bu = jnp.einsum("bld,dp->blp", xn, params["bmat"])           # (B, L, P)
    lam = params["lam"].reshape(1, -1)

    def step(h, bu_t):
        h = lam * h + bu_t
        return h, h

    _, states = lax.scan(step, jnp.zeros((B, D), jnp.float32),
                         jnp.transpose(bu, (1, 0, 2)))
    states = jnp.transpose(states, (1, 0, 2))                    # (B, L, P)
    y = jnp.einsum("blp,pd->bld", states, params["cmat"]) + xn * params["dvec"]
    x1 = x + y
    xn2 = ln(x1, params["g2"], params["b2"])
    h1 = jnp.einsum("bld,de->ble", xn2, params["w1"]) + params["bi1"]
    h1 = jax.nn.gelu(h1, approximate=True)
    mlp = jnp.einsum("ble,ef->blf", h1, params["w2"]) + params["bi2"]
    return x1 + mlp


def init_params(dim, key):
    """Deterministic synthetic init matching SSMLayer(dim) parameter shapes."""
    ks = jax.random.split(key, 5)
    D = P = dim
    scale = 1.0 / jnp.sqrt(jnp.float32(D))
    return dict(
        g1=jnp.ones((1, D), jnp.float32),
        b1=jnp.zeros((1, D), jnp.float32),
        # S5 (diagonal, real-valued): stable Lambda in (0, 1)
        lam=jnp.exp(-jnp.linspace(0.1, 1.0, P)).reshape(1, P).astype(jnp.float32),
        bmat=jax.random.normal(ks[0], (D, P), jnp.float32) * scale,   # B^T
        cmat=jax.random.normal(ks[1], (P, D), jnp.float32) * scale,   # C^T
        dvec=jax.random.normal(ks[2], (1, D), jnp.float32) * 0.1,
        g2=jnp.ones((1, D), jnp.float32),
        b2=jnp.zeros((1, D), jnp.float32),
        w1=jax.random.normal(ks[3], (D, D), jnp.float32) * scale,     # stored transposed (in, out)
        bi1=jnp.zeros((1, D), jnp.float32),
        w2=jax.random.normal(ks[4], (D, D), jnp.float32) * scale,
        bi2=jnp.zeros((1, D), jnp.float32),
    )


if __name__ == "__main__":
    # D multiple of 128 (lane-dense), L large enough to exercise the cross-chunk state carry
    # (TL caps at 64 -> nl = 2), B = 4 so the parallel axis has nb >= 2 blocks.
    B, L, D = 4, 128, 128
    key = jax.random.PRNGKey(0)
    kx, kp = jax.random.split(key)

    x = jax.random.normal(kx, (B, L, D), jnp.float32)
    params = init_params(D, kp)

    out = jax.block_until_ready(ssm_layer(x, params))
    assert out.shape == (B, L, D) and out.dtype == jnp.float32
    assert bool(jnp.all(jnp.isfinite(out)))

    # Sanity check vs pure-JAX f32 reference (kernel uses bf16 matmul operands -> loose tol).
    ref = jax.block_until_ready(ssm_layer_ref(x, params))
    max_err = float(jnp.max(jnp.abs(out - ref)))
    assert max_err < 0.25, f"kernel/reference mismatch: max abs err {max_err}"

    # bf16 activation I/O path (halves HBM traffic; internal LN/scan/residual math stays f32).
    out_bf16 = jax.block_until_ready(ssm_layer(x.astype(jnp.bfloat16), params))
    assert out_bf16.shape == (B, L, D) and out_bf16.dtype == jnp.bfloat16
    assert bool(jnp.all(jnp.isfinite(out_bf16.astype(jnp.float32))))

    print("KERNEL_OK")
</pallas_src>

<mosaic_0001>
module attributes {stable_mosaic.version = 11 : i64} {
  func.func @ssm_layer_kernel(%arg0: i32, %arg1: i32, %arg2: memref<2x64x128xf32, #tpu.memory_space<vmem>>, %arg3: memref<1x128xf32, #tpu.memory_space<vmem>>, %arg4: memref<1x128xf32, #tpu.memory_space<vmem>>, %arg5: memref<64x128xf32, #tpu.memory_space<vmem>>, %arg6: memref<128x128xbf16, #tpu.memory_space<vmem>>, %arg7: memref<128x128xbf16, #tpu.memory_space<vmem>>, %arg8: memref<1x128xf32, #tpu.memory_space<vmem>>, %arg9: memref<1x128xf32, #tpu.memory_space<vmem>>, %arg10: memref<1x128xf32, #tpu.memory_space<vmem>>, %arg11: memref<128x128xbf16, #tpu.memory_space<vmem>>, %arg12: memref<1x128xf32, #tpu.memory_space<vmem>>, %arg13: memref<128x128xbf16, #tpu.memory_space<vmem>>, %arg14: memref<1x128xf32, #tpu.memory_space<vmem>>, %arg15: memref<2x64x128xf32, #tpu.memory_space<vmem>>, %arg16: memref<2x128xf32, #tpu.memory_space<vmem>>) attributes {dimension_semantics = [#tpu.dimension_semantics<parallel>, #tpu.dimension_semantics<arbitrary>], iteration_bounds = array<i64: 2, 2>, scalar_prefetch = 0 : i64, scratch_operands = 1 : i64, tpu.core_type = #tpu.core_type<tc>, window_params = [{transform_indices = @transform_0, window_bounds = array<i64: 2, 64, 128>}, {pipeline_mode = #tpu.pipeline_mode<synchronous>, transform_indices = @transform_1, window_bounds = array<i64: 1, 128>}, {pipeline_mode = #tpu.pipeline_mode<synchronous>, transform_indices = @transform_2, window_bounds = array<i64: 1, 128>}, {pipeline_mode = #tpu.pipeline_mode<synchronous>, transform_indices = @transform_3, window_bounds = array<i64: 64, 128>}, {pipeline_mode = #tpu.pipeline_mode<synchronous>, transform_indices = @transform_4, window_bounds = array<i64: 128, 128>}, {pipeline_mode = #tpu.pipeline_mode<synchronous>, transform_indices = @transform_5, window_bounds = array<i64: 128, 128>}, {pipeline_mode = #tpu.pipeline_mode<synchronous>, transform_indices = @transform_6, window_bounds = array<i64: 1, 128>}, {pipeline_mode = #tpu.pipeline_mode<synchronous>, transform_indices = @transform_7, window_bounds = array<i64: 1, 128>}, {pipeline_mode = #tpu.pipeline_mode<synchronous>, transform_indices = @transform_8, window_bounds = array<i64: 1, 128>}, {pipeline_mode = #tpu.pipeline_mode<synchronous>, transform_indices = @transform_9, window_bounds = array<i64: 128, 128>}, {pipeline_mode = #tpu.pipeline_mode<synchronous>, transform_indices = @transform_10, window_bounds = array<i64: 1, 128>}, {pipeline_mode = #tpu.pipeline_mode<synchronous>, transform_indices = @transform_11, window_bounds = array<i64: 128, 128>}, {pipeline_mode = #tpu.pipeline_mode<synchronous>, transform_indices = @transform_12, window_bounds = array<i64: 1, 128>}, {transform_indices = @transform_13, window_bounds = array<i64: 2, 64, 128>}]} {
    %c0_i32 = arith.constant 0 : i32
    %0 = arith.cmpi eq, %arg1, %c0_i32 : i32
    %1 = arith.extui %0 : i1 to i32
    %c0_i32_0 = arith.constant 0 : i32
    %2 = arith.cmpi ne, %1, %c0_i32_0 : i32
    scf.if %2 {
      %cst_63 = arith.constant 0.000000e+00 : f32
      %173 = vector.broadcast %cst_63 : f32 to vector<2x128xf32>
      %c0_64 = arith.constant 0 : index
      %c0_65 = arith.constant 0 : index
      %174 = vector.load %arg16[%c0_64, %c0_65] : memref<2x128xf32, #tpu.memory_space<vmem>>, vector<2x128xf32>
      tpu.vector_store %arg16[%c0_64, %c0_65], %173 {strides = array<i32>} : memref<2x128xf32, #tpu.memory_space<vmem>>, vector<2x128xf32>,
    } else {
    }
    %c0 = arith.constant 0 : index
    %c0_1 = arith.constant 0 : index
    %3 = vector.load %arg3[%c0, %c0_1] : memref<1x128xf32, #tpu.memory_space<vmem>>, vector<1x128xf32>
    %c0_2 = arith.constant 0 : index
    %c0_3 = arith.constant 0 : index
    %4 = vector.load %arg4[%c0_2, %c0_3] : memref<1x128xf32, #tpu.memory_space<vmem>>, vector<1x128xf32>
    %c0_4 = arith.constant 0 : index
    %c0_5 = arith.constant 0 : index
    %5 = vector.load %arg9[%c0_4, %c0_5] : memref<1x128xf32, #tpu.memory_space<vmem>>, vector<1x128xf32>
    %c0_6 = arith.constant 0 : index
    %c0_7 = arith.constant 0 : index
    %6 = vector.load %arg10[%c0_6, %c0_7] : memref<1x128xf32, #tpu.memory_space<vmem>>, vector<1x128xf32>
    %c0_8 = arith.constant 0 : index
    %c0_9 = arith.constant 0 : index
    %7 = vector.load %arg8[%c0_8, %c0_9] : memref<1x128xf32, #tpu.memory_space<vmem>>, vector<1x128xf32>
    %c0_10 = arith.constant 0 : index
    %c0_11 = arith.constant 0 : index
    %8 = vector.load %arg12[%c0_10, %c0_11] : memref<1x128xf32, #tpu.memory_space<vmem>>, vector<1x128xf32>
    %c0_12 = arith.constant 0 : index
    %c0_13 = arith.constant 0 : index
    %9 = vector.load %arg14[%c0_12, %c0_13] : memref<1x128xf32, #tpu.memory_space<vmem>>, vector<1x128xf32>
    %c0_14 = arith.constant 0 : index
    %c0_15 = arith.constant 0 : index
    %10 = vector.load %arg5[%c0_14, %c0_15] : memref<64x128xf32, #tpu.memory_space<vmem>>, vector<64x128xf32>
    %c0_16 = arith.constant 0 : index
    %c0_17 = arith.constant 0 : index
    %c0_18 = arith.constant 0 : index
    %11 = vector.load %arg2[%c0_16, %c0_17, %c0_18] : memref<2x64x128xf32, #tpu.memory_space<vmem>>, vector<2x64x128xf32>
    %12 = vector.shape_cast %11 : vector<2x64x128xf32> to vector<128x128xf32>
    %cst = arith.constant dense<0.000000e+00> : vector<128xf32>
    %13 = vector.multi_reduction <add>, %12, %cst [1] : vector<128x128xf32> to vector<128xf32>
    %14 = vector.shape_cast %13 : vector<128xf32> to vector<128x1xf32>
    %cst_19 = arith.constant 1.280000e+02 : f32
    %15 = vector.broadcast %cst_19 : f32 to vector<128x1xf32>
    %16 = arith.divf %14, %15 : vector<128x1xf32>
    %17 = vector.broadcast %16 : vector<128x1xf32> to vector<128x128xf32>
    %18 = arith.subf %12, %17 : vector<128x128xf32>
    %19 = arith.mulf %18, %18 : vector<128x128xf32>
    %cst_20 = arith.constant dense<0.000000e+00> : vector<128xf32>
    %20 = vector.multi_reduction <add>, %19, %cst_20 [1] : vector<128x128xf32> to vector<128xf32>
    %21 = vector.shape_cast %20 : vector<128xf32> to vector<128x1xf32>
    %cst_21 = arith.constant 1.280000e+02 : f32
    %22 = vector.broadcast %cst_21 : f32 to vector<128x1xf32>
    %23 = arith.divf %21, %22 : vector<128x1xf32>
    %24 = vector.broadcast %16 : vector<128x1xf32> to vector<128x128xf32>
    %25 = arith.subf %12, %24 : vector<128x128xf32>
    %cst_22 = arith.constant 9.99999974E-6 : f32
    %26 = vector.broadcast %cst_22 : f32 to vector<128x1xf32>
    %27 = arith.addf %23, %26 : vector<128x1xf32>
    %28 = math.rsqrt %27 : vector<128x1xf32>
    %29 = vector.broadcast %28 : vector<128x1xf32> to vector<128x128xf32>
    %30 = arith.mulf %25, %29 : vector<128x128xf32>
    %31 = vector.broadcast %3 : vector<1x128xf32> to vector<128x128xf32>
    %32 = arith.mulf %30, %31 : vector<128x128xf32>
    %33 = vector.broadcast %4 : vector<1x128xf32> to vector<128x128xf32>
    %34 = arith.addf %32, %33 : vector<128x128xf32>
    %35 = arith.truncf %34 : vector<128x128xf32> to vector<128x128xbf16>
    %c0_23 = arith.constant 0 : index
    %c0_24 = arith.constant 0 : index
    %36 = vector.load %arg6[%c0_23, %c0_24] : memref<128x128xbf16, #tpu.memory_space<vmem>>, vector<128x128xbf16>
    %cst_25 = arith.constant dense<0.000000e+00> : vector<128x128xf32>
    %37 = tpu.matmul %35, %36, %cst_25 {dimension_numbers = #tpu.dot_dimension_numbers<[1], [0], [0], [1], [0, 0, 1, 1], [], []>} : vector<128x128xbf16>, vector<128x128xbf16>, vector<128x128xf32> -> vector<128x128xf32>
    %38 = tpu.iota {dimensions = array<i32: 1>} : vector<2x64x1xi32>
    %39 = vector.shape_cast %38 : vector<2x64x1xi32> to vector<128x1xi32>
    %40 = vector.extract_strided_slice %10 {offsets = [0, 0], sizes = [1, 128], strides = [1, 1]} : vector<64x128xf32> to vector<1x128xf32>
    %c1_i32 = arith.constant 1 : i32
    %41 = tpu.dynamic_rotate %37 by %c1_i32 dim 0 : vector<128x128xf32>, i32 -> vector<128x128xf32>
    %c1_i32_26 = arith.constant 1 : i32
    %42 = vector.broadcast %c1_i32_26 : i32 to vector<128x1xi32>
    %43 = arith.cmpi sge, %39, %42 : vector<128x1xi32>
    %cst_27 = arith.constant 0.000000e+00 : f32
    %44 = vector.shape_cast %43 : vector<128x1xi1> to vector<128x1xi1>
    %45 = vector.broadcast %44 : vector<128x1xi1> to vector<128x128xi1>
    %46 = vector.broadcast %cst_27 : f32 to vector<128x128xf32>
    %47 = arith.select %45, %41, %46 : vector<128x128xi1>, vector<128x128xf32>
    %48 = vector.broadcast %40 : vector<1x128xf32> to vector<128x128xf32>
    %49 = arith.mulf %48, %47 : vector<128x128xf32>
    %50 = arith.addf %37, %49 : vector<128x128xf32>
    %51 = vector.extract_strided_slice %10 {offsets = [1, 0], sizes = [1, 128], strides = [1, 1]} : vector<64x128xf32> to vector<1x128xf32>
    %c2_i32 = arith.constant 2 : i32
    %52 = tpu.dynamic_rotate %50 by %c2_i32 dim 0 : vector<128x128xf32>, i32 -> vector<128x128xf32>
    %c2_i32_28 = arith.constant 2 : i32
    %53 = vector.broadcast %c2_i32_28 : i32 to vector<128x1xi32>
    %54 = arith.cmpi sge, %39, %53 : vector<128x1xi32>
    %cst_29 = arith.constant 0.000000e+00 : f32
    %55 = vector.shape_cast %54 : vector<128x1xi1> to vector<128x1xi1>
    %56 = vector.broadcast %55 : vector<128x1xi1> to vector<128x128xi1>
    %57 = vector.broadcast %cst_29 : f32 to vector<128x128xf32>
    %58 = arith.select %56, %52, %57 : vector<128x128xi1>, vector<128x128xf32>
    %59 = vector.broadcast %51 : vector<1x128xf32> to vector<128x128xf32>
    %60 = arith.mulf %59, %58 : vector<128x128xf32>
    %61 = arith.addf %50, %60 : vector<128x128xf32>
    %62 = vector.extract_strided_slice %10 {offsets = [3, 0], sizes = [1, 128], strides = [1, 1]} : vector<64x128xf32> to vector<1x128xf32>
    %c4_i32 = arith.constant 4 : i32
    %63 = tpu.dynamic_rotate %61 by %c4_i32 dim 0 : vector<128x128xf32>, i32 -> vector<128x128xf32>
    %c4_i32_30 = arith.constant 4 : i32
    %64 = vector.broadcast %c4_i32_30 : i32 to vector<128x1xi32>
    %65 = arith.cmpi sge, %39, %64 : vector<128x1xi32>
    %cst_31 = arith.constant 0.000000e+00 : f32
    %66 = vector.shape_cast %65 : vector<128x1xi1> to vector<128x1xi1>
    %67 = vector.broadcast %66 : vector<128x1xi1> to vector<128x128xi1>
    %68 = vector.broadcast %cst_31 : f32 to vector<128x128xf32>
    %69 = arith.select %67, %63, %68 : vector<128x128xi1>, vector<128x128xf32>
    %70 = vector.broadcast %62 : vector<1x128xf32> to vector<128x128xf32>
    %71 = arith.mulf %70, %69 : vector<128x128xf32>
    %72 = arith.addf %61, %71 : vector<128x128xf32>
    %73 = vector.extract_strided_slice %10 {offsets = [7, 0], sizes = [1, 128], strides = [1, 1]} : vector<64x128xf32> to vector<1x128xf32>
    %c8_i32 = arith.constant 8 : i32
    %74 = tpu.dynamic_rotate %72 by %c8_i32 dim 0 : vector<128x128xf32>, i32 -> vector<128x128xf32>
    %c8_i32_32 = arith.constant 8 : i32
    %75 = vector.broadcast %c8_i32_32 : i32 to vector<128x1xi32>
    %76 = arith.cmpi sge, %39, %75 : vector<128x1xi32>
    %cst_33 = arith.constant 0.000000e+00 : f32
    %77 = vector.shape_cast %76 : vector<128x1xi1> to vector<128x1xi1>
    %78 = vector.broadcast %77 : vector<128x1xi1> to vector<128x128xi1>
    %79 = vector.broadcast %cst_33 : f32 to vector<128x128xf32>
    %80 = arith.select %78, %74, %79 : vector<128x128xi1>, vector<128x128xf32>
    %81 = vector.broadcast %73 : vector<1x128xf32> to vector<128x128xf32>
    %82 = arith.mulf %81, %80 : vector<128x128xf32>
    %83 = arith.addf %72, %82 : vector<128x128xf32>
    %84 = vector.extract_strided_slice %10 {offsets = [15, 0], sizes = [1, 128], strides = [1, 1]} : vector<64x128xf32> to vector<1x128xf32>
    %c16_i32 = arith.constant 16 : i32
    %85 = tpu.dynamic_rotate %83 by %c16_i32 dim 0 : vector<128x128xf32>, i32 -> vector<128x128xf32>
    %c16_i32_34 = arith.constant 16 : i32
    %86 = vector.broadcast %c16_i32_34 : i32 to vector<128x1xi32>
    %87 = arith.cmpi sge, %39, %86 : vector<128x1xi32>
    %cst_35 = arith.constant 0.000000e+00 : f32
    %88 = vector.shape_cast %87 : vector<128x1xi1> to vector<128x1xi1>
    %89 = vector.broadcast %88 : vector<128x1xi1> to vector<128x128xi1>
    %90 = vector.broadcast %cst_35 : f32 to vector<128x128xf32>
    %91 = arith.select %89, %85, %90 : vector<128x128xi1>, vector<128x128xf32>
    %92 = vector.broadcast %84 : vector<1x128xf32> to vector<128x128xf32>
    %93 = arith.mulf %92, %91 : vector<128x128xf32>
    %94 = arith.addf %83, %93 : vector<128x128xf32>
    %95 = vector.extract_strided_slice %10 {offsets = [31, 0], sizes = [1, 128], strides = [1, 1]} : vector<64x128xf32> to vector<1x128xf32>
    %c32_i32 = arith.constant 32 : i32
    %96 = tpu.dynamic_rotate %94 by %c32_i32 dim 0 : vector<128x128xf32>, i32 -> vector<128x128xf32>
    %c32_i32_36 = arith.constant 32 : i32
    %97 = vector.broadcast %c32_i32_36 : i32 to vector<128x1xi32>
    %98 = arith.cmpi sge, %39, %97 : vector<128x1xi32>
    %cst_37 = arith.constant 0.000000e+00 : f32
    %99 = vector.shape_cast %98 : vector<128x1xi1> to vector<128x1xi1>
    %100 = vector.broadcast %99 : vector<128x1xi1> to vector<128x128xi1>
    %101 = vector.broadcast %cst_37 : f32 to vector<128x128xf32>
    %102 = arith.select %100, %96, %101 : vector<128x128xi1>, vector<128x128xf32>
    %103 = vector.broadcast %95 : vector<1x128xf32> to vector<128x128xf32>
    %104 = arith.mulf %103, %102 : vector<128x128xf32>
    %105 = arith.addf %94, %104 : vector<128x128xf32>
    %106 = vector.shape_cast %105 : vector<128x128xf32> to vector<2x64x128xf32>
    %107 = vector.shape_cast %10 : vector<64x128xf32> to vector<1x64x128xf32>
    %c0_38 = arith.constant 0 : index
    %c0_39 = arith.constant 0 : index
    %108 = vector.load %arg16[%c0_38, %c0_39] : memref<2x128xf32, #tpu.memory_space<vmem>>, vector<2x128xf32>
    %109 = vector.shape_cast %108 : vector<2x128xf32> to vector<2x1x128xf32>
    %110 = vector.broadcast %107 : vector<1x64x128xf32> to vector<2x64x128xf32>
    %111 = vector.broadcast %109 : vector<2x1x128xf32> to vector<2x64x128xf32>
    %112 = arith.mulf %110, %111 : vector<2x64x128xf32>
    %113 = arith.addf %106, %112 : vector<2x64x128xf32>
    %114 = vector.extract_strided_slice %113 {offsets = [0, 63, 0], sizes = [2, 1, 128], strides = [1, 1, 1]} : vector<2x64x128xf32> to vector<2x1x128xf32>
    %115 = vector.shape_cast %114 : vector<2x1x128xf32> to vector<2x128xf32>
    %c0_40 = arith.constant 0 : index
    %c0_41 = arith.constant 0 : index
    %116 = vector.load %arg16[%c0_40, %c0_41] : memref<2x128xf32, #tpu.memory_space<vmem>>, vector<2x128xf32>
    tpu.vector_store %arg16[%c0_40, %c0_41], %115 {strides = array<i32>} : memref<2x128xf32, #tpu.memory_space<vmem>>, vector<2x128xf32>,
    %117 = vector.shape_cast %113 : vector<2x64x128xf32> to vector<128x128xf32>
    %118 = arith.truncf %117 : vector<128x128xf32> to vector<128x128xbf16>
    %c0_42 = arith.constant 0 : index
    %c0_43 = arith.constant 0 : index
    %119 = vector.load %arg7[%c0_42, %c0_43] : memref<128x128xbf16, #tpu.memory_space<vmem>>, vector<128x128xbf16>
    %cst_44 = arith.constant dense<0.000000e+00> : vector<128x128xf32>
    %120 = tpu.matmul %118, %119, %cst_44 {dimension_numbers = #tpu.dot_dimension_numbers<[1], [0], [0], [1], [0, 0, 1, 1], [], []>} : vector<128x128xbf16>, vector<128x128xbf16>, vector<128x128xf32> -> vector<128x128xf32>
    %121 = vector.broadcast %7 : vector<1x128xf32> to vector<128x128xf32>
    %122 = arith.mulf %34, %121 : vector<128x128xf32>
    %123 = arith.addf %120, %122 : vector<128x128xf32>
    %124 = arith.addf %12, %123 : vector<128x128xf32>
    %cst_45 = arith.constant dense<0.000000e+00> : vector<128xf32>
    %125 = vector.multi_reduction <add>, %124, %cst_45 [1] : vector<128x128xf32> to vector<128xf32>
    %126 = vector.shape_cast %125 : vector<128xf32> to vector<128x1xf32>
    %cst_46 = arith.constant 1.280000e+02 : f32
    %127 = vector.broadcast %cst_46 : f32 to vector<128x1xf32>
    %128 = arith.divf %126, %127 : vector<128x1xf32>
    %129 = vector.broadcast %128 : vector<128x1xf32> to vector<128x128xf32>
    %130 = arith.subf %124, %129 : vector<128x128xf32>
    %131 = arith.mulf %130, %130 : vector<128x128xf32>
    %cst_47 = arith.constant dense<0.000000e+00> : vector<128xf32>
    %132 = vector.multi_reduction <add>, %131, %cst_47 [1] : vector<128x128xf32> to vector<128xf32>
    %133 = vector.shape_cast %132 : vector<128xf32> to vector<128x1xf32>
    %cst_48 = arith.constant 1.280000e+02 : f32
    %134 = vector.broadcast %cst_48 : f32 to vector<128x1xf32>
    %135 = arith.divf %133, %134 : vector<128x1xf32>
    %136 = vector.broadcast %128 : vector<128x1xf32> to vector<128x128xf32>
    %137 = arith.subf %124, %136 : vector<128x128xf32>
    %cst_49 = arith.constant 9.99999974E-6 : f32
    %138 = vector.broadcast %cst_49 : f32 to vector<128x1xf32>
    %139 = arith.addf %135, %138 : vector<128x1xf32>
    %140 = math.rsqrt %139 : vector<128x1xf32>
    %141 = vector.broadcast %140 : vector<128x1xf32> to vector<128x128xf32>
    %142 = arith.mulf %137, %141 : vector<128x128xf32>
    %143 = vector.broadcast %5 : vector<1x128xf32> to vector<128x128xf32>
    %144 = arith.mulf %142, %143 : vector<128x128xf32>
    %145 = vector.broadcast %6 : vector<1x128xf32> to vector<128x128xf32>
    %146 = arith.addf %144, %145 : vector<128x128xf32>
    %147 = arith.truncf %146 : vector<128x128xf32> to vector<128x128xbf16>
    %c0_50 = arith.constant 0 : index
    %c0_51 = arith.constant 0 : index
    %148 = vector.load %arg11[%c0_50, %c0_51] : memref<128x128xbf16, #tpu.memory_space<vmem>>, vector<128x128xbf16>
    %cst_52 = arith.constant dense<0.000000e+00> : vector<128x128xf32>
    %149 = tpu.matmul %147, %148, %cst_52 {dimension_numbers = #tpu.dot_dimension_numbers<[1], [0], [0], [1], [0, 0, 1, 1], [], []>} : vector<128x128xbf16>, vector<128x128xbf16>, vector<128x128xf32> -> vector<128x128xf32>
    %150 = vector.broadcast %8 : vector<1x128xf32> to vector<128x128xf32>
    %151 = arith.addf %149, %150 : vector<128x128xf32>
    %152 = arith.mulf %151, %151 : vector<128x128xf32>
    %153 = arith.mulf %151, %152 : vector<128x128xf32>
    %cst_53 = arith.constant 4.471500e-02 : f32
    %154 = vector.broadcast %cst_53 : f32 to vector<128x128xf32>
    %155 = arith.mulf %154, %153 : vector<128x128xf32>
    %156 = arith.addf %151, %155 : vector<128x128xf32>
    %cst_54 = arith.constant 0.797884583 : f32
    %157 = vector.broadcast %cst_54 : f32 to vector<128x128xf32>
    %158 = arith.mulf %157, %156 : vector<128x128xf32>
    %159 = math.tanh %158 : vector<128x128xf32>
    %cst_55 = arith.constant 1.000000e+00 : f32
    %160 = vector.broadcast %cst_55 : f32 to vector<128x128xf32>
    %161 = arith.addf %160, %159 : vector<128x128xf32>
    %cst_56 = arith.constant 5.000000e-01 : f32
    %162 = vector.broadcast %cst_56 : f32 to vector<128x128xf32>
    %163 = arith.mulf %162, %161 : vector<128x128xf32>
    %164 = arith.mulf %151, %163 : vector<128x128xf32>
    %165 = arith.truncf %164 : vector<128x128xf32> to vector<128x128xbf16>
    %c0_57 = arith.constant 0 : index
    %c0_58 = arith.constant 0 : index
    %166 = vector.load %arg13[%c0_57, %c0_58] : memref<128x128xbf16, #tpu.memory_space<vmem>>, vector<128x128xbf16>
    %cst_59 = arith.constant dense<0.000000e+00> : vector<128x128xf32>
    %167 = tpu.matmul %165, %166, %cst_59 {dimension_numbers = #tpu.dot_dimension_numbers<[1], [0], [0], [1], [0, 0, 1, 1], [], []>} : vector<128x128xbf16>, vector<128x128xbf16>, vector<128x128xf32> -> vector<128x128xf32>
    %168 = vector.broadcast %9 : vector<1x128xf32> to vector<128x128xf32>
    %169 = arith.addf %167, %168 : vector<128x128xf32>
    %170 = arith.addf %124, %169 : vector<128x128xf32>
    %171 = vector.shape_cast %170 : vector<128x128xf32> to vector<2x64x128xf32>
    %c0_60 = arith.constant 0 : index
    %c0_61 = arith.constant 0 : index
    %c0_62 = arith.constant 0 : index
    %172 = vector.load %arg15[%c0_60, %c0_61, %c0_62] : memref<2x64x128xf32, #tpu.memory_space<vmem>>, vector<2x64x128xf32>
    tpu.vector_store %arg15[%c0_60, %c0_61, %c0_62], %171 {strides = array<i32>} : memref<2x64x128xf32, #tpu.memory_space<vmem>>, vector<2x64x128xf32>,
    return
  }
  func.func @transform_0(%arg0: i32, %arg1: i32) -> (i32, i32, i32) {
    %c0_i32 = arith.constant 0 : i32
    %c0_i32_0 = arith.constant 0 : i32
    return %arg0, %arg1, %c0_i32 : i32, i32, i32
  }
  func.func @transform_1(%arg0: i32, %arg1: i32) -> (i32, i32) {
    %c0_i32 = arith.constant 0 : i32
    %c0_i32_0 = arith.constant 0 : i32
    %c0_i32_1 = arith.constant 0 : i32
    return %c0_i32, %c0_i32_0 : i32, i32
  }
  func.func @transform_2(%arg0: i32, %arg1: i32) -> (i32, i32) {
    %c0_i32 = arith.constant 0 : i32
    %c0_i32_0 = arith.constant 0 : i32
    %c0_i32_1 = arith.constant 0 : i32
    return %c0_i32, %c0_i32_0 : i32, i32
  }
  func.func @transform_3(%arg0: i32, %arg1: i32) -> (i32, i32) {
    %c0_i32 = arith.constant 0 : i32
    %c0_i32_0 = arith.constant 0 : i32
    %c0_i32_1 = arith.constant 0 : i32
    return %c0_i32, %c0_i32_0 : i32, i32
  }
  func.func @transform_4(%arg0: i32, %arg1: i32) -> (i32, i32) {
    %c0_i32 = arith.constant 0 : i32
    %c0_i32_0 = arith.constant 0 : i32
    %c0_i32_1 = arith.constant 0 : i32
    return %c0_i32, %c0_i32_0 : i32, i32
  }
  func.func @transform_5(%arg0: i32, %arg1: i32) -> (i32, i32) {
    %c0_i32 = arith.constant 0 : i32
    %c0_i32_0 = arith.constant 0 : i32
    %c0_i32_1 = arith.constant 0 : i32
    return %c0_i32, %c0_i32_0 : i32, i32
  }
  func.func @transform_6(%arg0: i32, %arg1: i32) -> (i32, i32) {
    %c0_i32 = arith.constant 0 : i32
    %c0_i32_0 = arith.constant 0 : i32
    %c0_i32_1 = arith.constant 0 : i32
    return %c0_i32, %c0_i32_0 : i32, i32
  }
  func.func @transform_7(%arg0: i32, %arg1: i32) -> (i32, i32) {
    %c0_i32 = arith.constant 0 : i32
    %c0_i32_0 = arith.constant 0 : i32
    %c0_i32_1 = arith.constant 0 : i32
    return %c0_i32, %c0_i32_0 : i32, i32
  }
  func.func @transform_8(%arg0: i32, %arg1: i32) -> (i32, i32) {
    %c0_i32 = arith.constant 0 : i32
    %c0_i32_0 = arith.constant 0 : i32
    %c0_i32_1 = arith.constant 0 : i32
    return %c0_i32, %c0_i32_0 : i32, i32
  }
  func.func @transform_9(%arg0: i32, %arg1: i32) -> (i32, i32) {
    %c0_i32 = arith.constant 0 : i32
    %c0_i32_0 = arith.constant 0 : i32
    %c0_i32_1 = arith.constant 0 : i32
    return %c0_i32, %c0_i32_0 : i32, i32
  }
  func.func @transform_10(%arg0: i32, %arg1: i32) -> (i32, i32) {
    %c0_i32 = arith.constant 0 : i32
    %c0_i32_0 = arith.constant 0 : i32
    %c0_i32_1 = arith.constant 0 : i32
    return %c0_i32, %c0_i32_0 : i32, i32
  }
  func.func @transform_11(%arg0: i32, %arg1: i32) -> (i32, i32) {
    %c0_i32 = arith.constant 0 : i32
    %c0_i32_0 = arith.constant 0 : i32
    %c0_i32_1 = arith.constant 0 : i32
    return %c0_i32, %c0_i32_0 : i32, i32
  }
  func.func @transform_12(%arg0: i32, %arg1: i32) -> (i32, i32) {
    %c0_i32 = arith.constant 0 : i32
    %c0_i32_0 = arith.constant 0 : i32
    %c0_i32_1 = arith.constant 0 : i32
    return %c0_i32, %c0_i32_0 : i32, i32
  }
  func.func @transform_13(%arg0: i32, %arg1: i32) -> (i32, i32, i32) {
    %c0_i32 = arith.constant 0 : i32
    %c0_i32_0 = arith.constant 0 : i32
    return %arg0, %arg1, %c0_i32 : i32, i32, i32
  }
}

module attributes {stable_mosaic.version = 11 : i64} {
  func.func @ssm_layer_kernel(%arg0: i32, %arg1: i32, %arg2: memref<2x64x128xf32, #tpu.memory_space<vmem>>, %arg3: memref<1x128xf32, #tpu.memory_space<vmem>>, %arg4: memref<1x128xf32, #tpu.memory_space<vmem>>, %arg5: memref<64x128xf32, #tpu.memory_space<vmem>>, %arg6: memref<128x128xbf16, #tpu.memory_space<vmem>>, %arg7: memref<128x128xbf16, #tpu.memory_space<vmem>>, %arg8: memref<1x128xf32, #tpu.memory_space<vmem>>, %arg9: memref<1x128xf32, #tpu.memory_space<vmem>>, %arg10: memref<1x128xf32, #tpu.memory_space<vmem>>, %arg11: memref<128x128xbf16, #tpu.memory_space<vmem>>, %arg12: memref<1x128xf32, #tpu.memory_space<vmem>>, %arg13: memref<128x128xbf16, #tpu.memory_space<vmem>>, %arg14: memref<1x128xf32, #tpu.memory_space<vmem>>, %arg15: memref<2x64x128xf32, #tpu.memory_space<vmem>>, %arg16: memref<2x128xf32, #tpu.memory_space<vmem>>) attributes {dimension_semantics = [#tpu.dimension_semantics<parallel>, #tpu.dimension_semantics<arbitrary>], iteration_bounds = array<i64: 2, 2>, scalar_prefetch = 0 : i64, scratch_operands = 1 : i64, tpu.core_type = #tpu.core_type<tc>, window_params = [{transform_indices = @transform_0, window_bounds = array<i64: 2, 64, 128>}, {pipeline_mode = #tpu.pipeline_mode<synchronous>, transform_indices = @transform_1, window_bounds = array<i64: 1, 128>}, {pipeline_mode = #tpu.pipeline_mode<synchronous>, transform_indices = @transform_2, window_bounds = array<i64: 1, 128>}, {pipeline_mode = #tpu.pipeline_mode<synchronous>, transform_indices = @transform_3, window_bounds = array<i64: 64, 128>}, {pipeline_mode = #tpu.pipeline_mode<synchronous>, transform_indices = @transform_4, window_bounds = array<i64: 128, 128>}, {pipeline_mode = #tpu.pipeline_mode<synchronous>, transform_indices = @transform_5, window_bounds = array<i64: 128, 128>}, {pipeline_mode = #tpu.pipeline_mode<synchronous>, transform_indices = @transform_6, window_bounds = array<i64: 1, 128>}, {pipeline_mode = #tpu.pipeline_mode<synchronous>, transform_indices = @transform_7, window_bounds = array<i64: 1, 128>}, {pipeline_mode = #tpu.pipeline_mode<synchronous>, transform_indices = @transform_8, window_bounds = array<i64: 1, 128>}, {pipeline_mode = #tpu.pipeline_mode<synchronous>, transform_indices = @transform_9, window_bounds = array<i64: 128, 128>}, {pipeline_mode = #tpu.pipeline_mode<synchronous>, transform_indices = @transform_10, window_bounds = array<i64: 1, 128>}, {pipeline_mode = #tpu.pipeline_mode<synchronous>, transform_indices = @transform_11, window_bounds = array<i64: 128, 128>}, {pipeline_mode = #tpu.pipeline_mode<synchronous>, transform_indices = @transform_12, window_bounds = array<i64: 1, 128>}, {transform_indices = @transform_13, window_bounds = array<i64: 2, 64, 128>}]} {
    %c0_i32 = arith.constant 0 : i32
    %0 = arith.cmpi eq, %arg1, %c0_i32 : i32
    %1 = arith.extui %0 : i1 to i32
    %c0_i32_0 = arith.constant 0 : i32
    %2 = arith.cmpi ne, %1, %c0_i32_0 : i32
    scf.if %2 {
      %cst_63 = arith.constant 0.000000e+00 : f32
      %173 = vector.broadcast %cst_63 : f32 to vector<2x128xf32>
      %c0_64 = arith.constant 0 : index
      %c0_65 = arith.constant 0 : index
      %174 = vector.load %arg16[%c0_64, %c0_65] : memref<2x128xf32, #tpu.memory_space<vmem>>, vector<2x128xf32>
      tpu.vector_store %arg16[%c0_64, %c0_65], %173 {strides = array<i32>} : memref<2x128xf32, #tpu.memory_space<vmem>>, vector<2x128xf32>,
    } else {
    }
    %c0 = arith.constant 0 : index
    %c0_1 = arith.constant 0 : index
    %3 = vector.load %arg3[%c0, %c0_1] : memref<1x128xf32, #tpu.memory_space<vmem>>, vector<1x128xf32>
    %c0_2 = arith.constant 0 : index
    %c0_3 = arith.constant 0 : index
    %4 = vector.load %arg4[%c0_2, %c0_3] : memref<1x128xf32, #tpu.memory_space<vmem>>, vector<1x128xf32>
    %c0_4 = arith.constant 0 : index
    %c0_5 = arith.constant 0 : index
    %5 = vector.load %arg9[%c0_4, %c0_5] : memref<1x128xf32, #tpu.memory_space<vmem>>, vector<1x128xf32>
    %c0_6 = arith.constant 0 : index
    %c0_7 = arith.constant 0 : index
    %6 = vector.load %arg10[%c0_6, %c0_7] : memref<1x128xf32, #tpu.memory_space<vmem>>, vector<1x128xf32>
    %c0_8 = arith.constant 0 : index
    %c0_9 = arith.constant 0 : index
    %7 = vector.load %arg8[%c0_8, %c0_9] : memref<1x128xf32, #tpu.memory_space<vmem>>, vector<1x128xf32>
    %c0_10 = arith.constant 0 : index
    %c0_11 = arith.constant 0 : index
    %8 = vector.load %arg12[%c0_10, %c0_11] : memref<1x128xf32, #tpu.memory_space<vmem>>, vector<1x128xf32>
    %c0_12 = arith.constant 0 : index
    %c0_13 = arith.constant 0 : index
    %9 = vector.load %arg14[%c0_12, %c0_13] : memref<1x128xf32, #tpu.memory_space<vmem>>, vector<1x128xf32>
    %c0_14 = arith.constant 0 : index
    %c0_15 = arith.constant 0 : index
    %10 = vector.load %arg5[%c0_14, %c0_15] : memref<64x128xf32, #tpu.memory_space<vmem>>, vector<64x128xf32>
    %c0_16 = arith.constant 0 : index
    %c0_17 = arith.constant 0 : index
    %c0_18 = arith.constant 0 : index
    %11 = vector.load %arg2[%c0_16, %c0_17, %c0_18] : memref<2x64x128xf32, #tpu.memory_space<vmem>>, vector<2x64x128xf32>
    %12 = vector.shape_cast %11 : vector<2x64x128xf32> to vector<128x128xf32>
    %cst = arith.constant dense<0.000000e+00> : vector<128xf32>
    %13 = vector.multi_reduction <add>, %12, %cst [1] : vector<128x128xf32> to vector<128xf32>
    %14 = vector.shape_cast %13 : vector<128xf32> to vector<128x1xf32>
    %cst_19 = arith.constant 1.280000e+02 : f32
    %15 = vector.broadcast %cst_19 : f32 to vector<128x1xf32>
    %16 = arith.divf %14, %15 : vector<128x1xf32>
    %17 = vector.broadcast %16 : vector<128x1xf32> to vector<128x128xf32>
    %18 = arith.subf %12, %17 : vector<128x128xf32>
    %19 = arith.mulf %18, %18 : vector<128x128xf32>
    %cst_20 = arith.constant dense<0.000000e+00> : vector<128xf32>
    %20 = vector.multi_reduction <add>, %19, %cst_20 [1] : vector<128x128xf32> to vector<128xf32>
    %21 = vector.shape_cast %20 : vector<128xf32> to vector<128x1xf32>
    %cst_21 = arith.constant 1.280000e+02 : f32
    %22 = vector.broadcast %cst_21 : f32 to vector<128x1xf32>
    %23 = arith.divf %21, %22 : vector<128x1xf32>
    %24 = vector.broadcast %16 : vector<128x1xf32> to vector<128x128xf32>
    %25 = arith.subf %12, %24 : vector<128x128xf32>
    %cst_22 = arith.constant 9.99999974E-6 : f32
    %26 = vector.broadcast %cst_22 : f32 to vector<128x1xf32>
    %27 = arith.addf %23, %26 : vector<128x1xf32>
    %28 = math.rsqrt %27 : vector<128x1xf32>
    %29 = vector.broadcast %28 : vector<128x1xf32> to vector<128x128xf32>
    %30 = arith.mulf %25, %29 : vector<128x128xf32>
    %31 = vector.broadcast %3 : vector<1x128xf32> to vector<128x128xf32>
    %32 = arith.mulf %30, %31 : vector<128x128xf32>
    %33 = vector.broadcast %4 : vector<1x128xf32> to vector<128x128xf32>
    %34 = arith.addf %32, %33 : vector<128x128xf32>
    %35 = arith.truncf %34 : vector<128x128xf32> to vector<128x128xbf16>
    %c0_23 = arith.constant 0 : index
    %c0_24 = arith.constant 0 : index
    %36 = vector.load %arg6[%c0_23, %c0_24] : memref<128x128xbf16, #tpu.memory_space<vmem>>, vector<128x128xbf16>
    %cst_25 = arith.constant dense<0.000000e+00> : vector<128x128xf32>
    %37 = tpu.matmul %35, %36, %cst_25 {dimension_numbers = #tpu.dot_dimension_numbers<[1], [0], [0], [1], [0, 0, 1, 1], [], []>} : vector<128x128xbf16>, vector<128x128xbf16>, vector<128x128xf32> -> vector<128x128xf32>
    %38 = tpu.iota {dimensions = array<i32: 1>} : vector<2x64x1xi32>
    %39 = vector.shape_cast %38 : vector<2x64x1xi32> to vector<128x1xi32>
    %40 = vector.extract_strided_slice %10 {offsets = [0, 0], sizes = [1, 128], strides = [1, 1]} : vector<64x128xf32> to vector<1x128xf32>
    %c1_i32 = arith.constant 1 : i32
    %41 = tpu.dynamic_rotate %37 by %c1_i32 dim 0 : vector<128x128xf32>, i32 -> vector<128x128xf32>
    %c1_i32_26 = arith.constant 1 : i32
    %42 = vector.broadcast %c1_i32_26 : i32 to vector<128x1xi32>
    %43 = arith.cmpi sge, %39, %42 : vector<128x1xi32>
    %cst_27 = arith.constant 0.000000e+00 : f32
    %44 = vector.shape_cast %43 : vector<128x1xi1> to vector<128x1xi1>
    %45 = vector.broadcast %44 : vector<128x1xi1> to vector<128x128xi1>
    %46 = vector.broadcast %cst_27 : f32 to vector<128x128xf32>
    %47 = arith.select %45, %41, %46 : vector<128x128xi1>, vector<128x128xf32>
    %48 = vector.broadcast %40 : vector<1x128xf32> to vector<128x128xf32>
    %49 = arith.mulf %48, %47 : vector<128x128xf32>
    %50 = arith.addf %37, %49 : vector<128x128xf32>
    %51 = vector.extract_strided_slice %10 {offsets = [1, 0], sizes = [1, 128], strides = [1, 1]} : vector<64x128xf32> to vector<1x128xf32>
    %c2_i32 = arith.constant 2 : i32
    %52 = tpu.dynamic_rotate %50 by %c2_i32 dim 0 : vector<128x128xf32>, i32 -> vector<128x128xf32>
    %c2_i32_28 = arith.constant 2 : i32
    %53 = vector.broadcast %c2_i32_28 : i32 to vector<128x1xi32>
    %54 = arith.cmpi sge, %39, %53 : vector<128x1xi32>
    %cst_29 = arith.constant 0.000000e+00 : f32
    %55 = vector.shape_cast %54 : vector<128x1xi1> to vector<128x1xi1>
    %56 = vector.broadcast %55 : vector<128x1xi1> to vector<128x128xi1>
    %57 = vector.broadcast %cst_29 : f32 to vector<128x128xf32>
    %58 = arith.select %56, %52, %57 : vector<128x128xi1>, vector<128x128xf32>
    %59 = vector.broadcast %51 : vector<1x128xf32> to vector<128x128xf32>
    %60 = arith.mulf %59, %58 : vector<128x128xf32>
    %61 = arith.addf %50, %60 : vector<128x128xf32>
    %62 = vector.extract_strided_slice %10 {offsets = [3, 0], sizes = [1, 128], strides = [1, 1]} : vector<64x128xf32> to vector<1x128xf32>
    %c4_i32 = arith.constant 4 : i32
    %63 = tpu.dynamic_rotate %61 by %c4_i32 dim 0 : vector<128x128xf32>, i32 -> vector<128x128xf32>
    %c4_i32_30 = arith.constant 4 : i32
    %64 = vector.broadcast %c4_i32_30 : i32 to vector<128x1xi32>
    %65 = arith.cmpi sge, %39, %64 : vector<128x1xi32>
    %cst_31 = arith.constant 0.000000e+00 : f32
    %66 = vector.shape_cast %65 : vector<128x1xi1> to vector<128x1xi1>
    %67 = vector.broadcast %66 : vector<128x1xi1> to vector<128x128xi1>
    %68 = vector.broadcast %cst_31 : f32 to vector<128x128xf32>
    %69 = arith.select %67, %63, %68 : vector<128x128xi1>, vector<128x128xf32>
    %70 = vector.broadcast %62 : vector<1x128xf32> to vector<128x128xf32>
    %71 = arith.mulf %70, %69 : vector<128x128xf32>
    %72 = arith.addf %61, %71 : vector<128x128xf32>
    %73 = vector.extract_strided_slice %10 {offsets = [7, 0], sizes = [1, 128], strides = [1, 1]} : vector<64x128xf32> to vector<1x128xf32>
    %c8_i32 = arith.constant 8 : i32
    %74 = tpu.dynamic_rotate %72 by %c8_i32 dim 0 : vector<128x128xf32>, i32 -> vector<128x128xf32>
    %c8_i32_32 = arith.constant 8 : i32
    %75 = vector.broadcast %c8_i32_32 : i32 to vector<128x1xi32>
    %76 = arith.cmpi sge, %39, %75 : vector<128x1xi32>
    %cst_33 = arith.constant 0.000000e+00 : f32
    %77 = vector.shape_cast %76 : vector<128x1xi1> to vector<128x1xi1>
    %78 = vector.broadcast %77 : vector<128x1xi1> to vector<128x128xi1>
    %79 = vector.broadcast %cst_33 : f32 to vector<128x128xf32>
    %80 = arith.select %78, %74, %79 : vector<128x128xi1>, vector<128x128xf32>
    %81 = vector.broadcast %73 : vector<1x128xf32> to vector<128x128xf32>
    %82 = arith.mulf %81, %80 : vector<128x128xf32>
    %83 = arith.addf %72, %82 : vector<128x128xf32>
    %84 = vector.extract_strided_slice %10 {offsets = [15, 0], sizes = [1, 128], strides = [1, 1]} : vector<64x128xf32> to vector<1x128xf32>
    %c16_i32 = arith.constant 16 : i32
    %85 = tpu.dynamic_rotate %83 by %c16_i32 dim 0 : vector<128x128xf32>, i32 -> vector<128x128xf32>
    %c16_i32_34 = arith.constant 16 : i32
    %86 = vector.broadcast %c16_i32_34 : i32 to vector<128x1xi32>
    %87 = arith.cmpi sge, %39, %86 : vector<128x1xi32>
    %cst_35 = arith.constant 0.000000e+00 : f32
    %88 = vector.shape_cast %87 : vector<128x1xi1> to vector<128x1xi1>
    %89 = vector.broadcast %88 : vector<128x1xi1> to vector<128x128xi1>
    %90 = vector.broadcast %cst_35 : f32 to vector<128x128xf32>
    %91 = arith.select %89, %85, %90 : vector<128x128xi1>, vector<128x128xf32>
    %92 = vector.broadcast %84 : vector<1x128xf32> to vector<128x128xf32>
    %93 = arith.mulf %92, %91 : vector<128x128xf32>
    %94 = arith.addf %83, %93 : vector<128x128xf32>
    %95 = vector.extract_strided_slice %10 {offsets = [31, 0], sizes = [1, 128], strides = [1, 1]} : vector<64x128xf32> to vector<1x128xf32>
    %c32_i32 = arith.constant 32 : i32
    %96 = tpu.dynamic_rotate %94 by %c32_i32 dim 0 : vector<128x128xf32>, i32 -> vector<128x128xf32>
    %c32_i32_36 = arith.constant 32 : i32
    %97 = vector.broadcast %c32_i32_36 : i32 to vector<128x1xi32>
    %98 = arith.cmpi sge, %39, %97 : vector<128x1xi32>
    %cst_37 = arith.constant 0.000000e+00 : f32
    %99 = vector.shape_cast %98 : vector<128x1xi1> to vector<128x1xi1>
    %100 = vector.broadcast %99 : vector<128x1xi1> to vector<128x128xi1>
    %101 = vector.broadcast %cst_37 : f32 to vector<128x128xf32>
    %102 = arith.select %100, %96, %101 : vector<128x128xi1>, vector<128x128xf32>
    %103 = vector.broadcast %95 : vector<1x128xf32> to vector<128x128xf32>
    %104 = arith.mulf %103, %102 : vector<128x128xf32>
    %105 = arith.addf %94, %104 : vector<128x128xf32>
    %106 = vector.shape_cast %105 : vector<128x128xf32> to vector<2x64x128xf32>
    %107 = vector.shape_cast %10 : vector<64x128xf32> to vector<1x64x128xf32>
    %c0_38 = arith.constant 0 : index
    %c0_39 = arith.constant 0 : index
    %108 = vector.load %arg16[%c0_38, %c0_39] : memref<2x128xf32, #tpu.memory_space<vmem>>, vector<2x128xf32>
    %109 = vector.shape_cast %108 : vector<2x128xf32> to vector<2x1x128xf32>
    %110 = vector.broadcast %107 : vector<1x64x128xf32> to vector<2x64x128xf32>
    %111 = vector.broadcast %109 : vector<2x1x128xf32> to vector<2x64x128xf32>
    %112 = arith.mulf %110, %111 : vector<2x64x128xf32>
    %113 = arith.addf %106, %112 : vector<2x64x128xf32>
    %114 = vector.extract_strided_slice %113 {offsets = [0, 63, 0], sizes = [2, 1, 128], strides = [1, 1, 1]} : vector<2x64x128xf32> to vector<2x1x128xf32>
    %115 = vector.shape_cast %114 : vector<2x1x128xf32> to vector<2x128xf32>
    %c0_40 = arith.constant 0 : index
    %c0_41 = arith.constant 0 : index
    %116 = vector.load %arg16[%c0_40, %c0_41] : memref<2x128xf32, #tpu.memory_space<vmem>>, vector<2x128xf32>
    tpu.vector_store %arg16[%c0_40, %c0_41], %115 {strides = array<i32>} : memref<2x128xf32, #tpu.memory_space<vmem>>, vector<2x128xf32>,
    %117 = vector.shape_cast %113 : vector<2x64x128xf32> to vector<128x128xf32>
    %118 = arith.truncf %117 : vector<128x128xf32> to vector<128x128xbf16>
    %c0_42 = arith.constant 0 : index
    %c0_43 = arith.constant 0 : index
    %119 = vector.load %arg7[%c0_42, %c0_43] : memref<128x128xbf16, #tpu.memory_space<vmem>>, vector<128x128xbf16>
    %cst_44 = arith.constant dense<0.000000e+00> : vector<128x128xf32>
    %120 = tpu.matmul %118, %119, %cst_44 {dimension_numbers = #tpu.dot_dimension_numbers<[1], [0], [0], [1], [0, 0, 1, 1], [], []>} : vector<128x128xbf16>, vector<128x128xbf16>, vector<128x128xf32> -> vector<128x128xf32>
    %121 = vector.broadcast %7 : vector<1x128xf32> to vector<128x128xf32>
    %122 = arith.mulf %34, %121 : vector<128x128xf32>
    %123 = arith.addf %120, %122 : vector<128x128xf32>
    %124 = arith.addf %12, %123 : vector<128x128xf32>
    %cst_45 = arith.constant dense<0.000000e+00> : vector<128xf32>
    %125 = vector.multi_reduction <add>, %124, %cst_45 [1] : vector<128x128xf32> to vector<128xf32>
    %126 = vector.shape_cast %125 : vector<128xf32> to vector<128x1xf32>
    %cst_46 = arith.constant 1.280000e+02 : f32
    %127 = vector.broadcast %cst_46 : f32 to vector<128x1xf32>
    %128 = arith.divf %126, %127 : vector<128x1xf32>
    %129 = vector.broadcast %128 : vector<128x1xf32> to vector<128x128xf32>
    %130 = arith.subf %124, %129 : vector<128x128xf32>
    %131 = arith.mulf %130, %130 : vector<128x128xf32>
    %cst_47 = arith.constant dense<0.000000e+00> : vector<128xf32>
    %132 = vector.multi_reduction <add>, %131, %cst_47 [1] : vector<128x128xf32> to vector<128xf32>
    %133 = vector.shape_cast %132 : vector<128xf32> to vector<128x1xf32>
    %cst_48 = arith.constant 1.280000e+02 : f32
    %134 = vector.broadcast %cst_48 : f32 to vector<128x1xf32>
    %135 = arith.divf %133, %134 : vector<128x1xf32>
    %136 = vector.broadcast %128 : vector<128x1xf32> to vector<128x128xf32>
    %137 = arith.subf %124, %136 : vector<128x128xf32>
    %cst_49 = arith.constant 9.99999974E-6 : f32
    %138 = vector.broadcast %cst_49 : f32 to vector<128x1xf32>
    %139 = arith.addf %135, %138 : vector<128x1xf32>
    %140 = math.rsqrt %139 : vector<128x1xf32>
    %141 = vector.broadcast %140 : vector<128x1xf32> to vector<128x128xf32>
    %142 = arith.mulf %137, %141 : vector<128x128xf32>
    %143 = vector.broadcast %5 : vector<1x128xf32> to vector<128x128xf32>
    %144 = arith.mulf %142, %143 : vector<128x128xf32>
    %145 = vector.broadcast %6 : vector<1x128xf32> to vector<128x128xf32>
    %146 = arith.addf %144, %145 : vector<128x128xf32>
    %147 = arith.truncf %146 : vector<128x128xf32> to vector<128x128xbf16>
    %c0_50 = arith.constant 0 : index
    %c0_51 = arith.constant 0 : index
    %148 = vector.load %arg11[%c0_50, %c0_51] : memref<128x128xbf16, #tpu.memory_space<vmem>>, vector<128x128xbf16>
    %cst_52 = arith.constant dense<0.000000e+00> : vector<128x128xf32>
    %149 = tpu.matmul %147, %148, %cst_52 {dimension_numbers = #tpu.dot_dimension_numbers<[1], [0], [0], [1], [0, 0, 1, 1], [], []>} : vector<128x128xbf16>, vector<128x128xbf16>, vector<128x128xf32> -> vector<128x128xf32>
    %150 = vector.broadcast %8 : vector<1x128xf32> to vector<128x128xf32>
    %151 = arith.addf %149, %150 : vector<128x128xf32>
    %152 = arith.mulf %151, %151 : vector<128x128xf32>
    %153 = arith.mulf %151, %152 : vector<128x128xf32>
    %cst_53 = arith.constant 4.471500e-02 : f32
    %154 = vector.broadcast %cst_53 : f32 to vector<128x128xf32>
    %155 = arith.mulf %154, %153 : vector<128x128xf32>
    %156 = arith.addf %151, %155 : vector<128x128xf32>
    %cst_54 = arith.constant 0.797884583 : f32
    %157 = vector.broadcast %cst_54 : f32 to vector<128x128xf32>
    %158 = arith.mulf %157, %156 : vector<128x128xf32>
    %159 = math.tanh %158 : vector<128x128xf32>
    %cst_55 = arith.constant 1.000000e+00 : f32
    %160 = vector.broadcast %cst_55 : f32 to vector<128x128xf32>
    %161 = arith.addf %160, %159 : vector<128x128xf32>
    %cst_56 = arith.constant 5.000000e-01 : f32
    %162 = vector.broadcast %cst_56 : f32 to vector<128x128xf32>
    %163 = arith.mulf %162, %161 : vector<128x128xf32>
    %164 = arith.mulf %151, %163 : vector<128x128xf32>
    %165 = arith.truncf %164 : vector<128x128xf32> to vector<128x128xbf16>
    %c0_57 = arith.constant 0 : index
    %c0_58 = arith.constant 0 : index
    %166 = vector.load %arg13[%c0_57, %c0_58] : memref<128x128xbf16, #tpu.memory_space<vmem>>, vector<128x128xbf16>
    %cst_59 = arith.constant dense<0.000000e+00> : vector<128x128xf32>
    %167 = tpu.matmul %165, %166, %cst_59 {dimension_numbers = #tpu.dot_dimension_numbers<[1], [0], [0], [1], [0, 0, 1, 1], [], []>} : vector<128x128xbf16>, vector<128x128xbf16>, vector<128x128xf32> -> vector<128x128xf32>
    %168 = vector.broadcast %9 : vector<1x128xf32> to vector<128x128xf32>
    %169 = arith.addf %167, %168 : vector<128x128xf32>
    %170 = arith.addf %124, %169 : vector<128x128xf32>
    %171 = vector.shape_cast %170 : vector<128x128xf32> to vector<2x64x128xf32>
    %c0_60 = arith.constant 0 : index
    %c0_61 = arith.constant 0 : index
    %c0_62 = arith.constant 0 : index
    %172 = vector.load %arg15[%c0_60, %c0_61, %c0_62] : memref<2x64x128xf32, #tpu.memory_space<vmem>>, vector<2x64x128xf32>
    tpu.vector_store %arg15[%c0_60, %c0_61, %c0_62], %171 {strides = array<i32>} : memref<2x64x128xf32, #tpu.memory_space<vmem>>, vector<2x64x128xf32>,
    return
  }
  func.func @transform_0(%arg0: i32, %arg1: i32) -> (i32, i32, i32) {
    %c0_i32 = arith.constant 0 : i32
    %c0_i32_0 = arith.constant 0 : i32
    return %arg0, %arg1, %c0_i32 : i32, i32, i32
  }
  func.func @transform_1(%arg0: i32, %arg1: i32) -> (i32, i32) {
    %c0_i32 = arith.constant 0 : i32
    %c0_i32_0 = arith.constant 0 : i32
    %c0_i32_1 = arith.constant 0 : i32
    return %c0_i32, %c0_i32_0 : i32, i32
  }
  func.func @transform_2(%arg0: i32, %arg1: i32) -> (i32, i32) {
    %c0_i32 = arith.constant 0 : i32
    %c0_i32_0 = arith.constant 0 : i32
    %c0_i32_1 = arith.constant 0 : i32
    return %c0_i32, %c0_i32_0 : i32, i32
  }
  func.func @transform_3(%arg0: i32, %arg1: i32) -> (i32, i32) {
    %c0_i32 = arith.constant 0 : i32
    %c0_i32_0 = arith.constant 0 : i32
    %c0_i32_1 = arith.constant 0 : i32
    return %c0_i32, %c0_i32_0 : i32, i32
  }
  func.func @transform_4(%arg0: i32, %arg1: i32) -> (i32, i32) {
    %c0_i32 = arith.constant 0 : i32
    %c0_i32_0 = arith.constant 0 : i32
    %c0_i32_1 = arith.constant 0 : i32
    return %c0_i32, %c0_i32_0 : i32, i32
  }
  func.func @transform_5(%arg0: i32, %arg1: i32) -> (i32, i32) {
    %c0_i32 = arith.constant 0 : i32
    %c0_i32_0 = arith.constant 0 : i32
    %c0_i32_1 = arith.constant 0 : i32
    return %c0_i32, %c0_i32_0 : i32, i32
  }
  func.func @transform_6(%arg0: i32, %arg1: i32) -> (i32, i32) {
    %c0_i32 = arith.constant 0 : i32
    %c0_i32_0 = arith.constant 0 : i32
    %c0_i32_1 = arith.constant 0 : i32
    return %c0_i32, %c0_i32_0 : i32, i32
  }
  func.func @transform_7(%arg0: i32, %arg1: i32) -> (i32, i32) {
    %c0_i32 = arith.constant 0 : i32
    %c0_i32_0 = arith.constant 0 : i32
    %c0_i32_1 = arith.constant 0 : i32
    return %c0_i32, %c0_i32_0 : i32, i32
  }
  func.func @transform_8(%arg0: i32, %arg1: i32) -> (i32, i32) {
    %c0_i32 = arith.constant 0 : i32
    %c0_i32_0 = arith.constant 0 : i32
    %c0_i32_1 = arith.constant 0 : i32
    return %c0_i32, %c0_i32_0 : i32, i32
  }
  func.func @transform_9(%arg0: i32, %arg1: i32) -> (i32, i32) {
    %c0_i32 = arith.constant 0 : i32
    %c0_i32_0 = arith.constant 0 : i32
    %c0_i32_1 = arith.constant 0 : i32
    return %c0_i32, %c0_i32_0 : i32, i32
  }
  func.func @transform_10(%arg0: i32, %arg1: i32) -> (i32, i32) {
    %c0_i32 = arith.constant 0 : i32
    %c0_i32_0 = arith.constant 0 : i32
    %c0_i32_1 = arith.constant 0 : i32
    return %c0_i32, %c0_i32_0 : i32, i32
  }
  func.func @transform_11(%arg0: i32, %arg1: i32) -> (i32, i32) {
    %c0_i32 = arith.constant 0 : i32
    %c0_i32_0 = arith.constant 0 : i32
    %c0_i32_1 = arith.constant 0 : i32
    return %c0_i32, %c0_i32_0 : i32, i32
  }
  func.func @transform_12(%arg0: i32, %arg1: i32) -> (i32, i32) {
    %c0_i32 = arith.constant 0 : i32
    %c0_i32_0 = arith.constant 0 : i32
    %c0_i32_1 = arith.constant 0 : i32
    return %c0_i32, %c0_i32_0 : i32, i32
  }
  func.func @transform_13(%arg0: i32, %arg1: i32) -> (i32, i32, i32) {
    %c0_i32 = arith.constant 0 : i32
    %c0_i32_0 = arith.constant 0 : i32
    return %arg0, %arg1, %c0_i32 : i32, i32, i32
  }
}

</mosaic_0001>

<llo_original>
// kernel: tpu_custom_call.1
$region0: #{tpu_custom_call.1}
  #allocation0 [shape = 'u32[]', space=smem, size = 0x4, offset = 0x4, fixed_abs, tag = 'smem constant byte address 0x4 - core index']
  #allocation1 [shape = 'u32[144,128]{1,0:T(1,128)}', space=vmem, size = 0x12000, scoped, tag = 'internal scratch']
  #allocation2 [shape = 'f32[2,128]{1,0:T(2,128)}', space=vmem, size = 0x400, scoped, tag = 'scratch operand']
  #allocation15 [shape = 's32[]', space=sflag, size = 0x4, offset = 0, fixed_abs, tag = 'sflag constant byte address 0x0 - dummy sync flag']
  #allocation17 [shape = 's32[]', space=sflag, size = 0x4, offset = 0, fixed_abs, tag = 'sflag constant byte address 0x0 - dummy sync flag']
  %s0 = inlined_call_operand.hbm [shape: f32[4,128,128], index: 0, kind: input, shape index: {}]
  %s1 = inlined_call_operand.vmem [shape: f32[1,128], index: 1, kind: input, shape index: {}]
  %s2 = inlined_call_operand.vmem [shape: f32[1,128], index: 2, kind: input, shape index: {}]
  %s3 = inlined_call_operand.hbm [shape: f32[64,128], index: 3, kind: input, shape index: {}]
  %s4 = inlined_call_operand.hbm [shape: bf16[128,128], index: 4, kind: input, shape index: {}]
  %s5 = inlined_call_operand.hbm [shape: bf16[128,128], index: 5, kind: input, shape index: {}]
  %s6 = inlined_call_operand.vmem [shape: f32[1,128], index: 6, kind: input, shape index: {}]
  %s7 = inlined_call_operand.vmem [shape: f32[1,128], index: 7, kind: input, shape index: {}]
  %s8 = inlined_call_operand.vmem [shape: f32[1,128], index: 8, kind: input, shape index: {}]
  %s9 = inlined_call_operand.hbm [shape: bf16[128,128], index: 9, kind: input, shape index: {}]
  %s10 = inlined_call_operand.vmem [shape: f32[1,128], index: 10, kind: input, shape index: {}]
  %s11 = inlined_call_operand.hbm [shape: bf16[128,128], index: 11, kind: input, shape index: {}]
  %s12 = inlined_call_operand.vmem [shape: f32[1,128], index: 12, kind: input, shape index: {}]
  %s13 = inlined_call_operand.hbm [shape: f32[4,128,128], index: 13, kind: output, shape index: {}]
  %s14 = sld [smem:[#allocation0]]
  $region113: #{tpu_custom_call.1} parent=0
    _
  %s16 = ssub.s32 1, %s14
  %s17 = scalar_select 0, %s16, %s14
  $region1: #{tpu_custom_call.1} parent=0
    #allocation3 [shape = 'u8[131072]{0}', space=vmem, size = 0x20000, scoped, tag = 'input window, operand 0']
    #allocation4 [shape = 's32[2]{0}', space=sflag, size = 0x8, scoped, tag = 'scoped memory for tpu_custom_call.1']
    #allocation5 [shape = 's32[2]{0}', space=sflag, size = 0x8, scoped, tag = 'scoped memory for tpu_custom_call.1']
    #allocation6 [shape = 'u8[32768]{0}', space=vmem, size = 0x8000, scoped, tag = 'input window, operand 3, single buffered']
    #allocation7 [shape = 's32[1]{0}', space=sflag, size = 0x4, scoped, tag = 'scoped memory for tpu_custom_call.1']
    #allocation8 [shape = 'u8[32768]{0}', space=vmem, size = 0x8000, scoped, tag = 'input window, operand 4, single buffered']
    #allocation9 [shape = 'u8[32768]{0}', space=vmem, size = 0x8000, scoped, tag = 'input window, operand 5, single buffered']
    #allocation10 [shape = 's32[1]{0}', space=sflag, size = 0x4, scoped, tag = 'scoped memory for tpu_custom_call.1']
    #allocation11 [shape = 'u8[32768]{0}', space=vmem, size = 0x8000, scoped, tag = 'input window, operand 9, single buffered']
    #allocation12 [shape = 'u8[32768]{0}', space=vmem, size = 0x8000, scoped, tag = 'input window, operand 11, single buffered']
    #allocation13 [shape = 's32[1]{0}', space=sflag, size = 0x4, scoped, tag = 'scoped memory for tpu_custom_call.1']
    #allocation14 [shape = 'u8[131072]{0}', space=vmem, size = 0x20000, scoped, tag = 'output window, operand 0']
    %18 = vsyncpa [#allocation4], 0
    %s19 = scalar_lea.sflag [#allocation4], 1
    %20 = vsyncpa %s19, 0
    %21 = vsyncpa [#allocation7], 0
    %22 = vsyncpa [#allocation10], 0
    %23 = vsyncpa [#allocation13], 0
    %24 = vsyncpa [#allocation5], 0
    %s25 = scalar_lea.sflag [#allocation5], 1
    %26 = vsyncpa %s25, 0
    loop: start=0, step=1, limit=6
    $region2: #{tpu_custom_call.1} parent=1 // loop_pre_header
      _
    $region3: #{tpu_custom_call.1} parent=1 // loop_header
      %s28 = sphi 0, %s32
      %p29 = scmp.ge.s32.totalorder %s28, 6
      %s35 = sphi 0, %s47
      %s36 = sphi 0, %s43
      %s37 = sphi 0, %s35
      %s38 = sphi 0, %s36
      %s39 = sphi 0, %s37
      %s40 = sphi 0, %s38
      %s52 = sphi 0, %s54
      %s55 = sphi 0, %s52
      %s56 = sphi 0, %s55
      %s72 = sphi 0, %s56
      %s76 = sphi 0, %s76
      %s78 = sphi 0, %s76
      %s79 = sphi 0, %s78
      %s93 = sphi 0, %s79
      %s97 = sphi 0, %s97
      %s99 = sphi 0, %s97
      %s100 = sphi 0, %s99
      %s114 = sphi 0, %s100
      %s118 = sphi 0, %s118
      %s120 = sphi 0, %s118
      %s121 = sphi 0, %s120
      %s135 = sphi 0, %s121
      %s139 = sphi 0, %s139
      %s141 = sphi 0, %s139
      %s142 = sphi 0, %s141
      %s156 = sphi 0, %s142
      %s160 = sphi 0, %s160
      %s162 = sphi 0, %s160
      %s163 = sphi 0, %s162
      %s177 = sphi 0, %s163
      %s181 = sphi 0, %s181
      %s183 = sphi 0, %s181
      %s184 = sphi 0, %s183
      %s198 = sphi 0, %s184
      %s202 = sphi 0, %s202
      %s204 = sphi 0, %s202
      %s205 = sphi 0, %s204
      %s219 = sphi 0, %s205
      %s223 = sphi 0, %s223
      %s225 = sphi 0, %s223
      %s226 = sphi 0, %s225
      %s240 = sphi 0, %s226
      %s244 = sphi 0, %s244
      %s246 = sphi 0, %s244
      %s247 = sphi 0, %s246
      %s261 = sphi 0, %s247
      %s265 = sphi 0, %s265
      %s267 = sphi 0, %s265
      %s268 = sphi 0, %s267
      %s282 = sphi 0, %s268
      %s286 = sphi 0, %s286
      %s288 = sphi 0, %s286
      %s289 = sphi 0, %s288
      %s303 = sphi 0, %s289
      %s307 = sphi 0, %s307
      %s309 = sphi 0, %s307
      %s310 = sphi 0, %s309
      %s324 = sphi 0, %s310
      %s332 = sphi 0, %s334
      %s335 = sphi 0, %s332
      %s336 = sphi 0, %s335
      %s352 = sphi 0, %s336
    $region4: #{tpu_custom_call.1} parent=1 // loop_header_branch
      %31 = sbr.rel (%p29) target = $region8
    $region5: #{tpu_custom_call.1} parent=1 // loop_body
      %s33 = ssub.s32 %s28, 1
      %s34 = ssub.s32 %s28, 2
      %s41 = sadd.s32 1, %s36
      %p42 = scmp.ge.s32.totalorder %s41, 2
      %s43 = scalar_select %p42, 0, %s41
      %s44 = sadd.s32 1, %s35
      %s45 = scalar_select %p42, %s44, %s35
      %p46 = scmp.ge.s32.totalorder %s45, 2
      %s47 = scalar_select %p46, 0, %s45
      %s48 = ssub.s32 %s35, %s47
      %s49 = ssub.s32 %s36, %s43
      %s50 = sor.u32 %s48, %s49
      %p51 = scmp.eq.s32.totalorder %s50, 0
      %s53 = sadd.s32 %s52, 1
      %s54 = scalar_select %p51, %s52, %s53
      %p57 = pneg %p51
      %p58 = scmp.eq.s32.totalorder %s28, 3
      %p59 = por %p57, %p58
      %p60 = scmp.ne.s32.totalorder %s52, %s55
      %p61 = scmp.eq.s32.totalorder %s28, 0
      %p62 = por %p60, %p61
      %p63 = scmp.ne.s32.totalorder %s52, %s55
      %p64 = scmp.eq.s32.totalorder %s33, 3
      %p65 = por %p63, %p64
      %p66 = scmp.ne.s32.totalorder %s55, %s56
      %p67 = scmp.eq.s32.totalorder %s33, 0
      %p68 = por %p66, %p67
      %p69 = scmp.ne.s32.totalorder %s55, %s56
      %p70 = scmp.eq.s32.totalorder %s34, 3
      %p71 = por %p69, %p70
      %p73 = scmp.ne.s32.totalorder %s56, %s72
      %p74 = scmp.eq.s32.totalorder %s34, 0
      %p75 = por %p73, %p74
      %s77 = sadd.s32 %s76, 1
      %p80 = scmp.eq.s32.totalorder %s28, 3
      %p81 = scmp.ne.s32.totalorder %s76, %s78
      %p82 = scmp.eq.s32.totalorder %s28, 0
      %p83 = por %p81, %p82
      %p84 = scmp.ne.s32.totalorder %s76, %s78
      %p85 = scmp.eq.s32.totalorder %s33, 3
      %p86 = por %p84, %p85
      %p87 = scmp.ne.s32.totalorder %s78, %s79
      %p88 = scmp.eq.s32.totalorder %s33, 0
      %p89 = por %p87, %p88
      %p90 = scmp.ne.s32.totalorder %s78, %s79
      %p91 = scmp.eq.s32.totalorder %s34, 3
      %p92 = por %p90, %p91
      %p94 = scmp.ne.s32.totalorder %s79, %s93
      %p95 = scmp.eq.s32.totalorder %s34, 0
      %p96 = por %p94, %p95
      %s98 = sadd.s32 %s97, 1
      %p101 = scmp.eq.s32.totalorder %s28, 3
      %p102 = scmp.ne.s32.totalorder %s97, %s99
      %p103 = scmp.eq.s32.totalorder %s28, 0
      %p104 = por %p102, %p103
      %p105 = scmp.ne.s32.totalorder %s97, %s99
      %p106 = scmp.eq.s32.totalorder %s33, 3
      %p107 = por %p105, %p106
      %p108 = scmp.ne.s32.totalorder %s99, %s100
      %p109 = scmp.eq.s32.totalorder %s33, 0
      %p110 = por %p108, %p109
      %p111 = scmp.ne.s32.totalorder %s99, %s100
      %p112 = scmp.eq.s32.totalorder %s34, 3
      %p113 = por %p111, %p112
      %p115 = scmp.ne.s32.totalorder %s100, %s114
      %p116 = scmp.eq.s32.totalorder %s34, 0
      %p117 = por %p115, %p116
      %s119 = sadd.s32 %s118, 1
      %p122 = scmp.eq.s32.totalorder %s28, 3
      %p123 = scmp.ne.s32.totalorder %s118, %s120
      %p124 = scmp.eq.s32.totalorder %s28, 0
      %p125 = por %p123, %p124
      %p126 = scmp.ne.s32.totalorder %s118, %s120
      %p127 = scmp.eq.s32.totalorder %s33, 3
      %p128 = por %p126, %p127
      %p129 = scmp.ne.s32.totalorder %s120, %s121
      %p130 = scmp.eq.s32.totalorder %s33, 0
      %p131 = por %p129, %p130
      %p132 = scmp.ne.s32.totalorder %s120, %s121
      %p133 = scmp.eq.s32.totalorder %s34, 3
      %p134 = por %p132, %p133
      %p136 = scmp.ne.s32.totalorder %s121, %s135
      %p137 = scmp.eq.s32.totalorder %s34, 0
      %p138 = por %p136, %p137
      %s140 = sadd.s32 %s139, 1
      %p143 = scmp.eq.s32.totalorder %s28, 3
      %p144 = scmp.ne.s32.totalorder %s139, %s141
      %p145 = scmp.eq.s32.totalorder %s28, 0
      %p146 = por %p144, %p145
      %p147 = scmp.ne.s32.totalorder %s139, %s141
      %p148 = scmp.eq.s32.totalorder %s33, 3
      %p149 = por %p147, %p148
      %p150 = scmp.ne.s32.totalorder %s141, %s142
      %p151 = scmp.eq.s32.totalorder %s33, 0
      %p152 = por %p150, %p151
      %p153 = scmp.ne.s32.totalorder %s141, %s142
      %p154 = scmp.eq.s32.totalorder %s34, 3
      %p155 = por %p153, %p154
      %p157 = scmp.ne.s32.totalorder %s142, %s156
      %p158 = scmp.eq.s32.totalorder %s34, 0
      %p159 = por %p157, %p158
      %s161 = sadd.s32 %s160, 1
      %p164 = scmp.eq.s32.totalorder %s28, 3
      %p165 = scmp.ne.s32.totalorder %s160, %s162
      %p166 = scmp.eq.s32.totalorder %s28, 0
      %p167 = por %p165, %p166
      %p168 = scmp.ne.s32.totalorder %s160, %s162
      %p169 = scmp.eq.s32.totalorder %s33, 3
      %p170 = por %p168, %p169
      %p171 = scmp.ne.s32.totalorder %s162, %s163
      %p172 = scmp.eq.s32.totalorder %s33, 0
      %p173 = por %p171, %p172
      %p174 = scmp.ne.s32.totalorder %s162, %s163
      %p175 = scmp.eq.s32.totalorder %s34, 3
      %p176 = por %p174, %p175
      %p178 = scmp.ne.s32.totalorder %s163, %s177
      %p179 = scmp.eq.s32.totalorder %s34, 0
      %p180 = por %p178, %p179
      %s182 = sadd.s32 %s181, 1
      %p185 = scmp.eq.s32.totalorder %s28, 3
      %p186 = scmp.ne.s32.totalorder %s181, %s183
      %p187 = scmp.eq.s32.totalorder %s28, 0
      %p188 = por %p186, %p187
      %p189 = scmp.ne.s32.totalorder %s181, %s183
      %p190 = scmp.eq.s32.totalorder %s33, 3
      %p191 = por %p189, %p190
      %p192 = scmp.ne.s32.totalorder %s183, %s184
      %p193 = scmp.eq.s32.totalorder %s33, 0
      %p194 = por %p192, %p193
      %p195 = scmp.ne.s32.totalorder %s183, %s184
      %p196 = scmp.eq.s32.totalorder %s34, 3
      %p197 = por %p195, %p196
      %p199 = scmp.ne.s32.totalorder %s184, %s198
      %p200 = scmp.eq.s32.totalorder %s34, 0
      %p201 = por %p199, %p200
      %s203 = sadd.s32 %s202, 1
      %p206 = scmp.eq.s32.totalorder %s28, 3
      %p207 = scmp.ne.s32.totalorder %s202, %s204
      %p208 = scmp.eq.s32.totalorder %s28, 0
      %p209 = por %p207, %p208
      %p210 = scmp.ne.s32.totalorder %s202, %s204
      %p211 = scmp.eq.s32.totalorder %s33, 3
      %p212 = por %p210, %p211
      %p213 = scmp.ne.s32.totalorder %s204, %s205
      %p214 = scmp.eq.s32.totalorder %s33, 0
      %p215 = por %p213, %p214
      %p216 = scmp.ne.s32.totalorder %s204, %s205
      %p217 = scmp.eq.s32.totalorder %s34, 3
      %p218 = por %p216, %p217
      %p220 = scmp.ne.s32.totalorder %s205, %s219
      %p221 = scmp.eq.s32.totalorder %s34, 0
      %p222 = por %p220, %p221
      %s224 = sadd.s32 %s223, 1
      %p227 = scmp.eq.s32.totalorder %s28, 3
      %p228 = scmp.ne.s32.totalorder %s223, %s225
      %p229 = scmp.eq.s32.totalorder %s28, 0
      %p230 = por %p228, %p229
      %p231 = scmp.ne.s32.totalorder %s223, %s225
      %p232 = scmp.eq.s32.totalorder %s33, 3
      %p233 = por %p231, %p232
      %p234 = scmp.ne.s32.totalorder %s225, %s226
      %p235 = scmp.eq.s32.totalorder %s33, 0
      %p236 = por %p234, %p235
      %p237 = scmp.ne.s32.totalorder %s225, %s226
      %p238 = scmp.eq.s32.totalorder %s34, 3
      %p239 = por %p237, %p238
      %p241 = scmp.ne.s32.totalorder %s226, %s240
      %p242 = scmp.eq.s32.totalorder %s34, 0
      %p243 = por %p241, %p242
      %s245 = sadd.s32 %s244, 1
      %p248 = scmp.eq.s32.totalorder %s28, 3
      %p249 = scmp.ne.s32.totalorder %s244, %s246
      %p250 = scmp.eq.s32.totalorder %s28, 0
      %p251 = por %p249, %p250
      %p252 = scmp.ne.s32.totalorder %s244, %s246
      %p253 = scmp.eq.s32.totalorder %s33, 3
      %p254 = por %p252, %p253
      %p255 = scmp.ne.s32.totalorder %s246, %s247
      %p256 = scmp.eq.s32.totalorder %s33, 0
      %p257 = por %p255, %p256
      %p258 = scmp.ne.s32.totalorder %s246, %s247
      %p259 = scmp.eq.s32.totalorder %s34, 3
      %p260 = por %p258, %p259
      %p262 = scmp.ne.s32.totalorder %s247, %s261
      %p263 = scmp.eq.s32.totalorder %s34, 0
      %p264 = por %p262, %p263
      %s266 = sadd.s32 %s265, 1
      %p269 = scmp.eq.s32.totalorder %s28, 3
      %p270 = scmp.ne.s32.totalorder %s265, %s267
      %p271 = scmp.eq.s32.totalorder %s28, 0
      %p272 = por %p270, %p271
      %p273 = scmp.ne.s32.totalorder %s265, %s267
      %p274 = scmp.eq.s32.totalorder %s33, 3
      %p275 = por %p273, %p274
      %p276 = scmp.ne.s32.totalorder %s267, %s268
      %p277 = scmp.eq.s32.totalorder %s33, 0
      %p278 = por %p276, %p277
      %p279 = scmp.ne.s32.totalorder %s267, %s268
      %p280 = scmp.eq.s32.totalorder %s34, 3
      %p281 = por %p279, %p280
      %p283 = scmp.ne.s32.totalorder %s268, %s282
      %p284 = scmp.eq.s32.totalorder %s34, 0
      %p285 = por %p283, %p284
      %s287 = sadd.s32 %s286, 1
      %p290 = scmp.eq.s32.totalorder %s28, 3
      %p291 = scmp.ne.s32.totalorder %s286, %s288
      %p292 = scmp.eq.s32.totalorder %s28, 0
      %p293 = por %p291, %p292
      %p294 = scmp.ne.s32.totalorder %s286, %s288
      %p295 = scmp.eq.s32.totalorder %s33, 3
      %p296 = por %p294, %p295
      %p297 = scmp.ne.s32.totalorder %s288, %s289
      %p298 = scmp.eq.s32.totalorder %s33, 0
      %p299 = por %p297, %p298
      %p300 = scmp.ne.s32.totalorder %s288, %s289
      %p301 = scmp.eq.s32.totalorder %s34, 3
      %p302 = por %p300, %p301
      %p304 = scmp.ne.s32.totalorder %s289, %s303
      %p305 = scmp.eq.s32.totalorder %s34, 0
      %p306 = por %p304, %p305
      %s308 = sadd.s32 %s307, 1
      %p311 = scmp.eq.s32.totalorder %s28, 3
      %p312 = scmp.ne.s32.totalorder %s307, %s309
      %p313 = scmp.eq.s32.totalorder %s28, 0
      %p314 = por %p312, %p313
      %p315 = scmp.ne.s32.totalorder %s307, %s309
      %p316 = scmp.eq.s32.totalorder %s33, 3
      %p317 = por %p315, %p316
      %p318 = scmp.ne.s32.totalorder %s309, %s310
      %p319 = scmp.eq.s32.totalorder %s33, 0
      %p320 = por %p318, %p319
      %p321 = scmp.ne.s32.totalorder %s309, %s310
      %p322 = scmp.eq.s32.totalorder %s34, 3
      %p323 = por %p321, %p322
      %p325 = scmp.ne.s32.totalorder %s310, %s324
      %p326 = scmp.eq.s32.totalorder %s34, 0
      %p327 = por %p325, %p326
      %s328 = ssub.s32 %s35, %s47
      %s329 = ssub.s32 %s36, %s43
      %s330 = sor.u32 %s328, %s329
      %p331 = scmp.eq.s32.totalorder %s330, 0
      %s333 = sadd.s32 %s332, 1
      %s334 = scalar_select %p331, %s332, %s333
      %p337 = pneg %p331
      %p338 = scmp.eq.s32.totalorder %s28, 3
      %p339 = por %p337, %p338
      %p340 = scmp.ne.s32.totalorder %s332, %s335
      %p341 = scmp.eq.s32.totalorder %s28, 0
      %p342 = por %p340, %p341
      %p343 = scmp.ne.s32.totalorder %s332, %s335
      %p344 = scmp.eq.s32.totalorder %s33, 3
      %p345 = por %p343, %p344
      %p346 = scmp.ne.s32.totalorder %s335, %s336
      %p347 = scmp.eq.s32.totalorder %s33, 0
      %p348 = por %p346, %p347
      %p349 = scmp.ne.s32.totalorder %s335, %s336
      %p350 = scmp.eq.s32.totalorder %s34, 3
      %p351 = por %p349, %p350
      %p353 = scmp.ne.s32.totalorder %s336, %s352
      %p354 = scmp.eq.s32.totalorder %s34, 0
      %p355 = por %p353, %p354
      %p356 = scmp.le.s32.totalorder 1, %s28
      %p357 = scmp.lt.s32.totalorder %s28, 5
      %p358 = pnand %p356, %p357
      %p359 = pneg %p358
      // Predicated region
      $region9: #{tpu_custom_call.1} parent=5 // pred_check
        _
      $region10: #{tpu_custom_call.1} parent=5 // pred_check_branch
        %361 = sbr.rel (%p358) target = $region12
      $region11: #{tpu_custom_call.1} parent=5 // pred_region
        %s362 = ssub.s32 %s28, 1
        // Predicated region
        $region13: #{tpu_custom_call.1} parent=11 // pred_check
          %p363 = pneg %p89
        $region14: #{tpu_custom_call.1} parent=11 // pred_check_branch
          %365 = sbr.rel (%p363) target = $region16
        $region15: #{tpu_custom_call.1} parent=11 // pred_region
          _
        $region16: #{tpu_custom_call.1} parent=11 // pred_fallthru
          _
        // Predicated region
        $region17: #{tpu_custom_call.1} parent=11 // pred_check
          %p366 = pneg %p110
        $region18: #{tpu_custom_call.1} parent=11 // pred_check_branch
          %368 = sbr.rel (%p366) target = $region20
        $region19: #{tpu_custom_call.1} parent=11 // pred_region
          _
        $region20: #{tpu_custom_call.1} parent=11 // pred_fallthru
          _
        // Predicated region
        $region21: #{tpu_custom_call.1} parent=11 // pred_check
          %p369 = pneg %p131
        $region22: #{tpu_custom_call.1} parent=11 // pred_check_branch
          %371 = sbr.rel (%p369) target = $region24
        $region23: #{tpu_custom_call.1} parent=11 // pred_region
          %s373 = ssub.s32 1024, 1024
          %374 = vsyncadd [#allocation7], %s373
          %s375 = sshll.u32 [#allocation6], 4
          %s376 = int_to_ptr.vmem [resolvable:$true] %s375
          %381 = dma.hbm_to_vmem [thread:$0]  %s3, 1024, %s376, [#allocation7], 128, 128, 8
        $region24: #{tpu_custom_call.1} parent=11 // pred_fallthru
          _
        // Predicated region
        $region25: #{tpu_custom_call.1} parent=11 // pred_check
          %p382 = pneg %p152
        $region26: #{tpu_custom_call.1} parent=11 // pred_check_branch
          %384 = sbr.rel (%p382) target = $region28
        $region27: #{tpu_custom_call.1} parent=11 // pred_region
          %s386 = ssub.s32 1024, 1024
          %387 = vsyncadd [#allocation7], %s386
          %s388 = sshll.u32 [#allocation8], 4
          %s389 = int_to_ptr.vmem [resolvable:$true] %s388
          %394 = dma.hbm_to_vmem [thread:$0]  %s4, 1024, %s389, [#allocation7], 64, 64, 4
        $region28: #{tpu_custom_call.1} parent=11 // pred_fallthru
          _
        // Predicated region
        $region29: #{tpu_custom_call.1} parent=11 // pred_check
          %p395 = pneg %p173
        $region30: #{tpu_custom_call.1} parent=11 // pred_check_branch
          %397 = sbr.rel (%p395) target = $region32
        $region31: #{tpu_custom_call.1} parent=11 // pred_region
          %s399 = ssub.s32 1024, 1024
          %400 = vsyncadd [#allocation10], %s399
          %s401 = sshll.u32 [#allocation9], 4
          %s402 = int_to_ptr.vmem [resolvable:$true] %s401
          %407 = dma.hbm_to_vmem [thread:$0]  %s5, 1024, %s402, [#allocation10], 64, 64, 4
        $region32: #{tpu_custom_call.1} parent=11 // pred_fallthru
          _
        // Predicated region
        $region33: #{tpu_custom_call.1} parent=11 // pred_check
          %p408 = pneg %p194
        $region34: #{tpu_custom_call.1} parent=11 // pred_check_branch
          %410 = sbr.rel (%p408) target = $region36
        $region35: #{tpu_custom_call.1} parent=11 // pred_region
          _
        $region36: #{tpu_custom_call.1} parent=11 // pred_fallthru
          _
        // Predicated region
        $region37: #{tpu_custom_call.1} parent=11 // pred_check
          %p411 = pneg %p215
        $region38: #{tpu_custom_call.1} parent=11 // pred_check_branch
          %413 = sbr.rel (%p411) target = $region40
        $region39: #{tpu_custom_call.1} parent=11 // pred_region
          _
        $region40: #{tpu_custom_call.1} parent=11 // pred_fallthru
          _
        // Predicated region
        $region41: #{tpu_custom_call.1} parent=11 // pred_check
          %p414 = pneg %p236
        $region42: #{tpu_custom_call.1} parent=11 // pred_check_branch
          %416 = sbr.rel (%p414) target = $region44
        $region43: #{tpu_custom_call.1} parent=11 // pred_region
          _
        $region44: #{tpu_custom_call.1} parent=11 // pred_fallthru
          _
        // Predicated region
        $region45: #{tpu_custom_call.1} parent=11 // pred_check
          %p417 = pneg %p257
        $region46: #{tpu_custom_call.1} parent=11 // pred_check_branch
          %419 = sbr.rel (%p417) target = $region48
        $region47: #{tpu_custom_call.1} parent=11 // pred_region
          %s421 = ssub.s32 1024, 1024
          %422 = vsyncadd [#allocation10], %s421
          %s423 = sshll.u32 [#allocation11], 4
          %s424 = int_to_ptr.vmem [resolvable:$true] %s423
          %429 = dma.hbm_to_vmem [thread:$0]  %s9, 1024, %s424, [#allocation10], 64, 64, 4
        $region48: #{tpu_custom_call.1} parent=11 // pred_fallthru
          _
        // Predicated region
        $region49: #{tpu_custom_call.1} parent=11 // pred_check
          %p430 = pneg %p278
        $region50: #{tpu_custom_call.1} parent=11 // pred_check_branch
          %432 = sbr.rel (%p430) target = $region52
        $region51: #{tpu_custom_call.1} parent=11 // pred_region
          _
        $region52: #{tpu_custom_call.1} parent=11 // pred_fallthru
          _
        // Predicated region
        $region53: #{tpu_custom_call.1} parent=11 // pred_check
          %p433 = pneg %p299
        $region54: #{tpu_custom_call.1} parent=11 // pred_check_branch
          %435 = sbr.rel (%p433) target = $region56
        $region55: #{tpu_custom_call.1} parent=11 // pred_region
          %s437 = ssub.s32 1024, 1024
          %438 = vsyncadd [#allocation13], %s437
          %s439 = sshll.u32 [#allocation12], 4
          %s440 = int_to_ptr.vmem [resolvable:$true] %s439
          %445 = dma.hbm_to_vmem [thread:$0]  %s11, 1024, %s440, [#allocation13], 64, 64, 4
        $region56: #{tpu_custom_call.1} parent=11 // pred_fallthru
          _
        // Predicated region
        $region57: #{tpu_custom_call.1} parent=11 // pred_check
          %p446 = pneg %p320
        $region58: #{tpu_custom_call.1} parent=11 // pred_check_branch
          %448 = sbr.rel (%p446) target = $region60
        $region59: #{tpu_custom_call.1} parent=11 // pred_region
          _
        $region60: #{tpu_custom_call.1} parent=11 // pred_fallthru
          _
      $region12: #{tpu_custom_call.1} parent=5 // pred_fallthru
        _
      %p449 = scmp.lt.s32.totalorder %s28, 4
      // Predicated region
      $region61: #{tpu_custom_call.1} parent=5 // pred_check
        %p450 = pneg %p449
      $region62: #{tpu_custom_call.1} parent=5 // pred_check_branch
        %452 = sbr.rel (%p450) target = $region64
      $region63: #{tpu_custom_call.1} parent=5 // pred_region
        // Predicated region
        $region65: #{tpu_custom_call.1} parent=63 // pred_check
          %p453 = pneg %p62
        $region66: #{tpu_custom_call.1} parent=63 // pred_check_branch
          %455 = sbr.rel (%p453) target = $region68
        $region67: #{tpu_custom_call.1} parent=63 // pred_region
          #allocation16 [shape = 'u32[6]{0}', space=smem, size = 0x18, scoped, tag = 'DMA stride descriptor']
          %s456 = sand.u32 %s52, 1
          %s457 = scalar_lea.sflag [#allocation4], %s456
          %s458 = sand.u32 %s52, 1
          %s459 = smul.addr %s458, 128
          %s460 = scalar_lea.vmem [#allocation3], %s459
          %s461 = smul.u32 2, %s35
          %s462 = smul.u32 8, %s36
          %s464 = ssub.s32 2048, 2048
          %465 = vsyncadd %s457, %s464
          %s466 = smul.addr %s461, 16
          %s467 = sadd.s32 %s462, %s466
          %s468 = smul.addr %s467, 128
          %s469 = scalar_lea.hbm %s0, %s468
          %s471 = sshll.u32 1, 14
          %s472 = sxor.u32 4294967295, %s471
          %s474 = sld [smem:[#allocation0]]
          %s475 = sadd.s32 2, %s474
          %s477 = sshll.u32 7, 26
          %s478 = sxor.u32 4294967295, %s477
          %s479 = sand.u32 0, %s478
          %s480 = sshll.u32 %s475, 26
          %s481 = sor.u32 %s479, %s480
          %s482 = sshll.u32 %s460, 4
          %s483 = int_to_ptr.vmem [resolvable:$true] %s482
          %489 = sst [smem:[#allocation16]] 2048
          %s490 = scalar_lea.smem [#allocation16], 1
          %491 = sst [smem:[%s490]] 1024
          %s492 = scalar_lea.smem [#allocation16], 2
          %493 = sst [smem:[%s492]] 8
          %s494 = scalar_lea.smem [#allocation16], 3
          %495 = sst [smem:[%s494]] 128
          %s496 = scalar_lea.smem [#allocation16], 4
          %497 = sst [smem:[%s496]] 128
          %s498 = scalar_lea.smem [#allocation16], 5
          %499 = sst [smem:[%s498]] 8
          %501 = dma.general %s469, 2048, %s483, %s457, 131072, [#allocation16], %s481, 0
        $region68: #{tpu_custom_call.1} parent=63 // pred_fallthru
          _
      $region64: #{tpu_custom_call.1} parent=5 // pred_fallthru
        _
      %p502 = scmp.le.s32.totalorder 1, %s28
      %p503 = scmp.lt.s32.totalorder %s28, 5
      %p504 = pnand %p502, %p503
      %p505 = pneg %p504
      // Predicated region
      $region69: #{tpu_custom_call.1} parent=5 // pred_check
        _
      $region70: #{tpu_custom_call.1} parent=5 // pred_check_branch
        %507 = sbr.rel (%p504) target = $region72
      $region71: #{tpu_custom_call.1} parent=5 // pred_region
        %s508 = ssub.s32 %s28, 1
        %s509 = sand.u32 %s55, 1
        %s510 = scalar_lea.sflag [#allocation4], %s509
        %s511 = sand.u32 %s55, 1
        %s512 = smul.addr %s511, 128
        %s513 = scalar_lea.vmem [#allocation3], %s512
        // Predicated region
        $region73: #{tpu_custom_call.1} parent=71 // pred_check
          %p514 = pneg %p68
        $region74: #{tpu_custom_call.1} parent=71 // pred_check_branch
          %516 = sbr.rel (%p514) target = $region76
        $region75: #{tpu_custom_call.1} parent=71 // pred_region
          %517 = dma.done %s510, 2048
        $region76: #{tpu_custom_call.1} parent=71 // pred_fallthru
          _
        // Predicated region
        $region77: #{tpu_custom_call.1} parent=71 // pred_check
          %p518 = pneg %p131
        $region78: #{tpu_custom_call.1} parent=71 // pred_check_branch
          %520 = sbr.rel (%p518) target = $region80
        $region79: #{tpu_custom_call.1} parent=71 // pred_region
          %521 = dma.done [#allocation7], 1024
        $region80: #{tpu_custom_call.1} parent=71 // pred_fallthru
          _
        // Predicated region
        $region81: #{tpu_custom_call.1} parent=71 // pred_check
          %p522 = pneg %p152
        $region82: #{tpu_custom_call.1} parent=71 // pred_check_branch
          %524 = sbr.rel (%p522) target = $region84
        $region83: #{tpu_custom_call.1} parent=71 // pred_region
          %525 = dma.done [#allocation7], 1024
        $region84: #{tpu_custom_call.1} parent=71 // pred_fallthru
          _
        // Predicated region
        $region85: #{tpu_custom_call.1} parent=71 // pred_check
          %p526 = pneg %p173
        $region86: #{tpu_custom_call.1} parent=71 // pred_check_branch
          %528 = sbr.rel (%p526) target = $region88
        $region87: #{tpu_custom_call.1} parent=71 // pred_region
          %529 = dma.done [#allocation10], 1024
        $region88: #{tpu_custom_call.1} parent=71 // pred_fallthru
          _
        // Predicated region
        $region89: #{tpu_custom_call.1} parent=71 // pred_check
          %p530 = pneg %p257
        $region90: #{tpu_custom_call.1} parent=71 // pred_check_branch
          %532 = sbr.rel (%p530) target = $region92
        $region91: #{tpu_custom_call.1} parent=71 // pred_region
          %533 = dma.done [#allocation10], 1024
        $region92: #{tpu_custom_call.1} parent=71 // pred_fallthru
          _
        // Predicated region
        $region93: #{tpu_custom_call.1} parent=71 // pred_check
          %p534 = pneg %p299
        $region94: #{tpu_custom_call.1} parent=71 // pred_check_branch
          %536 = sbr.rel (%p534) target = $region96
        $region95: #{tpu_custom_call.1} parent=71 // pred_region
          %537 = dma.done [#allocation13], 1024
        $region96: #{tpu_custom_call.1} parent=71 // pred_fallthru
          _
        %s538 = sand.u32 %s55, 1
        %s539 = scalar_lea.sflag [#allocation4], %s538
        %s540 = sand.u32 %s55, 1
        %s541 = smul.addr %s540, 128
        %s542 = scalar_lea.vmem [#allocation3], %s541
        %p543 = pneg %p68
        %p544 = pneg %p65
        %p545 = pneg %p89
        %p546 = pneg %p86
        %p547 = pneg %p110
        %p548 = pneg %p107
        %p549 = pneg %p131
        %p550 = pneg %p128
        %p551 = pneg %p152
        %p552 = pneg %p149
        %p553 = pneg %p173
        %p554 = pneg %p170
        %p555 = pneg %p194
        %p556 = pneg %p191
        %p557 = pneg %p215
        %p558 = pneg %p212
        %p559 = pneg %p236
        %p560 = pneg %p233
        %p561 = pneg %p257
        %p562 = pneg %p254
        %p563 = pneg %p278
        %p564 = pneg %p275
        %p565 = pneg %p299
        %p566 = pneg %p296
        %p567 = pneg %p320
        %p568 = pneg %p317
        %p569 = pneg %p348
        %p570 = pneg %p345
        %s571 = sand.u32 %s335, 1
        %s572 = scalar_lea.sflag [#allocation5], %s571
        %s573 = sand.u32 %s335, 1
        %s574 = smul.addr %s573, 128
        %s575 = scalar_lea.vmem [#allocation14], %s574
        %s576 = smul.u32 2, %s37
        %s577 = smul.u32 8, %s38
        %s578 = smul.u32 2, %s37
        %s579 = smul.u32 8, %s38
        %p581 = scmp.eq.s32.totalorder %s38, 0
        // Predicated region
        $region97: #{tpu_custom_call.1} parent=71 // pred_check
          %p582 = pneg %p581
        $region98: #{tpu_custom_call.1} parent=71 // pred_check_branch
          %584 = sbr.rel (%p582) target = $region100
        $region99: #{tpu_custom_call.1} parent=71 // pred_region
          %585 = vst [vmem:[#allocation2] sm:$0x3] 0.0
        $region100: #{tpu_custom_call.1} parent=71 // pred_fallthru
          _
        %v586 = vld [vmem:[%s1] sm:$0x1]
        %v587 = vld [vmem:[%s2] sm:$0x1]
        %v588 = vld [vmem:[%s7] sm:$0x1]
        %v589 = vld [vmem:[%s8] sm:$0x1]
        %v590 = vld [vmem:[%s6] sm:$0x1]
        %v591 = vld [vmem:[%s10] sm:$0x1]
        %v592 = vld [vmem:[%s12] sm:$0x1]
        %v593 = vld [vmem:[#allocation6] sm:$0xff]
        %v594 = vld [vmem:[#allocation6 + $0x8] sm:$0xff]
        %v595 = vld [vmem:[#allocation6 + $0x10] sm:$0xff]
        %v596 = vld [vmem:[#allocation6 + $0x18] sm:$0xff]
        %v597 = vld [vmem:[#allocation6 + $0x20] sm:$0xff]
        %v598 = vld [vmem:[#allocation6 + $0x28] sm:$0xff]
        %v599 = vld [vmem:[#allocation6 + $0x30] sm:$0xff]
        %v600 = vld [vmem:[#allocation6 + $0x38] sm:$0xff]
        %v601 = vld [vmem:[%s513] sm:$0xff]
        %v602 = vld [vmem:[%s513 + $0x8] sm:$0xff]
        %v603 = vld [vmem:[%s513 + $0x10] sm:$0xff]
        %v604 = vld [vmem:[%s513 + $0x18] sm:$0xff]
        %v605 = vld [vmem:[%s513 + $0x20] sm:$0xff]
        %v606 = vld [vmem:[%s513 + $0x28] sm:$0xff]
        %v607 = vld [vmem:[%s513 + $0x30] sm:$0xff]
        %v608 = vld [vmem:[%s513 + $0x38] sm:$0xff]
        %v609 = vld [vmem:[%s513 + $0x40] sm:$0xff]
        %v610 = vld [vmem:[%s513 + $0x48] sm:$0xff]
        %v611 = vld [vmem:[%s513 + $0x50] sm:$0xff]
        %v612 = vld [vmem:[%s513 + $0x58] sm:$0xff]
        %v613 = vld [vmem:[%s513 + $0x60] sm:$0xff]
        %v614 = vld [vmem:[%s513 + $0x68] sm:$0xff]
        %v615 = vld [vmem:[%s513 + $0x70] sm:$0xff]
        %v616 = vld [vmem:[%s513 + $0x78] sm:$0xff]
        %617 = vadd.xlane.f32.xlu0 %v601
        %v618 = vpop.xlane.xlu0 %617
        %619 = vadd.xlane.f32.xlu0 %v602
        %v620 = vpop.xlane.xlu0 %619
        %621 = vadd.xlane.f32.xlu0 %v603
        %v622 = vpop.xlane.xlu0 %621
        %623 = vadd.xlane.f32.xlu0 %v604
        %v624 = vpop.xlane.xlu0 %623
        %625 = vadd.xlane.f32.xlu0 %v605
        %v626 = vpop.xlane.xlu0 %625
        %627 = vadd.xlane.f32.xlu0 %v606
        %v628 = vpop.xlane.xlu0 %627
        %629 = vadd.xlane.f32.xlu0 %v607
        %v630 = vpop.xlane.xlu0 %629
        %631 = vadd.xlane.f32.xlu0 %v608
        %v632 = vpop.xlane.xlu0 %631
        %633 = vadd.xlane.f32.xlu0 %v609
        %v634 = vpop.xlane.xlu0 %633
        %635 = vadd.xlane.f32.xlu0 %v610
        %v636 = vpop.xlane.xlu0 %635
        %637 = vadd.xlane.f32.xlu0 %v611
        %v638 = vpop.xlane.xlu0 %637
        %639 = vadd.xlane.f32.xlu0 %v612
        %v640 = vpop.xlane.xlu0 %639
        %641 = vadd.xlane.f32.xlu0 %v613
        %v642 = vpop.xlane.xlu0 %641
        %643 = vadd.xlane.f32.xlu0 %v614
        %v644 = vpop.xlane.xlu0 %643
        %645 = vadd.xlane.f32.xlu0 %v615
        %v646 = vpop.xlane.xlu0 %645
        %647 = vadd.xlane.f32.xlu0 %v616
        %v648 = vpop.xlane.xlu0 %647
        %v649 = vrcp.pop 128.0
        %v650 = vmul.f32 %v618, %v649
        %v651 = vmul.f32 %v620, %v649
        %v652 = vmul.f32 %v622, %v649
        %v653 = vmul.f32 %v624, %v649
        %v654 = vmul.f32 %v626, %v649
        %v655 = vmul.f32 %v628, %v649
        %v656 = vmul.f32 %v630, %v649
        %v657 = vmul.f32 %v632, %v649
        %v658 = vmul.f32 %v634, %v649
        %v659 = vmul.f32 %v636, %v649
        %v660 = vmul.f32 %v638, %v649
        %v661 = vmul.f32 %v640, %v649
        %v662 = vmul.f32 %v642, %v649
        %v663 = vmul.f32 %v644, %v649
        %v664 = vmul.f32 %v646, %v649
        %v665 = vmul.f32 %v648, %v649
        %v666 = vsub.f32 %v601, %v650
        %v667 = vsub.f32 %v602, %v651
        %v668 = vsub.f32 %v603, %v652
        %v669 = vsub.f32 %v604, %v653
        %v670 = vsub.f32 %v605, %v654
        %v671 = vsub.f32 %v606, %v655
        %v672 = vsub.f32 %v607, %v656
        %v673 = vsub.f32 %v608, %v657
        %v674 = vsub.f32 %v609, %v658
        %v675 = vsub.f32 %v610, %v659
        %v676 = vsub.f32 %v611, %v660
        %v677 = vsub.f32 %v612, %v661
        %v678 = vsub.f32 %v613, %v662
        %v679 = vsub.f32 %v614, %v663
        %v680 = vsub.f32 %v615, %v664
        %v681 = vsub.f32 %v616, %v665
        %v682 = vmul.f32 %v666, %v666
        %v683 = vmul.f32 %v667, %v667
        %v684 = vmul.f32 %v668, %v668
        %v685 = vmul.f32 %v669, %v669
        %v686 = vmul.f32 %v670, %v670
        %v687 = vmul.f32 %v671, %v671
        %v688 = vmul.f32 %v672, %v672
        %v689 = vmul.f32 %v673, %v673
        %v690 = vmul.f32 %v674, %v674
        %v691 = vmul.f32 %v675, %v675
        %v692 = vmul.f32 %v676, %v676
        %v693 = vmul.f32 %v677, %v677
        %v694 = vmul.f32 %v678, %v678
        %v695 = vmul.f32 %v679, %v679
        %v696 = vmul.f32 %v680, %v680
        %v697 = vmul.f32 %v681, %v681
        %698 = vadd.xlane.f32.xlu0 %v682
        %v699 = vpop.xlane.xlu0 %698
        %700 = vadd.xlane.f32.xlu0 %v683
        %v701 = vpop.xlane.xlu0 %700
        %702 = vadd.xlane.f32.xlu0 %v684
        %v703 = vpop.xlane.xlu0 %702
        %704 = vadd.xlane.f32.xlu0 %v685
        %v705 = vpop.xlane.xlu0 %704
        %706 = vadd.xlane.f32.xlu0 %v686
        %v707 = vpop.xlane.xlu0 %706
        %708 = vadd.xlane.f32.xlu0 %v687
        %v709 = vpop.xlane.xlu0 %708
        %710 = vadd.xlane.f32.xlu0 %v688
        %v711 = vpop.xlane.xlu0 %710
        %712 = vadd.xlane.f32.xlu0 %v689
        %v713 = vpop.xlane.xlu0 %712
        %714 = vadd.xlane.f32.xlu0 %v690
        %v715 = vpop.xlane.xlu0 %714
        %716 = vadd.xlane.f32.xlu0 %v691
        %v717 = vpop.xlane.xlu0 %716
        %718 = vadd.xlane.f32.xlu0 %v692
        %v719 = vpop.xlane.xlu0 %718
        %720 = vadd.xlane.f32.xlu0 %v693
        %v721 = vpop.xlane.xlu0 %720
        %722 = vadd.xlane.f32.xlu0 %v694
        %v723 = vpop.xlane.xlu0 %722
        %724 = vadd.xlane.f32.xlu0 %v695
        %v725 = vpop.xlane.xlu0 %724
        %726 = vadd.xlane.f32.xlu0 %v696
        %v727 = vpop.xlane.xlu0 %726
        %728 = vadd.xlane.f32.xlu0 %v697
        %v729 = vpop.xlane.xlu0 %728
        %v730 = vmul.f32 %v699, %v649
        %v731 = vmul.f32 %v701, %v649
        %v732 = vmul.f32 %v703, %v649
        %v733 = vmul.f32 %v705, %v649
        %v734 = vmul.f32 %v707, %v649
        %v735 = vmul.f32 %v709, %v649
        %v736 = vmul.f32 %v711, %v649
        %v737 = vmul.f32 %v713, %v649
        %v738 = vmul.f32 %v715, %v649
        %v739 = vmul.f32 %v717, %v649
        %v740 = vmul.f32 %v719, %v649
        %v741 = vmul.f32 %v721, %v649
        %v742 = vmul.f32 %v723, %v649
        %v743 = vmul.f32 %v725, %v649
        %v744 = vmul.f32 %v727, %v649
        %v745 = vmul.f32 %v729, %v649
        %v746 = vadd.f32 %v730, 1e-05
        %v747 = vadd.f32 %v731, 1e-05
        %v748 = vadd.f32 %v732, 1e-05
        %v749 = vadd.f32 %v733, 1e-05
        %v750 = vadd.f32 %v734, 1e-05
        %v751 = vadd.f32 %v735, 1e-05
        %v752 = vadd.f32 %v736, 1e-05
        %v753 = vadd.f32 %v737, 1e-05
        %v754 = vadd.f32 %v738, 1e-05
        %v755 = vadd.f32 %v739, 1e-05
        %v756 = vadd.f32 %v740, 1e-05
        %v757 = vadd.f32 %v741, 1e-05
        %v758 = vadd.f32 %v742, 1e-05
        %v759 = vadd.f32 %v743, 1e-05
        %v760 = vadd.f32 %v744, 1e-05
        %v761 = vadd.f32 %v745, 1e-05
        %v762 = vrsqrt.pop %v746
        %v763 = vrsqrt.pop %v747
        %v764 = vrsqrt.pop %v748
        %v765 = vrsqrt.pop %v749
        %v766 = vrsqrt.pop %v750
        %v767 = vrsqrt.pop %v751
        %v768 = vrsqrt.pop %v752
        %v769 = vrsqrt.pop %v753
        %v770 = vrsqrt.pop %v754
        %v771 = vrsqrt.pop %v755
        %v772 = vrsqrt.pop %v756
        %v773 = vrsqrt.pop %v757
        %v774 = vrsqrt.pop %v758
        %v775 = vrsqrt.pop %v759
        %v776 = vrsqrt.pop %v760
        %v777 = vrsqrt.pop %v761
        %v778 = vmul.f32 %v666, %v762
        %v779 = vmul.f32 %v667, %v763
        %v780 = vmul.f32 %v668, %v764
        %v781 = vmul.f32 %v669, %v765
        %v782 = vmul.f32 %v670, %v766
        %v783 = vmul.f32 %v671, %v767
        %v784 = vmul.f32 %v672, %v768
        %v785 = vmul.f32 %v673, %v769
        %v786 = vmul.f32 %v674, %v770
        %v787 = vmul.f32 %v675, %v771
        %v788 = vmul.f32 %v676, %v772
        %v789 = vmul.f32 %v677, %v773
        %v790 = vmul.f32 %v678, %v774
        %v791 = vmul.f32 %v679, %v775
        %v792 = vmul.f32 %v680, %v776
        %v793 = vmul.f32 %v681, %v777
        %v795 = vlaneseq
        %v796 = vshrl.u32 %v795, 7
        %v797 = vsub.s32 0, %v796
        %v798 = vrot.slane %v586, %v797
        %v800 = vmul.f32 %v778, %v798
        %v801 = vmul.f32 %v779, %v798
        %v802 = vmul.f32 %v780, %v798
        %v803 = vmul.f32 %v781, %v798
        %v804 = vmul.f32 %v782, %v798
        %v805 = vmul.f32 %v783, %v798
        %v806 = vmul.f32 %v784, %v798
        %v807 = vmul.f32 %v785, %v798
        %v808 = vmul.f32 %v786, %v798
        %v809 = vmul.f32 %v787, %v798
        %v810 = vmul.f32 %v788, %v798
        %v811 = vmul.f32 %v789, %v798
        %v812 = vmul.f32 %v790, %v798
        %v813 = vmul.f32 %v791, %v798
        %v814 = vmul.f32 %v792, %v798
        %v815 = vmul.f32 %v793, %v798
        %v817 = vlaneseq
        %v818 = vshrl.u32 %v817, 7
        %v819 = vsub.s32 0, %v818
        %v820 = vrot.slane %v587, %v819
        %v822 = vadd.f32 %v800, %v820
        %v823 = vadd.f32 %v801, %v820
        %v824 = vadd.f32 %v802, %v820
        %v825 = vadd.f32 %v803, %v820
        %v826 = vadd.f32 %v804, %v820
        %v827 = vadd.f32 %v805, %v820
        %v828 = vadd.f32 %v806, %v820
        %v829 = vadd.f32 %v807, %v820
        %v830 = vadd.f32 %v808, %v820
        %v831 = vadd.f32 %v809, %v820
        %v832 = vadd.f32 %v810, %v820
        %v833 = vadd.f32 %v811, %v820
        %v834 = vadd.f32 %v812, %v820
        %v835 = vadd.f32 %v813, %v820
        %v836 = vadd.f32 %v814, %v820
        %v837 = vadd.f32 %v815, %v820
        %v838 = vpack.c.bf16 %v823, %v822
        %v839 = vpack.c.bf16 %v825, %v824
        %v840 = vpack.c.bf16 %v827, %v826
        %v841 = vpack.c.bf16 %v829, %v828
        %v842 = vpack.c.bf16 %v831, %v830
        %v843 = vpack.c.bf16 %v833, %v832
        %v844 = vpack.c.bf16 %v835, %v834
        %v845 = vpack.c.bf16 %v837, %v836
        %v846 = vld [vmem:[#allocation8] sm:$0xf]
        %v847 = vld [vmem:[#allocation8 + $0x4] sm:$0xf]
        %v848 = vld [vmem:[#allocation8 + $0x8] sm:$0xf]
        %v849 = vld [vmem:[#allocation8 + $0xc] sm:$0xf]
        %v850 = vld [vmem:[#allocation8 + $0x10] sm:$0xf]
        %v851 = vld [vmem:[#allocation8 + $0x14] sm:$0xf]
        %v852 = vld [vmem:[#allocation8 + $0x18] sm:$0xf]
        %v853 = vld [vmem:[#allocation8 + $0x1c] sm:$0xf]
        %v854 = vld [vmem:[#allocation8 + $0x20] sm:$0xf]
        %v855 = vld [vmem:[#allocation8 + $0x24] sm:$0xf]
        %v856 = vld [vmem:[#allocation8 + $0x28] sm:$0xf]
        %v857 = vld [vmem:[#allocation8 + $0x2c] sm:$0xf]
        %v858 = vld [vmem:[#allocation8 + $0x30] sm:$0xf]
        %v859 = vld [vmem:[#allocation8 + $0x34] sm:$0xf]
        %v860 = vld [vmem:[#allocation8 + $0x38] sm:$0xf]
        %v861 = vld [vmem:[#allocation8 + $0x3c] sm:$0xf]
        %v878 = vunpack.c.l.b16 %v846
        %v879 = vunpack.c.l.b16 %v847
        %v880 = vunpack.c.l.b16 %v848
        %v881 = vunpack.c.l.b16 %v849
        %v882 = vunpack.c.l.b16 %v850
        %v883 = vunpack.c.l.b16 %v851
        %v884 = vunpack.c.l.b16 %v852
        %v885 = vunpack.c.l.b16 %v853
        %v886 = vunpack.c.l.b16 %v854
        %v887 = vunpack.c.l.b16 %v855
        %v888 = vunpack.c.l.b16 %v856
        %v889 = vunpack.c.l.b16 %v857
        %v890 = vunpack.c.l.b16 %v858
        %v891 = vunpack.c.l.b16 %v859
        %v892 = vunpack.c.l.b16 %v860
        %v893 = vunpack.c.l.b16 %v861
        %v894 = vpack.c.b16 %v879, %v878
        %v895 = vpack.c.b16 %v881, %v880
        %v896 = vpack.c.b16 %v883, %v882
        %v897 = vpack.c.b16 %v885, %v884
        %v898 = vpack.c.b16 %v887, %v886
        %v899 = vpack.c.b16 %v889, %v888
        %v900 = vpack.c.b16 %v891, %v890
        %v901 = vpack.c.b16 %v893, %v892
        %910 = vmatprep.subr.bf16.mxu0 0
        %911 = vmatpush1.bf16.msra.mxu0 %v901
        %912 = vmatprep.subr.bf16.mxu0 0
        %913 = vmatpush1.bf16.msra.mxu0 %v900
        %914 = vmatprep.subr.bf16.mxu0 0
        %915 = vmatpush1.bf16.msra.mxu0 %v899
        %916 = vmatprep.subr.bf16.mxu0 0
        %917 = vmatpush1.bf16.msra.mxu0 %v898
        %918 = vmatprep.subr.bf16.mxu0 0
        %919 = vmatpush1.bf16.msra.mxu0 %v897
        %920 = vmatprep.subr.bf16.mxu0 0
        %921 = vmatpush1.bf16.msra.mxu0 %v896
        %922 = vmatprep.subr.bf16.mxu0 0
        %923 = vmatpush1.bf16.msra.mxu0 %v895
        %924 = vmatprep.subr.bf16.mxu0 0
        %925 = vmatpush1.bf16.msra.mxu0 %v894
        %926 = vmatprep.subr.bf16.mxu0 0
        %927 = vmatpush2.bf16.msra.mxu0 0
        %928 = vmatprep.subr.bf16.mxu0 0
        %929 = vmatpush2.bf16.msra.mxu0 0
        %930 = vmatprep.subr.bf16.mxu0 0
        %931 = vmatpush2.bf16.msra.mxu0 0
        %932 = vmatprep.subr.bf16.mxu0 0
        %933 = vmatpush2.bf16.msra.mxu0 0
        %934 = vmatprep.subr.bf16.mxu0 0
        %935 = vmatpush2.bf16.msra.mxu0 0
        %936 = vmatprep.subr.bf16.mxu0 0
        %937 = vmatpush2.bf16.msra.mxu0 0
        %938 = vmatprep.subr.bf16.mxu0 0
        %939 = vmatpush2.bf16.msra.mxu0 0
        %940 = vmatprep.subr.bf16.mxu0 0
        %941 = vmatpush2.bf16.msra.mxu0 0
        %942 = vmatprep.mubr.bf16.mxu0 0
        %943 = vmatmul.mubr.bf16.gmra.mxu0 %v838
        %v944 = vpop.f32.mrf.mxu0
        %v945 = vadd.f32 0.0, %v944
        %v946 = vpop.f32.mrf.mxu0
        %v947 = vpop.f32.mrf.mxu0
        %v948 = vadd.f32 0.0, %v947
        %v949 = vpop.f32.mrf.mxu0
        %950 = vmatprep.mubr.bf16.mxu0 0
        %951 = vmatmul.mubr.bf16.gmra.mxu0 %v839
        %v952 = vpop.f32.mrf.mxu0
        %v953 = vadd.f32 0.0, %v952
        %v954 = vpop.f32.mrf.mxu0
        %v955 = vpop.f32.mrf.mxu0
        %v956 = vadd.f32 0.0, %v955
        %v957 = vpop.f32.mrf.mxu0
        %958 = vmatprep.mubr.bf16.mxu0 0
        %959 = vmatmul.mubr.bf16.gmra.mxu0 %v840
        %v960 = vpop.f32.mrf.mxu0
        %v961 = vadd.f32 0.0, %v960
        %v962 = vpop.f32.mrf.mxu0
        %v963 = vpop.f32.mrf.mxu0
        %v964 = vadd.f32 0.0, %v963
        %v965 = vpop.f32.mrf.mxu0
        %966 = vmatprep.mubr.bf16.mxu0 0
        %967 = vmatmul.mubr.bf16.gmra.mxu0 %v841
        %v968 = vpop.f32.mrf.mxu0
        %v969 = vadd.f32 0.0, %v968
        %v970 = vpop.f32.mrf.mxu0
        %v971 = vpop.f32.mrf.mxu0
        %v972 = vadd.f32 0.0, %v971
        %v973 = vpop.f32.mrf.mxu0
        %974 = vmatprep.mubr.bf16.mxu0 0
        %975 = vmatmul.mubr.bf16.gmra.mxu0 %v842
        %v976 = vpop.f32.mrf.mxu0
        %v977 = vadd.f32 0.0, %v976
        %v978 = vpop.f32.mrf.mxu0
        %v979 = vpop.f32.mrf.mxu0
        %v980 = vadd.f32 0.0, %v979
        %v981 = vpop.f32.mrf.mxu0
        %982 = vmatprep.mubr.bf16.mxu0 0
        %983 = vmatmul.mubr.bf16.gmra.mxu0 %v843
        %v984 = vpop.f32.mrf.mxu0
        %v985 = vadd.f32 0.0, %v984
        %v986 = vpop.f32.mrf.mxu0
        %v987 = vpop.f32.mrf.mxu0
        %v988 = vadd.f32 0.0, %v987
        %v989 = vpop.f32.mrf.mxu0
        %990 = vmatprep.mubr.bf16.mxu0 0
        %991 = vmatmul.mubr.bf16.gmra.mxu0 %v844
        %v992 = vpop.f32.mrf.mxu0
        %v993 = vadd.f32 0.0, %v992
        %v994 = vpop.f32.mrf.mxu0
        %v995 = vpop.f32.mrf.mxu0
        %v996 = vadd.f32 0.0, %v995
        %v997 = vpop.f32.mrf.mxu0
        %998 = vmatprep.mubr.bf16.mxu0 0
        %999 = vmatmul.mubr.bf16.gmra.mxu0 %v845
        %v1000 = vpop.f32.mrf.mxu0
        %v1001 = vadd.f32 0.0, %v1000
        %v1002 = vpop.f32.mrf.mxu0
        %v1003 = vpop.f32.mrf.mxu0
        %v1004 = vadd.f32 0.0, %v1003
        %v1005 = vpop.f32.mrf.mxu0
        %1006 = vdwg.mxu0
        %v1007 = vlaneseq
        %v1008 = vshrl.u32 %v1007, 7
        %v1009 = vadd.s32 %v1008, 8
        %v1010 = vadd.s32 %v1008, 16
        %v1011 = vadd.s32 %v1008, 24
        %v1012 = vadd.s32 %v1008, 32
        %v1013 = vadd.s32 %v1008, 40
        %v1014 = vadd.s32 %v1008, 48
        %v1015 = vadd.s32 %v1008, 56
        %v1016 = vrot.slane %v945, 7
        %v1017 = vrot.slane %v948, 7
        %v1018 = vrot.slane %v953, 7
        %v1019 = vrot.slane %v956, 7
        %v1020 = vrot.slane %v961, 7
        %v1021 = vrot.slane %v964, 7
        %v1022 = vrot.slane %v969, 7
        %v1023 = vrot.slane %v972, 7
        %v1024 = vrot.slane %v977, 7
        %v1025 = vrot.slane %v980, 7
        %v1026 = vrot.slane %v985, 7
        %v1027 = vrot.slane %v988, 7
        %v1028 = vrot.slane %v993, 7
        %v1029 = vrot.slane %v996, 7
        %v1030 = vrot.slane %v1001, 7
        %v1031 = vrot.slane %v1004, 7
        %vm1032 = vcmp.lt.s32.totalorder %v1008, 1
        %v1033 = vsel %vm1032, %v1030, %v1031
        %v1034 = vsel %vm1032, %v1029, %v1030
        %v1035 = vsel %vm1032, %v1028, %v1029
        %v1036 = vsel %vm1032, %v1027, %v1028
        %v1037 = vsel %vm1032, %v1026, %v1027
        %v1038 = vsel %vm1032, %v1025, %v1026
        %v1039 = vsel %vm1032, %v1024, %v1025
        %v1040 = vsel %vm1032, %v1023, %v1024
        %v1041 = vsel %vm1032, %v1022, %v1023
        %v1042 = vsel %vm1032, %v1021, %v1022
        %v1043 = vsel %vm1032, %v1020, %v1021
        %v1044 = vsel %vm1032, %v1019, %v1020
        %v1045 = vsel %vm1032, %v1018, %v1019
        %v1046 = vsel %vm1032, %v1017, %v1018
        %v1047 = vsel %vm1032, %v1016, %v1017
        %v1048 = vsel %vm1032, %v1031, %v1016
        %vm1049 = vcmp.ge.s32.totalorder %v1008, 1
        %vm1050 = vcmp.ge.s32.totalorder %v1009, 1
        %vm1051 = vcmp.ge.s32.totalorder %v1010, 1
        %vm1052 = vcmp.ge.s32.totalorder %v1011, 1
        %vm1053 = vcmp.ge.s32.totalorder %v1012, 1
        %vm1054 = vcmp.ge.s32.totalorder %v1013, 1
        %vm1055 = vcmp.ge.s32.totalorder %v1014, 1
        %vm1056 = vcmp.ge.s32.totalorder %v1015, 1
        %v1057 = vsel %vm1049, 1, 0
        %v1058 = vsel %vm1050, 1, 0
        %v1059 = vsel %vm1051, 1, 0
        %v1060 = vsel %vm1052, 1, 0
        %v1061 = vsel %vm1053, 1, 0
        %v1062 = vsel %vm1054, 1, 0
        %v1063 = vsel %vm1055, 1, 0
        %v1064 = vsel %vm1056, 1, 0
        %vm1065 = vcmp.eq.s32.totalorder %v1057, 1
        %vm1066 = vcmp.eq.s32.totalorder %v1058, 1
        %vm1067 = vcmp.eq.s32.totalorder %v1059, 1
        %vm1068 = vcmp.eq.s32.totalorder %v1060, 1
        %vm1069 = vcmp.eq.s32.totalorder %v1061, 1
        %vm1070 = vcmp.eq.s32.totalorder %v1062, 1
        %vm1071 = vcmp.eq.s32.totalorder %v1063, 1
        %vm1072 = vcmp.eq.s32.totalorder %v1064, 1
        %v1073 = vsel %vm1065, %v1048, 0.0
        %v1074 = vsel %vm1066, %v1047, 0.0
        %v1075 = vsel %vm1067, %v1046, 0.0
        %v1076 = vsel %vm1068, %v1045, 0.0
        %v1077 = vsel %vm1069, %v1044, 0.0
        %v1078 = vsel %vm1070, %v1043, 0.0
        %v1079 = vsel %vm1071, %v1042, 0.0
        %v1080 = vsel %vm1072, %v1041, 0.0
        %v1081 = vsel %vm1065, %v1040, 0.0
        %v1082 = vsel %vm1066, %v1039, 0.0
        %v1083 = vsel %vm1067, %v1038, 0.0
        %v1084 = vsel %vm1068, %v1037, 0.0
        %v1085 = vsel %vm1069, %v1036, 0.0
        %v1086 = vsel %vm1070, %v1035, 0.0
        %v1087 = vsel %vm1071, %v1034, 0.0
        %v1088 = vsel %vm1072, %v1033, 0.0
        %v1089 = vlaneseq
        %v1090 = vshrl.u32 %v1089, 7
        %v1091 = vsub.s32 0, %v1090
        %v1092 = vrot.slane %v593, %v1091
        %v1093 = vmul.f32 %v1092, %v1073
        %v1094 = vmul.f32 %v1092, %v1074
        %v1095 = vmul.f32 %v1092, %v1075
        %v1096 = vmul.f32 %v1092, %v1076
        %v1097 = vmul.f32 %v1092, %v1077
        %v1098 = vmul.f32 %v1092, %v1078
        %v1099 = vmul.f32 %v1092, %v1079
        %v1100 = vmul.f32 %v1092, %v1080
        %v1101 = vmul.f32 %v1092, %v1081
        %v1102 = vmul.f32 %v1092, %v1082
        %v1103 = vmul.f32 %v1092, %v1083
        %v1104 = vmul.f32 %v1092, %v1084
        %v1105 = vmul.f32 %v1092, %v1085
        %v1106 = vmul.f32 %v1092, %v1086
        %v1107 = vmul.f32 %v1092, %v1087
        %v1108 = vmul.f32 %v1092, %v1088
        %v1109 = vadd.f32 %v945, %v1093
        %v1110 = vadd.f32 %v948, %v1094
        %v1111 = vadd.f32 %v953, %v1095
        %v1112 = vadd.f32 %v956, %v1096
        %v1113 = vadd.f32 %v961, %v1097
        %v1114 = vadd.f32 %v964, %v1098
        %v1115 = vadd.f32 %v969, %v1099
        %v1116 = vadd.f32 %v972, %v1100
        %v1117 = vadd.f32 %v977, %v1101
        %v1118 = vadd.f32 %v980, %v1102
        %v1119 = vadd.f32 %v985, %v1103
        %v1120 = vadd.f32 %v988, %v1104
        %v1121 = vadd.f32 %v993, %v1105
        %v1122 = vadd.f32 %v996, %v1106
        %v1123 = vadd.f32 %v1001, %v1107
        %v1124 = vadd.f32 %v1004, %v1108
        %v1125 = vrot.slane %v1109, 6
        %v1126 = vrot.slane %v1110, 6
        %v1127 = vrot.slane %v1111, 6
        %v1128 = vrot.slane %v1112, 6
        %v1129 = vrot.slane %v1113, 6
        %v1130 = vrot.slane %v1114, 6
        %v1131 = vrot.slane %v1115, 6
        %v1132 = vrot.slane %v1116, 6
        %v1133 = vrot.slane %v1117, 6
        %v1134 = vrot.slane %v1118, 6
        %v1135 = vrot.slane %v1119, 6
        %v1136 = vrot.slane %v1120, 6
        %v1137 = vrot.slane %v1121, 6
        %v1138 = vrot.slane %v1122, 6
        %v1139 = vrot.slane %v1123, 6
        %v1140 = vrot.slane %v1124, 6
        %vm1141 = vcmp.lt.s32.totalorder %v1008, 2
        %v1142 = vsel %vm1141, %v1139, %v1140
        %v1143 = vsel %vm1141, %v1138, %v1139
        %v1144 = vsel %vm1141, %v1137, %v1138
        %v1145 = vsel %vm1141, %v1136, %v1137
        %v1146 = vsel %vm1141, %v1135, %v1136
        %v1147 = vsel %vm1141, %v1134, %v1135
        %v1148 = vsel %vm1141, %v1133, %v1134
        %v1149 = vsel %vm1141, %v1132, %v1133
        %v1150 = vsel %vm1141, %v1131, %v1132
        %v1151 = vsel %vm1141, %v1130, %v1131
        %v1152 = vsel %vm1141, %v1129, %v1130
        %v1153 = vsel %vm1141, %v1128, %v1129
        %v1154 = vsel %vm1141, %v1127, %v1128
        %v1155 = vsel %vm1141, %v1126, %v1127
        %v1156 = vsel %vm1141, %v1125, %v1126
        %v1157 = vsel %vm1141, %v1140, %v1125
        %vm1158 = vcmp.ge.s32.totalorder %v1008, 2
        %vm1159 = vcmp.ge.s32.totalorder %v1009, 2
        %vm1160 = vcmp.ge.s32.totalorder %v1010, 2
        %vm1161 = vcmp.ge.s32.totalorder %v1011, 2
        %vm1162 = vcmp.ge.s32.totalorder %v1012, 2
        %vm1163 = vcmp.ge.s32.totalorder %v1013, 2
        %vm1164 = vcmp.ge.s32.totalorder %v1014, 2
        %vm1165 = vcmp.ge.s32.totalorder %v1015, 2
        %v1166 = vsel %vm1158, 1, 0
        %v1167 = vsel %vm1159, 1, 0
        %v1168 = vsel %vm1160, 1, 0
        %v1169 = vsel %vm1161, 1, 0
        %v1170 = vsel %vm1162, 1, 0
        %v1171 = vsel %vm1163, 1, 0
        %v1172 = vsel %vm1164, 1, 0
        %v1173 = vsel %vm1165, 1, 0
        %vm1174 = vcmp.eq.s32.totalorder %v1166, 1
        %vm1175 = vcmp.eq.s32.totalorder %v1167, 1
        %vm1176 = vcmp.eq.s32.totalorder %v1168, 1
        %vm1177 = vcmp.eq.s32.totalorder %v1169, 1
        %vm1178 = vcmp.eq.s32.totalorder %v1170, 1
        %vm1179 = vcmp.eq.s32.totalorder %v1171, 1
        %vm1180 = vcmp.eq.s32.totalorder %v1172, 1
        %vm1181 = vcmp.eq.s32.totalorder %v1173, 1
        %v1182 = vsel %vm1174, %v1157, 0.0
        %v1183 = vsel %vm1175, %v1156, 0.0
        %v1184 = vsel %vm1176, %v1155, 0.0
        %v1185 = vsel %vm1177, %v1154, 0.0
        %v1186 = vsel %vm1178, %v1153, 0.0
        %v1187 = vsel %vm1179, %v1152, 0.0
        %v1188 = vsel %vm1180, %v1151, 0.0
        %v1189 = vsel %vm1181, %v1150, 0.0
        %v1190 = vsel %vm1174, %v1149, 0.0
        %v1191 = vsel %vm1175, %v1148, 0.0
        %v1192 = vsel %vm1176, %v1147, 0.0
        %v1193 = vsel %vm1177, %v1146, 0.0
        %v1194 = vsel %vm1178, %v1145, 0.0
        %v1195 = vsel %vm1179, %v1144, 0.0
        %v1196 = vsel %vm1180, %v1143, 0.0
        %v1197 = vsel %vm1181, %v1142, 0.0
        %v1198 = vlaneseq
        %v1199 = vshrl.u32 %v1198, 7
        %v1200 = vsub.s32 1, %v1199
        %v1201 = vrot.slane %v593, %v1200
        %v1202 = vmul.f32 %v1201, %v1182
        %v1203 = vmul.f32 %v1201, %v1183
        %v1204 = vmul.f32 %v1201, %v1184
        %v1205 = vmul.f32 %v1201, %v1185
        %v1206 = vmul.f32 %v1201, %v1186
        %v1207 = vmul.f32 %v1201, %v1187
        %v1208 = vmul.f32 %v1201, %v1188
        %v1209 = vmul.f32 %v1201, %v1189
        %v1210 = vmul.f32 %v1201, %v1190
        %v1211 = vmul.f32 %v1201, %v1191
        %v1212 = vmul.f32 %v1201, %v1192
        %v1213 = vmul.f32 %v1201, %v1193
        %v1214 = vmul.f32 %v1201, %v1194
        %v1215 = vmul.f32 %v1201, %v1195
        %v1216 = vmul.f32 %v1201, %v1196
        %v1217 = vmul.f32 %v1201, %v1197
        %v1218 = vadd.f32 %v1109, %v1202
        %v1219 = vadd.f32 %v1110, %v1203
        %v1220 = vadd.f32 %v1111, %v1204
        %v1221 = vadd.f32 %v1112, %v1205
        %v1222 = vadd.f32 %v1113, %v1206
        %v1223 = vadd.f32 %v1114, %v1207
        %v1224 = vadd.f32 %v1115, %v1208
        %v1225 = vadd.f32 %v1116, %v1209
        %v1226 = vadd.f32 %v1117, %v1210
        %v1227 = vadd.f32 %v1118, %v1211
        %v1228 = vadd.f32 %v1119, %v1212
        %v1229 = vadd.f32 %v1120, %v1213
        %v1230 = vadd.f32 %v1121, %v1214
        %v1231 = vadd.f32 %v1122, %v1215
        %v1232 = vadd.f32 %v1123, %v1216
        %v1233 = vadd.f32 %v1124, %v1217
        %v1234 = vrot.slane %v1218, 4
        %v1235 = vrot.slane %v1219, 4
        %v1236 = vrot.slane %v1220, 4
        %v1237 = vrot.slane %v1221, 4
        %v1238 = vrot.slane %v1222, 4
        %v1239 = vrot.slane %v1223, 4
        %v1240 = vrot.slane %v1224, 4
        %v1241 = vrot.slane %v1225, 4
        %v1242 = vrot.slane %v1226, 4
        %v1243 = vrot.slane %v1227, 4
        %v1244 = vrot.slane %v1228, 4
        %v1245 = vrot.slane %v1229, 4
        %v1246 = vrot.slane %v1230, 4
        %v1247 = vrot.slane %v1231, 4
        %v1248 = vrot.slane %v1232, 4
        %v1249 = vrot.slane %v1233, 4
        %vm1250 = vcmp.lt.s32.totalorder %v1008, 4
        %v1251 = vsel %vm1250, %v1248, %v1249
        %v1252 = vsel %vm1250, %v1247, %v1248
        %v1253 = vsel %vm1250, %v1246, %v1247
        %v1254 = vsel %vm1250, %v1245, %v1246
        %v1255 = vsel %vm1250, %v1244, %v1245
        %v1256 = vsel %vm1250, %v1243, %v1244
        %v1257 = vsel %vm1250, %v1242, %v1243
        %v1258 = vsel %vm1250, %v1241, %v1242
        %v1259 = vsel %vm1250, %v1240, %v1241
        %v1260 = vsel %vm1250, %v1239, %v1240
        %v1261 = vsel %vm1250, %v1238, %v1239
        %v1262 = vsel %vm1250, %v1237, %v1238
        %v1263 = vsel %vm1250, %v1236, %v1237
        %v1264 = vsel %vm1250, %v1235, %v1236
        %v1265 = vsel %vm1250, %v1234, %v1235
        %v1266 = vsel %vm1250, %v1249, %v1234
        %vm1267 = vcmp.ge.s32.totalorder %v1008, 4
        %vm1268 = vcmp.ge.s32.totalorder %v1009, 4
        %vm1269 = vcmp.ge.s32.totalorder %v1010, 4
        %vm1270 = vcmp.ge.s32.totalorder %v1011, 4
        %vm1271 = vcmp.ge.s32.totalorder %v1012, 4
        %vm1272 = vcmp.ge.s32.totalorder %v1013, 4
        %vm1273 = vcmp.ge.s32.totalorder %v1014, 4
        %vm1274 = vcmp.ge.s32.totalorder %v1015, 4
        %v1275 = vsel %vm1267, 1, 0
        %v1276 = vsel %vm1268, 1, 0
        %v1277 = vsel %vm1269, 1, 0
        %v1278 = vsel %vm1270, 1, 0
        %v1279 = vsel %vm1271, 1, 0
        %v1280 = vsel %vm1272, 1, 0
        %v1281 = vsel %vm1273, 1, 0
        %v1282 = vsel %vm1274, 1, 0
        %vm1283 = vcmp.eq.s32.totalorder %v1275, 1
        %vm1284 = vcmp.eq.s32.totalorder %v1276, 1
        %vm1285 = vcmp.eq.s32.totalorder %v1277, 1
        %vm1286 = vcmp.eq.s32.totalorder %v1278, 1
        %vm1287 = vcmp.eq.s32.totalorder %v1279, 1
        %vm1288 = vcmp.eq.s32.totalorder %v1280, 1
        %vm1289 = vcmp.eq.s32.totalorder %v1281, 1
        %vm1290 = vcmp.eq.s32.totalorder %v1282, 1
        %v1291 = vsel %vm1283, %v1266, 0.0
        %v1292 = vsel %vm1284, %v1265, 0.0
        %v1293 = vsel %vm1285, %v1264, 0.0
        %v1294 = vsel %vm1286, %v1263, 0.0
        %v1295 = vsel %vm1287, %v1262, 0.0
        %v1296 = vsel %vm1288, %v1261, 0.0
        %v1297 = vsel %vm1289, %v1260, 0.0
        %v1298 = vsel %vm1290, %v1259, 0.0
        %v1299 = vsel %vm1283, %v1258, 0.0
        %v1300 = vsel %vm1284, %v1257, 0.0
        %v1301 = vsel %vm1285, %v1256, 0.0
        %v1302 = vsel %vm1286, %v1255, 0.0
        %v1303 = vsel %vm1287, %v1254, 0.0
        %v1304 = vsel %vm1288, %v1253, 0.0
        %v1305 = vsel %vm1289, %v1252, 0.0
        %v1306 = vsel %vm1290, %v1251, 0.0
        %v1307 = vlaneseq
        %v1308 = vshrl.u32 %v1307, 7
        %v1309 = vsub.s32 3, %v1308
        %v1310 = vrot.slane %v593, %v1309
        %v1311 = vmul.f32 %v1310, %v1291
        %v1312 = vmul.f32 %v1310, %v1292
        %v1313 = vmul.f32 %v1310, %v1293
        %v1314 = vmul.f32 %v1310, %v1294
        %v1315 = vmul.f32 %v1310, %v1295
        %v1316 = vmul.f32 %v1310, %v1296
        %v1317 = vmul.f32 %v1310, %v1297
        %v1318 = vmul.f32 %v1310, %v1298
        %v1319 = vmul.f32 %v1310, %v1299
        %v1320 = vmul.f32 %v1310, %v1300
        %v1321 = vmul.f32 %v1310, %v1301
        %v1322 = vmul.f32 %v1310, %v1302
        %v1323 = vmul.f32 %v1310, %v1303
        %v1324 = vmul.f32 %v1310, %v1304
        %v1325 = vmul.f32 %v1310, %v1305
        %v1326 = vmul.f32 %v1310, %v1306
        %v1327 = vadd.f32 %v1218, %v1311
        %v1328 = vadd.f32 %v1219, %v1312
        %v1329 = vadd.f32 %v1220, %v1313
        %v1330 = vadd.f32 %v1221, %v1314
        %v1331 = vadd.f32 %v1222, %v1315
        %v1332 = vadd.f32 %v1223, %v1316
        %v1333 = vadd.f32 %v1224, %v1317
        %v1334 = vadd.f32 %v1225, %v1318
        %v1335 = vadd.f32 %v1226, %v1319
        %v1336 = vadd.f32 %v1227, %v1320
        %v1337 = vadd.f32 %v1228, %v1321
        %v1338 = vadd.f32 %v1229, %v1322
        %v1339 = vadd.f32 %v1230, %v1323
        %v1340 = vadd.f32 %v1231, %v1324
        %v1341 = vadd.f32 %v1232, %v1325
        %v1342 = vadd.f32 %v1233, %v1326
        %vm1343 = vcmp.ge.s32.totalorder %v1008, 8
        %vm1344 = vcmp.ge.s32.totalorder %v1009, 8
        %vm1345 = vcmp.ge.s32.totalorder %v1010, 8
        %vm1346 = vcmp.ge.s32.totalorder %v1011, 8
        %vm1347 = vcmp.ge.s32.totalorder %v1012, 8
        %vm1348 = vcmp.ge.s32.totalorder %v1013, 8
        %vm1349 = vcmp.ge.s32.totalorder %v1014, 8
        %vm1350 = vcmp.ge.s32.totalorder %v1015, 8
        %v1351 = vsel %vm1343, 1, 0
        %v1352 = vsel %vm1344, 1, 0
        %v1353 = vsel %vm1345, 1, 0
        %v1354 = vsel %vm1346, 1, 0
        %v1355 = vsel %vm1347, 1, 0
        %v1356 = vsel %vm1348, 1, 0
        %v1357 = vsel %vm1349, 1, 0
        %v1358 = vsel %vm1350, 1, 0
        %vm1359 = vcmp.eq.s32.totalorder %v1351, 1
        %vm1360 = vcmp.eq.s32.totalorder %v1352, 1
        %vm1361 = vcmp.eq.s32.totalorder %v1353, 1
        %vm1362 = vcmp.eq.s32.totalorder %v1354, 1
        %vm1363 = vcmp.eq.s32.totalorder %v1355, 1
        %vm1364 = vcmp.eq.s32.totalorder %v1356, 1
        %vm1365 = vcmp.eq.s32.totalorder %v1357, 1
        %vm1366 = vcmp.eq.s32.totalorder %v1358, 1
        %v1367 = vsel %vm1359, %v1342, 0.0
        %v1368 = vsel %vm1360, %v1327, 0.0
        %v1369 = vsel %vm1361, %v1328, 0.0
        %v1370 = vsel %vm1362, %v1329, 0.0
        %v1371 = vsel %vm1363, %v1330, 0.0
        %v1372 = vsel %vm1364, %v1331, 0.0
        %v1373 = vsel %vm1365, %v1332, 0.0
        %v1374 = vsel %vm1366, %v1333, 0.0
        %v1375 = vsel %vm1359, %v1334, 0.0
        %v1376 = vsel %vm1360, %v1335, 0.0
        %v1377 = vsel %vm1361, %v1336, 0.0
        %v1378 = vsel %vm1362, %v1337, 0.0
        %v1379 = vsel %vm1363, %v1338, 0.0
        %v1380 = vsel %vm1364, %v1339, 0.0
        %v1381 = vsel %vm1365, %v1340, 0.0
        %v1382 = vsel %vm1366, %v1341, 0.0
        %v1383 = vlaneseq
        %v1384 = vshrl.u32 %v1383, 7
        %v1385 = vsub.s32 7, %v1384
        %v1386 = vrot.slane %v593, %v1385
        %v1387 = vmul.f32 %v1386, %v1367
        %v1388 = vmul.f32 %v1386, %v1368
        %v1389 = vmul.f32 %v1386, %v1369
        %v1390 = vmul.f32 %v1386, %v1370
        %v1391 = vmul.f32 %v1386, %v1371
        %v1392 = vmul.f32 %v1386, %v1372
        %v1393 = vmul.f32 %v1386, %v1373
        %v1394 = vmul.f32 %v1386, %v1374
        %v1395 = vmul.f32 %v1386, %v1375
        %v1396 = vmul.f32 %v1386, %v1376
        %v1397 = vmul.f32 %v1386, %v1377
        %v1398 = vmul.f32 %v1386, %v1378
        %v1399 = vmul.f32 %v1386, %v1379
        %v1400 = vmul.f32 %v1386, %v1380
        %v1401 = vmul.f32 %v1386, %v1381
        %v1402 = vmul.f32 %v1386, %v1382
        %v1403 = vadd.f32 %v1327, %v1387
        %v1404 = vadd.f32 %v1328, %v1388
        %v1405 = vadd.f32 %v1329, %v1389
        %v1406 = vadd.f32 %v1330, %v1390
        %v1407 = vadd.f32 %v1331, %v1391
        %v1408 = vadd.f32 %v1332, %v1392
        %v1409 = vadd.f32 %v1333, %v1393
        %v1410 = vadd.f32 %v1334, %v1394
        %v1411 = vadd.f32 %v1335, %v1395
        %v1412 = vadd.f32 %v1336, %v1396
        %v1413 = vadd.f32 %v1337, %v1397
        %v1414 = vadd.f32 %v1338, %v1398
        %v1415 = vadd.f32 %v1339, %v1399
        %v1416 = vadd.f32 %v1340, %v1400
        %v1417 = vadd.f32 %v1341, %v1401
        %v1418 = vadd.f32 %v1342, %v1402
        %vm1419 = vcmp.ge.s32.totalorder %v1008, 16
        %vm1420 = vcmp.ge.s32.totalorder %v1009, 16
        %vm1421 = vcmp.ge.s32.totalorder %v1010, 16
        %vm1422 = vcmp.ge.s32.totalorder %v1011, 16
        %vm1423 = vcmp.ge.s32.totalorder %v1012, 16
        %vm1424 = vcmp.ge.s32.totalorder %v1013, 16
        %vm1425 = vcmp.ge.s32.totalorder %v1014, 16
        %vm1426 = vcmp.ge.s32.totalorder %v1015, 16
        %v1427 = vsel %vm1419, 1, 0
        %v1428 = vsel %vm1420, 1, 0
        %v1429 = vsel %vm1421, 1, 0
        %v1430 = vsel %vm1422, 1, 0
        %v1431 = vsel %vm1423, 1, 0
        %v1432 = vsel %vm1424, 1, 0
        %v1433 = vsel %vm1425, 1, 0
        %v1434 = vsel %vm1426, 1, 0
        %vm1435 = vcmp.eq.s32.totalorder %v1427, 1
        %vm1436 = vcmp.eq.s32.totalorder %v1428, 1
        %vm1437 = vcmp.eq.s32.totalorder %v1429, 1
        %vm1438 = vcmp.eq.s32.totalorder %v1430, 1
        %vm1439 = vcmp.eq.s32.totalorder %v1431, 1
        %vm1440 = vcmp.eq.s32.totalorder %v1432, 1
        %vm1441 = vcmp.eq.s32.totalorder %v1433, 1
        %vm1442 = vcmp.eq.s32.totalorder %v1434, 1
        %v1443 = vsel %vm1435, %v1417, 0.0
        %v1444 = vsel %vm1436, %v1418, 0.0
        %v1445 = vsel %vm1437, %v1403, 0.0
        %v1446 = vsel %vm1438, %v1404, 0.0
        %v1447 = vsel %vm1439, %v1405, 0.0
        %v1448 = vsel %vm1440, %v1406, 0.0
        %v1449 = vsel %vm1441, %v1407, 0.0
        %v1450 = vsel %vm1442, %v1408, 0.0
        %v1451 = vsel %vm1435, %v1409, 0.0
        %v1452 = vsel %vm1436, %v1410, 0.0
        %v1453 = vsel %vm1437, %v1411, 0.0
        %v1454 = vsel %vm1438, %v1412, 0.0
        %v1455 = vsel %vm1439, %v1413, 0.0
        %v1456 = vsel %vm1440, %v1414, 0.0
        %v1457 = vsel %vm1441, %v1415, 0.0
        %v1458 = vsel %vm1442, %v1416, 0.0
        %v1459 = vlaneseq
        %v1460 = vshrl.u32 %v1459, 7
        %v1461 = vsub.s32 7, %v1460
        %v1462 = vrot.slane %v594, %v1461
        %v1463 = vmul.f32 %v1462, %v1443
        %v1464 = vmul.f32 %v1462, %v1444
        %v1465 = vmul.f32 %v1462, %v1445
        %v1466 = vmul.f32 %v1462, %v1446
        %v1467 = vmul.f32 %v1462, %v1447
        %v1468 = vmul.f32 %v1462, %v1448
        %v1469 = vmul.f32 %v1462, %v1449
        %v1470 = vmul.f32 %v1462, %v1450
        %v1471 = vmul.f32 %v1462, %v1451
        %v1472 = vmul.f32 %v1462, %v1452
        %v1473 = vmul.f32 %v1462, %v1453
        %v1474 = vmul.f32 %v1462, %v1454
        %v1475 = vmul.f32 %v1462, %v1455
        %v1476 = vmul.f32 %v1462, %v1456
        %v1477 = vmul.f32 %v1462, %v1457
        %v1478 = vmul.f32 %v1462, %v1458
        %v1479 = vadd.f32 %v1403, %v1463
        %v1480 = vadd.f32 %v1404, %v1464
        %v1481 = vadd.f32 %v1405, %v1465
        %v1482 = vadd.f32 %v1406, %v1466
        %v1483 = vadd.f32 %v1407, %v1467
        %v1484 = vadd.f32 %v1408, %v1468
        %v1485 = vadd.f32 %v1409, %v1469
        %v1486 = vadd.f32 %v1410, %v1470
        %v1487 = vadd.f32 %v1411, %v1471
        %v1488 = vadd.f32 %v1412, %v1472
        %v1489 = vadd.f32 %v1413, %v1473
        %v1490 = vadd.f32 %v1414, %v1474
        %v1491 = vadd.f32 %v1415, %v1475
        %v1492 = vadd.f32 %v1416, %v1476
        %v1493 = vadd.f32 %v1417, %v1477
        %v1494 = vadd.f32 %v1418, %v1478
        %vm1495 = vcmp.ge.s32.totalorder %v1008, 32
        %vm1496 = vcmp.ge.s32.totalorder %v1009, 32
        %vm1497 = vcmp.ge.s32.totalorder %v1010, 32
        %vm1498 = vcmp.ge.s32.totalorder %v1011, 32
        %vm1499 = vcmp.ge.s32.totalorder %v1012, 32
        %vm1500 = vcmp.ge.s32.totalorder %v1013, 32
        %vm1501 = vcmp.ge.s32.totalorder %v1014, 32
        %vm1502 = vcmp.ge.s32.totalorder %v1015, 32
        %v1503 = vsel %vm1495, 1, 0
        %v1504 = vsel %vm1496, 1, 0
        %v1505 = vsel %vm1497, 1, 0
        %v1506 = vsel %vm1498, 1, 0
        %v1507 = vsel %vm1499, 1, 0
        %v1508 = vsel %vm1500, 1, 0
        %v1509 = vsel %vm1501, 1, 0
        %v1510 = vsel %vm1502, 1, 0
        %vm1511 = vcmp.eq.s32.totalorder %v1503, 1
        %vm1512 = vcmp.eq.s32.totalorder %v1504, 1
        %vm1513 = vcmp.eq.s32.totalorder %v1505, 1
        %vm1514 = vcmp.eq.s32.totalorder %v1506, 1
        %vm1515 = vcmp.eq.s32.totalorder %v1507, 1
        %vm1516 = vcmp.eq.s32.totalorder %v1508, 1
        %vm1517 = vcmp.eq.s32.totalorder %v1509, 1
        %vm1518 = vcmp.eq.s32.totalorder %v1510, 1
        %v1519 = vsel %vm1511, %v1491, 0.0
        %v1520 = vsel %vm1512, %v1492, 0.0
        %v1521 = vsel %vm1513, %v1493, 0.0
        %v1522 = vsel %vm1514, %v1494, 0.0
        %v1523 = vsel %vm1515, %v1479, 0.0
        %v1524 = vsel %vm1516, %v1480, 0.0
        %v1525 = vsel %vm1517, %v1481, 0.0
        %v1526 = vsel %vm1518, %v1482, 0.0
        %v1527 = vsel %vm1511, %v1483, 0.0
        %v1528 = vsel %vm1512, %v1484, 0.0
        %v1529 = vsel %vm1513, %v1485, 0.0
        %v1530 = vsel %vm1514, %v1486, 0.0
        %v1531 = vsel %vm1515, %v1487, 0.0
        %v1532 = vsel %vm1516, %v1488, 0.0
        %v1533 = vsel %vm1517, %v1489, 0.0
        %v1534 = vsel %vm1518, %v1490, 0.0
        %v1535 = vlaneseq
        %v1536 = vshrl.u32 %v1535, 7
        %v1537 = vsub.s32 7, %v1536
        %v1538 = vrot.slane %v596, %v1537
        %v1539 = vmul.f32 %v1538, %v1519
        %v1540 = vmul.f32 %v1538, %v1520
        %v1541 = vmul.f32 %v1538, %v1521
        %v1542 = vmul.f32 %v1538, %v1522
        %v1543 = vmul.f32 %v1538, %v1523
        %v1544 = vmul.f32 %v1538, %v1524
        %v1545 = vmul.f32 %v1538, %v1525
        %v1546 = vmul.f32 %v1538, %v1526
        %v1547 = vmul.f32 %v1538, %v1527
        %v1548 = vmul.f32 %v1538, %v1528
        %v1549 = vmul.f32 %v1538, %v1529
        %v1550 = vmul.f32 %v1538, %v1530
        %v1551 = vmul.f32 %v1538, %v1531
        %v1552 = vmul.f32 %v1538, %v1532
        %v1553 = vmul.f32 %v1538, %v1533
        %v1554 = vmul.f32 %v1538, %v1534
        %v1555 = vadd.f32 %v1479, %v1539
        %v1556 = vadd.f32 %v1480, %v1540
        %v1557 = vadd.f32 %v1481, %v1541
        %v1558 = vadd.f32 %v1482, %v1542
        %v1559 = vadd.f32 %v1483, %v1543
        %v1560 = vadd.f32 %v1484, %v1544
        %v1561 = vadd.f32 %v1485, %v1545
        %v1562 = vadd.f32 %v1486, %v1546
        %v1563 = vadd.f32 %v1487, %v1547
        %v1564 = vadd.f32 %v1488, %v1548
        %v1565 = vadd.f32 %v1489, %v1549
        %v1566 = vadd.f32 %v1490, %v1550
        %v1567 = vadd.f32 %v1491, %v1551
        %v1568 = vadd.f32 %v1492, %v1552
        %v1569 = vadd.f32 %v1493, %v1553
        %v1570 = vadd.f32 %v1494, %v1554
        %v1571 = vld [vmem:[#allocation2] sm:$0x3]
        %v1574 = vunpack.c.l.s4 1966171168
        %v1575 = vunpack.c.0.s8 %v1574
        %v1576 = vlaneseq
        %v1577 = vshrl.u32 %v1576, 7
        %v1578 = vsub.s32 %v1575, %v1577
        %v1579 = vrot.slane %v1571, %v1578
        %v1580 = vcombine.high %v1579, %v1579
        %v1582 = vunpack.c.l.s4 1966171168
        %v1583 = vunpack.c.0.s8 %v1582
        %v1584 = vlaneseq
        %v1585 = vshrl.u32 %v1584, 7
        %v1586 = vsub.s32 %v1583, %v1585
        %v1587 = vrot.slane %v1579, %v1586
        %v1589 = vunpack.c.l.s4 1966171168
        %v1590 = vunpack.c.0.s8 %v1589
        %v1591 = vlaneseq
        %v1592 = vshrl.u32 %v1591, 7
        %v1593 = vsub.s32 %v1590, %v1592
        %v1594 = vrot.slane %v1580, %v1593
        %v1595 = vlaneseq
        %v1596 = vshrl.u32 %v1595, 7
        %v1597 = vsub.s32 0, %v1596
        %v1598 = vrot.slane %v1587, %v1597
        %v1599 = vlaneseq
        %v1600 = vshrl.u32 %v1599, 7
        %v1601 = vsub.s32 0, %v1600
        %v1602 = vrot.slane %v1594, %v1601
        %v1605 = vmul.f32 %v593, %v1598
        %v1606 = vmul.f32 %v594, %v1598
        %v1607 = vmul.f32 %v595, %v1598
        %v1608 = vmul.f32 %v596, %v1598
        %v1609 = vmul.f32 %v597, %v1598
        %v1610 = vmul.f32 %v598, %v1598
        %v1611 = vmul.f32 %v599, %v1598
        %v1612 = vmul.f32 %v600, %v1598
        %v1613 = vmul.f32 %v593, %v1602
        %v1614 = vmul.f32 %v594, %v1602
        %v1615 = vmul.f32 %v595, %v1602
        %v1616 = vmul.f32 %v596, %v1602
        %v1617 = vmul.f32 %v597, %v1602
        %v1618 = vmul.f32 %v598, %v1602
        %v1619 = vmul.f32 %v599, %v1602
        %v1620 = vmul.f32 %v600, %v1602
        %v1621 = vadd.f32 %v1555, %v1605
        %v1622 = vadd.f32 %v1556, %v1606
        %v1623 = vadd.f32 %v1557, %v1607
        %v1624 = vadd.f32 %v1558, %v1608
        %v1625 = vadd.f32 %v1559, %v1609
        %v1626 = vadd.f32 %v1560, %v1610
        %v1627 = vadd.f32 %v1561, %v1611
        %v1628 = vadd.f32 %v1562, %v1612
        %v1629 = vadd.f32 %v1563, %v1613
        %v1630 = vadd.f32 %v1564, %v1614
        %v1631 = vadd.f32 %v1565, %v1615
        %v1632 = vadd.f32 %v1566, %v1616
        %v1633 = vadd.f32 %v1567, %v1617
        %v1634 = vadd.f32 %v1568, %v1618
        %v1635 = vadd.f32 %v1569, %v1619
        %v1636 = vadd.f32 %v1570, %v1620
        %v1639 = vrot.slane %v1636, 7
        %1642 = vst [vmem:[#allocation2 - $0x7] sm:$0x80] %v1628
        %1643 = vst [vmem:[#allocation2 + $0x1] sm:$0x1] %v1639
        %v1644 = vpack.c.bf16 %v1622, %v1621
        %v1645 = vpack.c.bf16 %v1624, %v1623
        %v1646 = vpack.c.bf16 %v1626, %v1625
        %v1647 = vpack.c.bf16 %v1628, %v1627
        %v1648 = vpack.c.bf16 %v1630, %v1629
        %v1649 = vpack.c.bf16 %v1632, %v1631
        %v1650 = vpack.c.bf16 %v1634, %v1633
        %v1651 = vpack.c.bf16 %v1636, %v1635
        %v1652 = vld [vmem:[#allocation9] sm:$0xf]
        %v1653 = vld [vmem:[#allocation9 + $0x4] sm:$0xf]
        %v1654 = vld [vmem:[#allocation9 + $0x8] sm:$0xf]
        %v1655 = vld [vmem:[#allocation9 + $0xc] sm:$0xf]
        %v1656 = vld [vmem:[#allocation9 + $0x10] sm:$0xf]
        %v1657 = vld [vmem:[#allocation9 + $0x14] sm:$0xf]
        %v1658 = vld [vmem:[#allocation9 + $0x18] sm:$0xf]
        %v1659 = vld [vmem:[#allocation9 + $0x1c] sm:$0xf]
        %v1660 = vld [vmem:[#allocation9 + $0x20] sm:$0xf]
        %v1661 = vld [vmem:[#allocation9 + $0x24] sm:$0xf]
        %v1662 = vld [vmem:[#allocation9 + $0x28] sm:$0xf]
        %v1663 = vld [vmem:[#allocation9 + $0x2c] sm:$0xf]
        %v1664 = vld [vmem:[#allocation9 + $0x30] sm:$0xf]
        %v1665 = vld [vmem:[#allocation9 + $0x34] sm:$0xf]
        %v1666 = vld [vmem:[#allocation9 + $0x38] sm:$0xf]
        %v1667 = vld [vmem:[#allocation9 + $0x3c] sm:$0xf]
        %v1669 = vlaneseq
        %v1670 = vshrl.u32 %v1669, 7
        %v1671 = vsub.s32 0, %v1670
        %v1672 = vrot.slane %v590, %v1671
        %v1674 = vmul.f32 %v822, %v1672
        %v1675 = vmul.f32 %v823, %v1672
        %v1676 = vmul.f32 %v824, %v1672
        %v1677 = vmul.f32 %v825, %v1672
        %v1678 = vmul.f32 %v826, %v1672
        %v1679 = vmul.f32 %v827, %v1672
        %v1680 = vmul.f32 %v828, %v1672
        %v1681 = vmul.f32 %v829, %v1672
        %v1682 = vmul.f32 %v830, %v1672
        %v1683 = vmul.f32 %v831, %v1672
        %v1684 = vmul.f32 %v832, %v1672
        %v1685 = vmul.f32 %v833, %v1672
        %v1686 = vmul.f32 %v834, %v1672
        %v1687 = vmul.f32 %v835, %v1672
        %v1688 = vmul.f32 %v836, %v1672
        %v1689 = vmul.f32 %v837, %v1672
        %v1706 = vunpack.c.l.b16 %v1652
        %v1707 = vunpack.c.l.b16 %v1653
        %v1708 = vunpack.c.l.b16 %v1654
        %v1709 = vunpack.c.l.b16 %v1655
        %v1710 = vunpack.c.l.b16 %v1656
        %v1711 = vunpack.c.l.b16 %v1657
        %v1712 = vunpack.c.l.b16 %v1658
        %v1713 = vunpack.c.l.b16 %v1659
        %v1714 = vunpack.c.l.b16 %v1660
        %v1715 = vunpack.c.l.b16 %v1661
        %v1716 = vunpack.c.l.b16 %v1662
        %v1717 = vunpack.c.l.b16 %v1663
        %v1718 = vunpack.c.l.b16 %v1664
        %v1719 = vunpack.c.l.b16 %v1665
        %v1720 = vunpack.c.l.b16 %v1666
        %v1721 = vunpack.c.l.b16 %v1667
        %v1722 = vpack.c.b16 %v1707, %v1706
        %v1723 = vpack.c.b16 %v1709, %v1708
        %v1724 = vpack.c.b16 %v1711, %v1710
        %v1725 = vpack.c.b16 %v1713, %v1712
        %v1726 = vpack.c.b16 %v1715, %v1714
        %v1727 = vpack.c.b16 %v1717, %v1716
        %v1728 = vpack.c.b16 %v1719, %v1718
        %v1729 = vpack.c.b16 %v1721, %v1720
        %1738 = vmatprep.subr.bf16.mxu0 0
        %1739 = vmatpush1.bf16.msra.mxu0 %v1729
        %1740 = vmatprep.subr.bf16.mxu0 0
        %1741 = vmatpush1.bf16.msra.mxu0 %v1728
        %1742 = vmatprep.subr.bf16.mxu0 0
        %1743 = vmatpush1.bf16.msra.mxu0 %v1727
        %1744 = vmatprep.subr.bf16.mxu0 0
        %1745 = vmatpush1.bf16.msra.mxu0 %v1726
        %1746 = vmatprep.subr.bf16.mxu0 0
        %1747 = vmatpush1.bf16.msra.mxu0 %v1725
        %1748 = vmatprep.subr.bf16.mxu0 0
        %1749 = vmatpush1.bf16.msra.mxu0 %v1724
        %1750 = vmatprep.subr.bf16.mxu0 0
        %1751 = vmatpush1.bf16.msra.mxu0 %v1723
        %1752 = vmatprep.subr.bf16.mxu0 0
        %1753 = vmatpush1.bf16.msra.mxu0 %v1722
        %1754 = vmatprep.subr.bf16.mxu0 0
        %1755 = vmatpush2.bf16.msra.mxu0 0
        %1756 = vmatprep.subr.bf16.mxu0 0
        %1757 = vmatpush2.bf16.msra.mxu0 0
        %1758 = vmatprep.subr.bf16.mxu0 0
        %1759 = vmatpush2.bf16.msra.mxu0 0
        %1760 = vmatprep.subr.bf16.mxu0 0
        %1761 = vmatpush2.bf16.msra.mxu0 0
        %1762 = vmatprep.subr.bf16.mxu0 0
        %1763 = vmatpush2.bf16.msra.mxu0 0
        %1764 = vmatprep.subr.bf16.mxu0 0
        %1765 = vmatpush2.bf16.msra.mxu0 0
        %1766 = vmatprep.subr.bf16.mxu0 0
        %1767 = vmatpush2.bf16.msra.mxu0 0
        %1768 = vmatprep.subr.bf16.mxu0 0
        %1769 = vmatpush2.bf16.msra.mxu0 0
        %1770 = vmatprep.mubr.bf16.mxu0 0
        %1771 = vmatmul.mubr.bf16.gmra.mxu0 %v1644
        %v1772 = vpop.f32.mrf.mxu0
        %v1773 = vadd.f32 %v1674, %v1772
        %v1774 = vpop.f32.mrf.mxu0
        %v1775 = vpop.f32.mrf.mxu0
        %v1776 = vadd.f32 %v1675, %v1775
        %v1777 = vpop.f32.mrf.mxu0
        %1778 = vmatprep.mubr.bf16.mxu0 0
        %1779 = vmatmul.mubr.bf16.gmra.mxu0 %v1645
        %v1780 = vpop.f32.mrf.mxu0
        %v1781 = vadd.f32 %v1676, %v1780
        %v1782 = vpop.f32.mrf.mxu0
        %v1783 = vpop.f32.mrf.mxu0
        %v1784 = vadd.f32 %v1677, %v1783
        %v1785 = vpop.f32.mrf.mxu0
        %1786 = vmatprep.mubr.bf16.mxu0 0
        %1787 = vmatmul.mubr.bf16.gmra.mxu0 %v1646
        %v1788 = vpop.f32.mrf.mxu0
        %v1789 = vadd.f32 %v1678, %v1788
        %v1790 = vpop.f32.mrf.mxu0
        %v1791 = vpop.f32.mrf.mxu0
        %v1792 = vadd.f32 %v1679, %v1791
        %v1793 = vpop.f32.mrf.mxu0
        %1794 = vmatprep.mubr.bf16.mxu0 0
        %1795 = vmatmul.mubr.bf16.gmra.mxu0 %v1647
        %v1796 = vpop.f32.mrf.mxu0
        %v1797 = vadd.f32 %v1680, %v1796
        %v1798 = vpop.f32.mrf.mxu0
        %v1799 = vpop.f32.mrf.mxu0
        %v1800 = vadd.f32 %v1681, %v1799
        %v1801 = vpop.f32.mrf.mxu0
        %1802 = vmatprep.mubr.bf16.mxu0 0
        %1803 = vmatmul.mubr.bf16.gmra.mxu0 %v1648
        %v1804 = vpop.f32.mrf.mxu0
        %v1805 = vadd.f32 %v1682, %v1804
        %v1806 = vpop.f32.mrf.mxu0
        %v1807 = vpop.f32.mrf.mxu0
        %v1808 = vadd.f32 %v1683, %v1807
        %v1809 = vpop.f32.mrf.mxu0
        %1810 = vmatprep.mubr.bf16.mxu0 0
        %1811 = vmatmul.mubr.bf16.gmra.mxu0 %v1649
        %v1812 = vpop.f32.mrf.mxu0
        %v1813 = vadd.f32 %v1684, %v1812
        %v1814 = vpop.f32.mrf.mxu0
        %v1815 = vpop.f32.mrf.mxu0
        %v1816 = vadd.f32 %v1685, %v1815
        %v1817 = vpop.f32.mrf.mxu0
        %1818 = vmatprep.mubr.bf16.mxu0 0
        %1819 = vmatmul.mubr.bf16.gmra.mxu0 %v1650
        %v1820 = vpop.f32.mrf.mxu0
        %v1821 = vadd.f32 %v1686, %v1820
        %v1822 = vpop.f32.mrf.mxu0
        %v1823 = vpop.f32.mrf.mxu0
        %v1824 = vadd.f32 %v1687, %v1823
        %v1825 = vpop.f32.mrf.mxu0
        %1826 = vmatprep.mubr.bf16.mxu0 0
        %1827 = vmatmul.mubr.bf16.gmra.mxu0 %v1651
        %v1828 = vpop.f32.mrf.mxu0
        %v1829 = vadd.f32 %v1688, %v1828
        %v1830 = vpop.f32.mrf.mxu0
        %v1831 = vpop.f32.mrf.mxu0
        %v1832 = vadd.f32 %v1689, %v1831
        %v1833 = vpop.f32.mrf.mxu0
        %1834 = vdwg.mxu0
        %v1835 = vadd.f32 %v601, %v1773
        %v1836 = vadd.f32 %v602, %v1776
        %v1837 = vadd.f32 %v603, %v1781
        %v1838 = vadd.f32 %v604, %v1784
        %v1839 = vadd.f32 %v605, %v1789
        %v1840 = vadd.f32 %v606, %v1792
        %v1841 = vadd.f32 %v607, %v1797
        %v1842 = vadd.f32 %v608, %v1800
        %v1843 = vadd.f32 %v609, %v1805
        %v1844 = vadd.f32 %v610, %v1808
        %v1845 = vadd.f32 %v611, %v1813
        %v1846 = vadd.f32 %v612, %v1816
        %v1847 = vadd.f32 %v613, %v1821
        %v1848 = vadd.f32 %v614, %v1824
        %v1849 = vadd.f32 %v615, %v1829
        %v1850 = vadd.f32 %v616, %v1832
        %1851 = vadd.xlane.f32.xlu0 %v1835
        %v1852 = vpop.xlane.xlu0 %1851
        %1853 = vadd.xlane.f32.xlu0 %v1836
        %v1854 = vpop.xlane.xlu0 %1853
        %1855 = vadd.xlane.f32.xlu0 %v1837
        %v1856 = vpop.xlane.xlu0 %1855
        %1857 = vadd.xlane.f32.xlu0 %v1838
        %v1858 = vpop.xlane.xlu0 %1857
        %1859 = vadd.xlane.f32.xlu0 %v1839
        %v1860 = vpop.xlane.xlu0 %1859
        %1861 = vadd.xlane.f32.xlu0 %v1840
        %v1862 = vpop.xlane.xlu0 %1861
        %1863 = vadd.xlane.f32.xlu0 %v1841
        %v1864 = vpop.xlane.xlu0 %1863
        %1865 = vadd.xlane.f32.xlu0 %v1842
        %v1866 = vpop.xlane.xlu0 %1865
        %1867 = vadd.xlane.f32.xlu0 %v1843
        %v1868 = vpop.xlane.xlu0 %1867
        %1869 = vadd.xlane.f32.xlu0 %v1844
        %v1870 = vpop.xlane.xlu0 %1869
        %1871 = vadd.xlane.f32.xlu0 %v1845
        %v1872 = vpop.xlane.xlu0 %1871
        %1873 = vadd.xlane.f32.xlu0 %v1846
        %v1874 = vpop.xlane.xlu0 %1873
        %1875 = vadd.xlane.f32.xlu0 %v1847
        %v1876 = vpop.xlane.xlu0 %1875
        %1877 = vadd.xlane.f32.xlu0 %v1848
        %v1878 = vpop.xlane.xlu0 %1877
        %1879 = vadd.xlane.f32.xlu0 %v1849
        %v1880 = vpop.xlane.xlu0 %1879
        %1881 = vadd.xlane.f32.xlu0 %v1850
        %v1882 = vpop.xlane.xlu0 %1881
        %v1883 = vmul.f32 %v1852, %v649
        %v1884 = vmul.f32 %v1854, %v649
        %v1885 = vmul.f32 %v1856, %v649
        %v1886 = vmul.f32 %v1858, %v649
        %v1887 = vmul.f32 %v1860, %v649
        %v1888 = vmul.f32 %v1862, %v649
        %v1889 = vmul.f32 %v1864, %v649
        %v1890 = vmul.f32 %v1866, %v649
        %v1891 = vmul.f32 %v1868, %v649
        %v1892 = vmul.f32 %v1870, %v649
        %v1893 = vmul.f32 %v1872, %v649
        %v1894 = vmul.f32 %v1874, %v649
        %v1895 = vmul.f32 %v1876, %v649
        %v1896 = vmul.f32 %v1878, %v649
        %v1897 = vmul.f32 %v1880, %v649
        %v1898 = vmul.f32 %v1882, %v649
        %v1899 = vsub.f32 %v1835, %v1883
        %v1900 = vsub.f32 %v1836, %v1884
        %v1901 = vsub.f32 %v1837, %v1885
        %v1902 = vsub.f32 %v1838, %v1886
        %v1903 = vsub.f32 %v1839, %v1887
        %v1904 = vsub.f32 %v1840, %v1888
        %v1905 = vsub.f32 %v1841, %v1889
        %v1906 = vsub.f32 %v1842, %v1890
        %v1907 = vsub.f32 %v1843, %v1891
        %v1908 = vsub.f32 %v1844, %v1892
        %v1909 = vsub.f32 %v1845, %v1893
        %v1910 = vsub.f32 %v1846, %v1894
        %v1911 = vsub.f32 %v1847, %v1895
        %v1912 = vsub.f32 %v1848, %v1896
        %v1913 = vsub.f32 %v1849, %v1897
        %v1914 = vsub.f32 %v1850, %v1898
        %v1915 = vmul.f32 %v1899, %v1899
        %v1916 = vmul.f32 %v1900, %v1900
        %v1917 = vmul.f32 %v1901, %v1901
        %v1918 = vmul.f32 %v1902, %v1902
        %v1919 = vmul.f32 %v1903, %v1903
        %v1920 = vmul.f32 %v1904, %v1904
        %v1921 = vmul.f32 %v1905, %v1905
        %v1922 = vmul.f32 %v1906, %v1906
        %v1923 = vmul.f32 %v1907, %v1907
        %v1924 = vmul.f32 %v1908, %v1908
        %v1925 = vmul.f32 %v1909, %v1909
        %v1926 = vmul.f32 %v1910, %v1910
        %v1927 = vmul.f32 %v1911, %v1911
        %v1928 = vmul.f32 %v1912, %v1912
        %v1929 = vmul.f32 %v1913, %v1913
        %v1930 = vmul.f32 %v1914, %v1914
        %1931 = vadd.xlane.f32.xlu0 %v1915
        %v1932 = vpop.xlane.xlu0 %1931
        %1933 = vadd.xlane.f32.xlu0 %v1916
        %v1934 = vpop.xlane.xlu0 %1933
        %1935 = vadd.xlane.f32.xlu0 %v1917
        %v1936 = vpop.xlane.xlu0 %1935
        %1937 = vadd.xlane.f32.xlu0 %v1918
        %v1938 = vpop.xlane.xlu0 %1937
        %1939 = vadd.xlane.f32.xlu0 %v1919
        %v1940 = vpop.xlane.xlu0 %1939
        %1941 = vadd.xlane.f32.xlu0 %v1920
        %v1942 = vpop.xlane.xlu0 %1941
        %1943 = vadd.xlane.f32.xlu0 %v1921
        %v1944 = vpop.xlane.xlu0 %1943
        %1945 = vadd.xlane.f32.xlu0 %v1922
        %v1946 = vpop.xlane.xlu0 %1945
        %1947 = vadd.xlane.f32.xlu0 %v1923
        %v1948 = vpop.xlane.xlu0 %1947
        %1949 = vadd.xlane.f32.xlu0 %v1924
        %v1950 = vpop.xlane.xlu0 %1949
        %1951 = vadd.xlane.f32.xlu0 %v1925
        %v1952 = vpop.xlane.xlu0 %1951
        %1953 = vadd.xlane.f32.xlu0 %v1926
        %v1954 = vpop.xlane.xlu0 %1953
        %1955 = vadd.xlane.f32.xlu0 %v1927
        %v1956 = vpop.xlane.xlu0 %1955
        %1957 = vadd.xlane.f32.xlu0 %v1928
        %v1958 = vpop.xlane.xlu0 %1957
        %1959 = vadd.xlane.f32.xlu0 %v1929
        %v1960 = vpop.xlane.xlu0 %1959
        %1961 = vadd.xlane.f32.xlu0 %v1930
        %v1962 = vpop.xlane.xlu0 %1961
        %v1963 = vmul.f32 %v1932, %v649
        %v1964 = vmul.f32 %v1934, %v649
        %v1965 = vmul.f32 %v1936, %v649
        %v1966 = vmul.f32 %v1938, %v649
        %v1967 = vmul.f32 %v1940, %v649
        %v1968 = vmul.f32 %v1942, %v649
        %v1969 = vmul.f32 %v1944, %v649
        %v1970 = vmul.f32 %v1946, %v649
        %v1971 = vmul.f32 %v1948, %v649
        %v1972 = vmul.f32 %v1950, %v649
        %v1973 = vmul.f32 %v1952, %v649
        %v1974 = vmul.f32 %v1954, %v649
        %v1975 = vmul.f32 %v1956, %v649
        %v1976 = vmul.f32 %v1958, %v649
        %v1977 = vmul.f32 %v1960, %v649
        %v1978 = vmul.f32 %v1962, %v649
        %v1979 = vadd.f32 %v1963, 1e-05
        %v1980 = vadd.f32 %v1964, 1e-05
        %v1981 = vadd.f32 %v1965, 1e-05
        %v1982 = vadd.f32 %v1966, 1e-05
        %v1983 = vadd.f32 %v1967, 1e-05
        %v1984 = vadd.f32 %v1968, 1e-05
        %v1985 = vadd.f32 %v1969, 1e-05
        %v1986 = vadd.f32 %v1970, 1e-05
        %v1987 = vadd.f32 %v1971, 1e-05
        %v1988 = vadd.f32 %v1972, 1e-05
        %v1989 = vadd.f32 %v1973, 1e-05
        %v1990 = vadd.f32 %v1974, 1e-05
        %v1991 = vadd.f32 %v1975, 1e-05
        %v1992 = vadd.f32 %v1976, 1e-05
        %v1993 = vadd.f32 %v1977, 1e-05
        %v1994 = vadd.f32 %v1978, 1e-05
        %v1995 = vrsqrt.pop %v1979
        %v1996 = vrsqrt.pop %v1980
        %v1997 = vrsqrt.pop %v1981
        %v1998 = vrsqrt.pop %v1982
        %v1999 = vrsqrt.pop %v1983
        %v2000 = vrsqrt.pop %v1984
        %v2001 = vrsqrt.pop %v1985
        %v2002 = vrsqrt.pop %v1986
        %v2003 = vrsqrt.pop %v1987
        %v2004 = vrsqrt.pop %v1988
        %v2005 = vrsqrt.pop %v1989
        %v2006 = vrsqrt.pop %v1990
        %v2007 = vrsqrt.pop %v1991
        %v2008 = vrsqrt.pop %v1992
        %v2009 = vrsqrt.pop %v1993
        %v2010 = vrsqrt.pop %v1994
        %v2011 = vmul.f32 %v1899, %v1995
        %v2012 = vmul.f32 %v1900, %v1996
        %v2013 = vmul.f32 %v1901, %v1997
        %v2014 = vmul.f32 %v1902, %v1998
        %v2015 = vmul.f32 %v1903, %v1999
        %v2016 = vmul.f32 %v1904, %v2000
        %v2017 = vmul.f32 %v1905, %v2001
        %v2018 = vmul.f32 %v1906, %v2002
        %v2019 = vmul.f32 %v1907, %v2003
        %v2020 = vmul.f32 %v1908, %v2004
        %v2021 = vmul.f32 %v1909, %v2005
        %v2022 = vmul.f32 %v1910, %v2006
        %v2023 = vmul.f32 %v1911, %v2007
        %v2024 = vmul.f32 %v1912, %v2008
        %v2025 = vmul.f32 %v1913, %v2009
        %v2026 = vmul.f32 %v1914, %v2010
        %v2028 = vlaneseq
        %v2029 = vshrl.u32 %v2028, 7
        %v2030 = vsub.s32 0, %v2029
        %v2031 = vrot.slane %v588, %v2030
        %v2033 = vmul.f32 %v2011, %v2031
        %v2034 = vmul.f32 %v2012, %v2031
        %v2035 = vmul.f32 %v2013, %v2031
        %v2036 = vmul.f32 %v2014, %v2031
        %v2037 = vmul.f32 %v2015, %v2031
        %v2038 = vmul.f32 %v2016, %v2031
        %v2039 = vmul.f32 %v2017, %v2031
        %v2040 = vmul.f32 %v2018, %v2031
        %v2041 = vmul.f32 %v2019, %v2031
        %v2042 = vmul.f32 %v2020, %v2031
        %v2043 = vmul.f32 %v2021, %v2031
        %v2044 = vmul.f32 %v2022, %v2031
        %v2045 = vmul.f32 %v2023, %v2031
        %v2046 = vmul.f32 %v2024, %v2031
        %v2047 = vmul.f32 %v2025, %v2031
        %v2048 = vmul.f32 %v2026, %v2031
        %v2050 = vlaneseq
        %v2051 = vshrl.u32 %v2050, 7
        %v2052 = vsub.s32 0, %v2051
        %v2053 = vrot.slane %v589, %v2052
        %v2055 = vadd.f32 %v2033, %v2053
        %v2056 = vadd.f32 %v2034, %v2053
        %v2057 = vadd.f32 %v2035, %v2053
        %v2058 = vadd.f32 %v2036, %v2053
        %v2059 = vadd.f32 %v2037, %v2053
        %v2060 = vadd.f32 %v2038, %v2053
        %v2061 = vadd.f32 %v2039, %v2053
        %v2062 = vadd.f32 %v2040, %v2053
        %v2063 = vadd.f32 %v2041, %v2053
        %v2064 = vadd.f32 %v2042, %v2053
        %v2065 = vadd.f32 %v2043, %v2053
        %v2066 = vadd.f32 %v2044, %v2053
        %v2067 = vadd.f32 %v2045, %v2053
        %v2068 = vadd.f32 %v2046, %v2053
        %v2069 = vadd.f32 %v2047, %v2053
        %v2070 = vadd.f32 %v2048, %v2053
        %v2071 = vpack.c.bf16 %v2056, %v2055
        %v2072 = vpack.c.bf16 %v2058, %v2057
        %v2073 = vpack.c.bf16 %v2060, %v2059
        %v2074 = vpack.c.bf16 %v2062, %v2061
        %v2075 = vpack.c.bf16 %v2064, %v2063
        %v2076 = vpack.c.bf16 %v2066, %v2065
        %v2077 = vpack.c.bf16 %v2068, %v2067
        %v2078 = vpack.c.bf16 %v2070, %v2069
        %v2079 = vld [vmem:[#allocation11] sm:$0xf]
        %v2080 = vld [vmem:[#allocation11 + $0x4] sm:$0xf]
        %v2081 = vld [vmem:[#allocation11 + $0x8] sm:$0xf]
        %v2082 = vld [vmem:[#allocation11 + $0xc] sm:$0xf]
        %v2083 = vld [vmem:[#allocation11 + $0x10] sm:$0xf]
        %v2084 = vld [vmem:[#allocation11 + $0x14] sm:$0xf]
        %v2085 = vld [vmem:[#allocation11 + $0x18] sm:$0xf]
        %v2086 = vld [vmem:[#allocation11 + $0x1c] sm:$0xf]
        %v2087 = vld [vmem:[#allocation11 + $0x20] sm:$0xf]
        %v2088 = vld [vmem:[#allocation11 + $0x24] sm:$0xf]
        %v2089 = vld [vmem:[#allocation11 + $0x28] sm:$0xf]
        %v2090 = vld [vmem:[#allocation11 + $0x2c] sm:$0xf]
        %v2091 = vld [vmem:[#allocation11 + $0x30] sm:$0xf]
        %v2092 = vld [vmem:[#allocation11 + $0x34] sm:$0xf]
        %v2093 = vld [vmem:[#allocation11 + $0x38] sm:$0xf]
        %v2094 = vld [vmem:[#allocation11 + $0x3c] sm:$0xf]
        %v2096 = vlaneseq
        %v2097 = vshrl.u32 %v2096, 7
        %v2098 = vsub.s32 0, %v2097
        %v2099 = vrot.slane %v591, %v2098
        %v2117 = vunpack.c.l.b16 %v2079
        %v2118 = vunpack.c.l.b16 %v2080
        %v2119 = vunpack.c.l.b16 %v2081
        %v2120 = vunpack.c.l.b16 %v2082
        %v2121 = vunpack.c.l.b16 %v2083
        %v2122 = vunpack.c.l.b16 %v2084
        %v2123 = vunpack.c.l.b16 %v2085
        %v2124 = vunpack.c.l.b16 %v2086
        %v2125 = vunpack.c.l.b16 %v2087
        %v2126 = vunpack.c.l.b16 %v2088
        %v2127 = vunpack.c.l.b16 %v2089
        %v2128 = vunpack.c.l.b16 %v2090
        %v2129 = vunpack.c.l.b16 %v2091
        %v2130 = vunpack.c.l.b16 %v2092
        %v2131 = vunpack.c.l.b16 %v2093
        %v2132 = vunpack.c.l.b16 %v2094
        %v2133 = vpack.c.b16 %v2118, %v2117
        %v2134 = vpack.c.b16 %v2120, %v2119
        %v2135 = vpack.c.b16 %v2122, %v2121
        %v2136 = vpack.c.b16 %v2124, %v2123
        %v2137 = vpack.c.b16 %v2126, %v2125
        %v2138 = vpack.c.b16 %v2128, %v2127
        %v2139 = vpack.c.b16 %v2130, %v2129
        %v2140 = vpack.c.b16 %v2132, %v2131
        %2149 = vmatprep.subr.bf16.mxu0 0
        %2150 = vmatpush1.bf16.msra.mxu0 %v2140
        %2151 = vmatprep.subr.bf16.mxu0 0
        %2152 = vmatpush1.bf16.msra.mxu0 %v2139
        %2153 = vmatprep.subr.bf16.mxu0 0
        %2154 = vmatpush1.bf16.msra.mxu0 %v2138
        %2155 = vmatprep.subr.bf16.mxu0 0
        %2156 = vmatpush1.bf16.msra.mxu0 %v2137
        %2157 = vmatprep.subr.bf16.mxu0 0
        %2158 = vmatpush1.bf16.msra.mxu0 %v2136
        %2159 = vmatprep.subr.bf16.mxu0 0
        %2160 = vmatpush1.bf16.msra.mxu0 %v2135
        %2161 = vmatprep.subr.bf16.mxu0 0
        %2162 = vmatpush1.bf16.msra.mxu0 %v2134
        %2163 = vmatprep.subr.bf16.mxu0 0
        %2164 = vmatpush1.bf16.msra.mxu0 %v2133
        %2165 = vmatprep.subr.bf16.mxu0 0
        %2166 = vmatpush2.bf16.msra.mxu0 0
        %2167 = vmatprep.subr.bf16.mxu0 0
        %2168 = vmatpush2.bf16.msra.mxu0 0
        %2169 = vmatprep.subr.bf16.mxu0 0
        %2170 = vmatpush2.bf16.msra.mxu0 0
        %2171 = vmatprep.subr.bf16.mxu0 0
        %2172 = vmatpush2.bf16.msra.mxu0 0
        %2173 = vmatprep.subr.bf16.mxu0 0
        %2174 = vmatpush2.bf16.msra.mxu0 0
        %2175 = vmatprep.subr.bf16.mxu0 0
        %2176 = vmatpush2.bf16.msra.mxu0 0
        %2177 = vmatprep.subr.bf16.mxu0 0
        %2178 = vmatpush2.bf16.msra.mxu0 0
        %2179 = vmatprep.subr.bf16.mxu0 0
        %2180 = vmatpush2.bf16.msra.mxu0 0
        %2181 = vmatprep.mubr.bf16.mxu0 0
        %2182 = vmatmul.mubr.bf16.gmra.mxu0 %v2071
        %v2183 = vpop.f32.mrf.mxu0
        %v2184 = vadd.f32 %v2099, %v2183
        %v2185 = vpop.f32.mrf.mxu0
        %v2186 = vpop.f32.mrf.mxu0
        %v2187 = vadd.f32 %v2099, %v2186
        %v2188 = vpop.f32.mrf.mxu0
        %2189 = vmatprep.mubr.bf16.mxu0 0
        %2190 = vmatmul.mubr.bf16.gmra.mxu0 %v2072
        %v2191 = vpop.f32.mrf.mxu0
        %v2192 = vadd.f32 %v2099, %v2191
        %v2193 = vpop.f32.mrf.mxu0
        %v2194 = vpop.f32.mrf.mxu0
        %v2195 = vadd.f32 %v2099, %v2194
        %v2196 = vpop.f32.mrf.mxu0
        %2197 = vmatprep.mubr.bf16.mxu0 0
        %2198 = vmatmul.mubr.bf16.gmra.mxu0 %v2073
        %v2199 = vpop.f32.mrf.mxu0
        %v2200 = vadd.f32 %v2099, %v2199
        %v2201 = vpop.f32.mrf.mxu0
        %v2202 = vpop.f32.mrf.mxu0
        %v2203 = vadd.f32 %v2099, %v2202
        %v2204 = vpop.f32.mrf.mxu0
        %2205 = vmatprep.mubr.bf16.mxu0 0
        %2206 = vmatmul.mubr.bf16.gmra.mxu0 %v2074
        %v2207 = vpop.f32.mrf.mxu0
        %v2208 = vadd.f32 %v2099, %v2207
        %v2209 = vpop.f32.mrf.mxu0
        %v2210 = vpop.f32.mrf.mxu0
        %v2211 = vadd.f32 %v2099, %v2210
        %v2212 = vpop.f32.mrf.mxu0
        %2213 = vmatprep.mubr.bf16.mxu0 0
        %2214 = vmatmul.mubr.bf16.gmra.mxu0 %v2075
        %v2215 = vpop.f32.mrf.mxu0
        %v2216 = vadd.f32 %v2099, %v2215
        %v2217 = vpop.f32.mrf.mxu0
        %v2218 = vpop.f32.mrf.mxu0
        %v2219 = vadd.f32 %v2099, %v2218
        %v2220 = vpop.f32.mrf.mxu0
        %2221 = vmatprep.mubr.bf16.mxu0 0
        %2222 = vmatmul.mubr.bf16.gmra.mxu0 %v2076
        %v2223 = vpop.f32.mrf.mxu0
        %v2224 = vadd.f32 %v2099, %v2223
        %v2225 = vpop.f32.mrf.mxu0
        %v2226 = vpop.f32.mrf.mxu0
        %v2227 = vadd.f32 %v2099, %v2226
        %v2228 = vpop.f32.mrf.mxu0
        %2229 = vmatprep.mubr.bf16.mxu0 0
        %2230 = vmatmul.mubr.bf16.gmra.mxu0 %v2077
        %v2231 = vpop.f32.mrf.mxu0
        %v2232 = vadd.f32 %v2099, %v2231
        %v2233 = vpop.f32.mrf.mxu0
        %v2234 = vpop.f32.mrf.mxu0
        %v2235 = vadd.f32 %v2099, %v2234
        %v2236 = vpop.f32.mrf.mxu0
        %2237 = vmatprep.mubr.bf16.mxu0 0
        %2238 = vmatmul.mubr.bf16.gmra.mxu0 %v2078
        %v2239 = vpop.f32.mrf.mxu0
        %v2240 = vadd.f32 %v2099, %v2239
        %v2241 = vpop.f32.mrf.mxu0
        %v2242 = vpop.f32.mrf.mxu0
        %v2243 = vadd.f32 %v2099, %v2242
        %v2244 = vpop.f32.mrf.mxu0
        %2245 = vdwg.mxu0
        %v2246 = vmul.f32 %v2184, %v2184
        %v2247 = vmul.f32 %v2187, %v2187
        %v2248 = vmul.f32 %v2192, %v2192
        %v2249 = vmul.f32 %v2195, %v2195
        %v2250 = vmul.f32 %v2200, %v2200
        %v2251 = vmul.f32 %v2203, %v2203
        %v2252 = vmul.f32 %v2208, %v2208
        %v2253 = vmul.f32 %v2211, %v2211
        %v2254 = vmul.f32 %v2216, %v2216
        %v2255 = vmul.f32 %v2219, %v2219
        %v2256 = vmul.f32 %v2224, %v2224
        %v2257 = vmul.f32 %v2227, %v2227
        %v2258 = vmul.f32 %v2232, %v2232
        %v2259 = vmul.f32 %v2235, %v2235
        %v2260 = vmul.f32 %v2240, %v2240
        %v2261 = vmul.f32 %v2243, %v2243
        %v2262 = vmul.f32 %v2184, %v2246
        %v2263 = vmul.f32 %v2187, %v2247
        %v2264 = vmul.f32 %v2192, %v2248
        %v2265 = vmul.f32 %v2195, %v2249
        %v2266 = vmul.f32 %v2200, %v2250
        %v2267 = vmul.f32 %v2203, %v2251
        %v2268 = vmul.f32 %v2208, %v2252
        %v2269 = vmul.f32 %v2211, %v2253
        %v2270 = vmul.f32 %v2216, %v2254
        %v2271 = vmul.f32 %v2219, %v2255
        %v2272 = vmul.f32 %v2224, %v2256
        %v2273 = vmul.f32 %v2227, %v2257
        %v2274 = vmul.f32 %v2232, %v2258
        %v2275 = vmul.f32 %v2235, %v2259
        %v2276 = vmul.f32 %v2240, %v2260
        %v2277 = vmul.f32 %v2243, %v2261
        %v2278 = vmul.f32 %v2262, 0.044715
        %v2279 = vmul.f32 %v2263, 0.044715
        %v2280 = vmul.f32 %v2264, 0.044715
        %v2281 = vmul.f32 %v2265, 0.044715
        %v2282 = vmul.f32 %v2266, 0.044715
        %v2283 = vmul.f32 %v2267, 0.044715
        %v2284 = vmul.f32 %v2268, 0.044715
        %v2285 = vmul.f32 %v2269, 0.044715
        %v2286 = vmul.f32 %v2270, 0.044715
        %v2287 = vmul.f32 %v2271, 0.044715
        %v2288 = vmul.f32 %v2272, 0.044715
        %v2289 = vmul.f32 %v2273, 0.044715
        %v2290 = vmul.f32 %v2274, 0.044715
        %v2291 = vmul.f32 %v2275, 0.044715
        %v2292 = vmul.f32 %v2276, 0.044715
        %v2293 = vmul.f32 %v2277, 0.044715
        %v2294 = vadd.f32 %v2184, %v2278
        %v2295 = vadd.f32 %v2187, %v2279
        %v2296 = vadd.f32 %v2192, %v2280
        %v2297 = vadd.f32 %v2195, %v2281
        %v2298 = vadd.f32 %v2200, %v2282
        %v2299 = vadd.f32 %v2203, %v2283
        %v2300 = vadd.f32 %v2208, %v2284
        %v2301 = vadd.f32 %v2211, %v2285
        %v2302 = vadd.f32 %v2216, %v2286
        %v2303 = vadd.f32 %v2219, %v2287
        %v2304 = vadd.f32 %v2224, %v2288
        %v2305 = vadd.f32 %v2227, %v2289
        %v2306 = vadd.f32 %v2232, %v2290
        %v2307 = vadd.f32 %v2235, %v2291
        %v2308 = vadd.f32 %v2240, %v2292
        %v2309 = vadd.f32 %v2243, %v2293
        %v2310 = vmul.f32 %v2294, 0.7978846
        %v2311 = vmul.f32 %v2295, 0.7978846
        %v2312 = vmul.f32 %v2296, 0.7978846
        %v2313 = vmul.f32 %v2297, 0.7978846
        %v2314 = vmul.f32 %v2298, 0.7978846
        %v2315 = vmul.f32 %v2299, 0.7978846
        %v2316 = vmul.f32 %v2300, 0.7978846
        %v2317 = vmul.f32 %v2301, 0.7978846
        %v2318 = vmul.f32 %v2302, 0.7978846
        %v2319 = vmul.f32 %v2303, 0.7978846
        %v2320 = vmul.f32 %v2304, 0.7978846
        %v2321 = vmul.f32 %v2305, 0.7978846
        %v2322 = vmul.f32 %v2306, 0.7978846
        %v2323 = vmul.f32 %v2307, 0.7978846
        %v2324 = vmul.f32 %v2308, 0.7978846
        %v2325 = vmul.f32 %v2309, 0.7978846
        %v2326 = vtanh.pop %v2310
        %v2327 = vtanh.pop %v2311
        %v2328 = vtanh.pop %v2312
        %v2329 = vtanh.pop %v2313
        %v2330 = vtanh.pop %v2314
        %v2331 = vtanh.pop %v2315
        %v2332 = vtanh.pop %v2316
        %v2333 = vtanh.pop %v2317
        %v2334 = vtanh.pop %v2318
        %v2335 = vtanh.pop %v2319
        %v2336 = vtanh.pop %v2320
        %v2337 = vtanh.pop %v2321
        %v2338 = vtanh.pop %v2322
        %v2339 = vtanh.pop %v2323
        %v2340 = vtanh.pop %v2324
        %v2341 = vtanh.pop %v2325
        %v2342 = vadd.f32 %v2326, 1.0
        %v2343 = vadd.f32 %v2327, 1.0
        %v2344 = vadd.f32 %v2328, 1.0
        %v2345 = vadd.f32 %v2329, 1.0
        %v2346 = vadd.f32 %v2330, 1.0
        %v2347 = vadd.f32 %v2331, 1.0
        %v2348 = vadd.f32 %v2332, 1.0
        %v2349 = vadd.f32 %v2333, 1.0
        %v2350 = vadd.f32 %v2334, 1.0
        %v2351 = vadd.f32 %v2335, 1.0
        %v2352 = vadd.f32 %v2336, 1.0
        %v2353 = vadd.f32 %v2337, 1.0
        %v2354 = vadd.f32 %v2338, 1.0
        %v2355 = vadd.f32 %v2339, 1.0
        %v2356 = vadd.f32 %v2340, 1.0
        %v2357 = vadd.f32 %v2341, 1.0
        %v2358 = vmul.f32 %v2342, 0.5
        %v2359 = vmul.f32 %v2343, 0.5
        %v2360 = vmul.f32 %v2344, 0.5
        %v2361 = vmul.f32 %v2345, 0.5
        %v2362 = vmul.f32 %v2346, 0.5
        %v2363 = vmul.f32 %v2347, 0.5
        %v2364 = vmul.f32 %v2348, 0.5
        %v2365 = vmul.f32 %v2349, 0.5
        %v2366 = vmul.f32 %v2350, 0.5
        %v2367 = vmul.f32 %v2351, 0.5
        %v2368 = vmul.f32 %v2352, 0.5
        %v2369 = vmul.f32 %v2353, 0.5
        %v2370 = vmul.f32 %v2354, 0.5
        %v2371 = vmul.f32 %v2355, 0.5
        %v2372 = vmul.f32 %v2356, 0.5
        %v2373 = vmul.f32 %v2357, 0.5
        %v2374 = vmul.f32 %v2184, %v2358
        %v2375 = vmul.f32 %v2187, %v2359
        %v2376 = vmul.f32 %v2192, %v2360
        %v2377 = vmul.f32 %v2195, %v2361
        %v2378 = vmul.f32 %v2200, %v2362
        %v2379 = vmul.f32 %v2203, %v2363
        %v2380 = vmul.f32 %v2208, %v2364
        %v2381 = vmul.f32 %v2211, %v2365
        %v2382 = vmul.f32 %v2216, %v2366
        %v2383 = vmul.f32 %v2219, %v2367
        %v2384 = vmul.f32 %v2224, %v2368
        %v2385 = vmul.f32 %v2227, %v2369
        %v2386 = vmul.f32 %v2232, %v2370
        %v2387 = vmul.f32 %v2235, %v2371
        %v2388 = vmul.f32 %v2240, %v2372
        %v2389 = vmul.f32 %v2243, %v2373
        %v2390 = vpack.c.bf16 %v2375, %v2374
        %v2391 = vpack.c.bf16 %v2377, %v2376
        %v2392 = vpack.c.bf16 %v2379, %v2378
        %v2393 = vpack.c.bf16 %v2381, %v2380
        %v2394 = vpack.c.bf16 %v2383, %v2382
        %v2395 = vpack.c.bf16 %v2385, %v2384
        %v2396 = vpack.c.bf16 %v2387, %v2386
        %v2397 = vpack.c.bf16 %v2389, %v2388
        %v2398 = vld [vmem:[#allocation12] sm:$0xf]
        %v2399 = vld [vmem:[#allocation12 + $0x4] sm:$0xf]
        %v2400 = vld [vmem:[#allocation12 + $0x8] sm:$0xf]
        %v2401 = vld [vmem:[#allocation12 + $0xc] sm:$0xf]
        %v2402 = vld [vmem:[#allocation12 + $0x10] sm:$0xf]
        %v2403 = vld [vmem:[#allocation12 + $0x14] sm:$0xf]
        %v2404 = vld [vmem:[#allocation12 + $0x18] sm:$0xf]
        %v2405 = vld [vmem:[#allocation12 + $0x1c] sm:$0xf]
        %v2406 = vld [vmem:[#allocation12 + $0x20] sm:$0xf]
        %v2407 = vld [vmem:[#allocation12 + $0x24] sm:$0xf]
        %v2408 = vld [vmem:[#allocation12 + $0x28] sm:$0xf]
        %v2409 = vld [vmem:[#allocation12 + $0x2c] sm:$0xf]
        %v2410 = vld [vmem:[#allocation12 + $0x30] sm:$0xf]
        %v2411 = vld [vmem:[#allocation12 + $0x34] sm:$0xf]
        %v2412 = vld [vmem:[#allocation12 + $0x38] sm:$0xf]
        %v2413 = vld [vmem:[#allocation12 + $0x3c] sm:$0xf]
        %v2415 = vlaneseq
        %v2416 = vshrl.u32 %v2415, 7
        %v2417 = vsub.s32 0, %v2416
        %v2418 = vrot.slane %v592, %v2417
        %v2436 = vunpack.c.l.b16 %v2398
        %v2437 = vunpack.c.l.b16 %v2399
        %v2438 = vunpack.c.l.b16 %v2400
        %v2439 = vunpack.c.l.b16 %v2401
        %v2440 = vunpack.c.l.b16 %v2402
        %v2441 = vunpack.c.l.b16 %v2403
        %v2442 = vunpack.c.l.b16 %v2404
        %v2443 = vunpack.c.l.b16 %v2405
        %v2444 = vunpack.c.l.b16 %v2406
        %v2445 = vunpack.c.l.b16 %v2407
        %v2446 = vunpack.c.l.b16 %v2408
        %v2447 = vunpack.c.l.b16 %v2409
        %v2448 = vunpack.c.l.b16 %v2410
        %v2449 = vunpack.c.l.b16 %v2411
        %v2450 = vunpack.c.l.b16 %v2412
        %v2451 = vunpack.c.l.b16 %v2413
        %v2452 = vpack.c.b16 %v2437, %v2436
        %v2453 = vpack.c.b16 %v2439, %v2438
        %v2454 = vpack.c.b16 %v2441, %v2440
        %v2455 = vpack.c.b16 %v2443, %v2442
        %v2456 = vpack.c.b16 %v2445, %v2444
        %v2457 = vpack.c.b16 %v2447, %v2446
        %v2458 = vpack.c.b16 %v2449, %v2448
        %v2459 = vpack.c.b16 %v2451, %v2450
        %2468 = vmatprep.subr.bf16.mxu0 0
        %2469 = vmatpush1.bf16.msra.mxu0 %v2459
        %2470 = vmatprep.subr.bf16.mxu0 0
        %2471 = vmatpush1.bf16.msra.mxu0 %v2458
        %2472 = vmatprep.subr.bf16.mxu0 0
        %2473 = vmatpush1.bf16.msra.mxu0 %v2457
        %2474 = vmatprep.subr.bf16.mxu0 0
        %2475 = vmatpush1.bf16.msra.mxu0 %v2456
        %2476 = vmatprep.subr.bf16.mxu0 0
        %2477 = vmatpush1.bf16.msra.mxu0 %v2455
        %2478 = vmatprep.subr.bf16.mxu0 0
        %2479 = vmatpush1.bf16.msra.mxu0 %v2454
        %2480 = vmatprep.subr.bf16.mxu0 0
        %2481 = vmatpush1.bf16.msra.mxu0 %v2453
        %2482 = vmatprep.subr.bf16.mxu0 0
        %2483 = vmatpush1.bf16.msra.mxu0 %v2452
        %2484 = vmatprep.subr.bf16.mxu0 0
        %2485 = vmatpush2.bf16.msra.mxu0 0
        %2486 = vmatprep.subr.bf16.mxu0 0
        %2487 = vmatpush2.bf16.msra.mxu0 0
        %2488 = vmatprep.subr.bf16.mxu0 0
        %2489 = vmatpush2.bf16.msra.mxu0 0
        %2490 = vmatprep.subr.bf16.mxu0 0
        %2491 = vmatpush2.bf16.msra.mxu0 0
        %2492 = vmatprep.subr.bf16.mxu0 0
        %2493 = vmatpush2.bf16.msra.mxu0 0
        %2494 = vmatprep.subr.bf16.mxu0 0
        %2495 = vmatpush2.bf16.msra.mxu0 0
        %2496 = vmatprep.subr.bf16.mxu0 0
        %2497 = vmatpush2.bf16.msra.mxu0 0
        %2498 = vmatprep.subr.bf16.mxu0 0
        %2499 = vmatpush2.bf16.msra.mxu0 0
        %2500 = vmatprep.mubr.bf16.mxu0 0
        %2501 = vmatmul.mubr.bf16.gmra.mxu0 %v2390
        %v2502 = vpop.f32.mrf.mxu0
        %v2503 = vadd.f32 %v2418, %v2502
        %v2504 = vpop.f32.mrf.mxu0
        %v2505 = vpop.f32.mrf.mxu0
        %v2506 = vadd.f32 %v2418, %v2505
        %v2507 = vpop.f32.mrf.mxu0
        %2508 = vmatprep.mubr.bf16.mxu0 0
        %2509 = vmatmul.mubr.bf16.gmra.mxu0 %v2391
        %v2510 = vpop.f32.mrf.mxu0
        %v2511 = vadd.f32 %v2418, %v2510
        %v2512 = vpop.f32.mrf.mxu0
        %v2513 = vpop.f32.mrf.mxu0
        %v2514 = vadd.f32 %v2418, %v2513
        %v2515 = vpop.f32.mrf.mxu0
        %2516 = vmatprep.mubr.bf16.mxu0 0
        %2517 = vmatmul.mubr.bf16.gmra.mxu0 %v2392
        %v2518 = vpop.f32.mrf.mxu0
        %v2519 = vadd.f32 %v2418, %v2518
        %v2520 = vpop.f32.mrf.mxu0
        %v2521 = vpop.f32.mrf.mxu0
        %v2522 = vadd.f32 %v2418, %v2521
        %v2523 = vpop.f32.mrf.mxu0
        %2524 = vmatprep.mubr.bf16.mxu0 0
        %2525 = vmatmul.mubr.bf16.gmra.mxu0 %v2393
        %v2526 = vpop.f32.mrf.mxu0
        %v2527 = vadd.f32 %v2418, %v2526
        %v2528 = vpop.f32.mrf.mxu0
        %v2529 = vpop.f32.mrf.mxu0
        %v2530 = vadd.f32 %v2418, %v2529
        %v2531 = vpop.f32.mrf.mxu0
        %2532 = vmatprep.mubr.bf16.mxu0 0
        %2533 = vmatmul.mubr.bf16.gmra.mxu0 %v2394
        %v2534 = vpop.f32.mrf.mxu0
        %v2535 = vadd.f32 %v2418, %v2534
        %v2536 = vpop.f32.mrf.mxu0
        %v2537 = vpop.f32.mrf.mxu0
        %v2538 = vadd.f32 %v2418, %v2537
        %v2539 = vpop.f32.mrf.mxu0
        %2540 = vmatprep.mubr.bf16.mxu0 0
        %2541 = vmatmul.mubr.bf16.gmra.mxu0 %v2395
        %v2542 = vpop.f32.mrf.mxu0
        %v2543 = vadd.f32 %v2418, %v2542
        %v2544 = vpop.f32.mrf.mxu0
        %v2545 = vpop.f32.mrf.mxu0
        %v2546 = vadd.f32 %v2418, %v2545
        %v2547 = vpop.f32.mrf.mxu0
        %2548 = vmatprep.mubr.bf16.mxu0 0
        %2549 = vmatmul.mubr.bf16.gmra.mxu0 %v2396
        %v2550 = vpop.f32.mrf.mxu0
        %v2551 = vadd.f32 %v2418, %v2550
        %v2552 = vpop.f32.mrf.mxu0
        %v2553 = vpop.f32.mrf.mxu0
        %v2554 = vadd.f32 %v2418, %v2553
        %v2555 = vpop.f32.mrf.mxu0
        %2556 = vmatprep.mubr.bf16.mxu0 0
        %2557 = vmatmul.mubr.bf16.gmra.mxu0 %v2397
        %v2558 = vpop.f32.mrf.mxu0
        %v2559 = vadd.f32 %v2418, %v2558
        %v2560 = vpop.f32.mrf.mxu0
        %v2561 = vpop.f32.mrf.mxu0
        %v2562 = vadd.f32 %v2418, %v2561
        %v2563 = vpop.f32.mrf.mxu0
        %2564 = vdwg.mxu0
        %v2565 = vadd.f32 %v1835, %v2503
        %v2566 = vadd.f32 %v1836, %v2506
        %v2567 = vadd.f32 %v1837, %v2511
        %v2568 = vadd.f32 %v1838, %v2514
        %v2569 = vadd.f32 %v1839, %v2519
        %v2570 = vadd.f32 %v1840, %v2522
        %v2571 = vadd.f32 %v1841, %v2527
        %v2572 = vadd.f32 %v1842, %v2530
        %v2573 = vadd.f32 %v1843, %v2535
        %v2574 = vadd.f32 %v1844, %v2538
        %v2575 = vadd.f32 %v1845, %v2543
        %v2576 = vadd.f32 %v1846, %v2546
        %v2577 = vadd.f32 %v1847, %v2551
        %v2578 = vadd.f32 %v1848, %v2554
        %v2579 = vadd.f32 %v1849, %v2559
        %v2580 = vadd.f32 %v1850, %v2562
        %2581 = vst [vmem:[%s575] sm:$0xff] %v2565
        %2582 = vst [vmem:[%s575 + $0x8] sm:$0xff] %v2566
        %2583 = vst [vmem:[%s575 + $0x10] sm:$0xff] %v2567
        %2584 = vst [vmem:[%s575 + $0x18] sm:$0xff] %v2568
        %2585 = vst [vmem:[%s575 + $0x20] sm:$0xff] %v2569
        %2586 = vst [vmem:[%s575 + $0x28] sm:$0xff] %v2570
        %2587 = vst [vmem:[%s575 + $0x30] sm:$0xff] %v2571
        %2588 = vst [vmem:[%s575 + $0x38] sm:$0xff] %v2572
        %2589 = vst [vmem:[%s575 + $0x40] sm:$0xff] %v2573
        %2590 = vst [vmem:[%s575 + $0x48] sm:$0xff] %v2574
        %2591 = vst [vmem:[%s575 + $0x50] sm:$0xff] %v2575
        %2592 = vst [vmem:[%s575 + $0x58] sm:$0xff] %v2576
        %2593 = vst [vmem:[%s575 + $0x60] sm:$0xff] %v2577
        %2594 = vst [vmem:[%s575 + $0x68] sm:$0xff] %v2578
        %2595 = vst [vmem:[%s575 + $0x70] sm:$0xff] %v2579
        %2596 = vst [vmem:[%s575 + $0x78] sm:$0xff] %v2580
        %s2597 = sand.u32 %s335, 1
        %s2598 = scalar_lea.sflag [#allocation5], %s2597
        %s2599 = sand.u32 %s335, 1
        %s2600 = smul.addr %s2599, 128
        %s2601 = scalar_lea.vmem [#allocation14], %s2600
        // Predicated region
        $region101: #{tpu_custom_call.1} parent=71 // pred_check
          %p2602 = pneg %p345
        $region102: #{tpu_custom_call.1} parent=71 // pred_check_branch
          %2604 = sbr.rel (%p2602) target = $region104
        $region103: #{tpu_custom_call.1} parent=71 // pred_region
          #allocation18 [shape = 'u32[6]{0}', space=smem, size = 0x18, scoped, tag = 'DMA stride descriptor']
          %s2605 = smul.u32 2, %s37
          %s2606 = smul.u32 8, %s38
          %s2608 = ssub.s32 2048, 2048
          %2609 = vsyncadd %s2598, %s2608
          %s2610 = smul.addr %s2605, 16
          %s2611 = sadd.s32 %s2606, %s2610
          %s2612 = smul.addr %s2611, 128
          %s2613 = scalar_lea.hbm %s13, %s2612
          %s2615 = sshll.u32 1, 14
          %s2616 = sxor.u32 4294967295, %s2615
          %s2619 = sshll.u32 7, 18
          %s2620 = sxor.u32 4294967295, %s2619
          %s2621 = sand.u32 0, %s2620
          %s2623 = sor.u32 %s2621, 0
          %s2624 = sshll.u32 %s2601, 4
          %s2625 = int_to_ptr.vmem [resolvable:$true] %s2624
          %2631 = sst [smem:[#allocation18]] 1024
          %s2632 = scalar_lea.smem [#allocation18], 1
          %2633 = sst [smem:[%s2632]] 2048
          %s2634 = scalar_lea.smem [#allocation18], 2
          %2635 = sst [smem:[%s2634]] 8
          %s2636 = scalar_lea.smem [#allocation18], 3
          %2637 = sst [smem:[%s2636]] 128
          %s2638 = scalar_lea.smem [#allocation18], 4
          %2639 = sst [smem:[%s2638]] 128
          %s2640 = scalar_lea.smem [#allocation18], 5
          %2641 = sst [smem:[%s2640]] 8
          %2643 = dma.general %s2625, 2048, %s2613, %s2598, 131072, [#allocation18], %s2623, 0
        $region104: #{tpu_custom_call.1} parent=71 // pred_fallthru
          _
      $region72: #{tpu_custom_call.1} parent=5 // pred_fallthru
        _
      %p2644 = scmp.le.s32.totalorder 2, %s28
      // Predicated region
      $region105: #{tpu_custom_call.1} parent=5 // pred_check
        %p2645 = pneg %p2644
      $region106: #{tpu_custom_call.1} parent=5 // pred_check_branch
        %2647 = sbr.rel (%p2645) target = $region108
      $region107: #{tpu_custom_call.1} parent=5 // pred_region
        %s2648 = ssub.s32 %s28, 2
        // Predicated region
        $region109: #{tpu_custom_call.1} parent=107 // pred_check
          %p2649 = pneg %p351
        $region110: #{tpu_custom_call.1} parent=107 // pred_check_branch
          %2651 = sbr.rel (%p2649) target = $region112
        $region111: #{tpu_custom_call.1} parent=107 // pred_region
          %s2652 = sand.u32 %s336, 1
          %s2653 = scalar_lea.sflag [#allocation5], %s2652
          %s2654 = sand.u32 %s336, 1
          %s2655 = smul.addr %s2654, 128
          %s2656 = scalar_lea.vmem [#allocation14], %s2655
          %2657 = dma.done %s2653, 2048
        $region112: #{tpu_custom_call.1} parent=107 // pred_fallthru
          _
      $region108: #{tpu_custom_call.1} parent=5 // pred_fallthru
        _
    $region6: #{tpu_custom_call.1} parent=1 // loop_footer
      %s32 = sadd.s32 1, %s28
    $region7: #{tpu_custom_call.1} parent=1 // loop_footer_branch
      %27 = sbr.rel target = $region3
    $region8: #{tpu_custom_call.1} parent=1 // loop_exit
      _
    %2658 = vsyncpa [#allocation4], 1
    %s2659 = scalar_lea.sflag [#allocation4], 1
    %2660 = vsyncpa %s2659, 1
    %2661 = vsyncpa [#allocation7], 1
    %2662 = vsyncpa [#allocation10], 1
    %2663 = vsyncpa [#allocation13], 1
    %2664 = vsyncpa [#allocation5], 1
    %s2665 = scalar_lea.sflag [#allocation5], 1
    %2666 = vsyncpa %s2665, 1

// kernel: tpu_custom_call.1
$region0: #{tpu_custom_call.1}
  #allocation0 [shape = 'u32[]', space=smem, size = 0x4, offset = 0x4, fixed_abs, tag = 'smem constant byte address 0x4 - core index']
  #allocation1 [shape = 'u32[144,128]{1,0:T(1,128)}', space=vmem, size = 0x12000, scoped, tag = 'internal scratch']
  #allocation2 [shape = 'f32[2,128]{1,0:T(2,128)}', space=vmem, size = 0x400, scoped, tag = 'scratch operand']
  #allocation15 [shape = 's32[]', space=sflag, size = 0x4, offset = 0, fixed_abs, tag = 'sflag constant byte address 0x0 - dummy sync flag']
  #allocation17 [shape = 's32[]', space=sflag, size = 0x4, offset = 0, fixed_abs, tag = 'sflag constant byte address 0x0 - dummy sync flag']
  %s0 = inlined_call_operand.hbm [shape: f32[4,128,128], index: 0, kind: input, shape index: {}]
  %s1 = inlined_call_operand.vmem [shape: f32[1,128], index: 1, kind: input, shape index: {}]
  %s2 = inlined_call_operand.vmem [shape: f32[1,128], index: 2, kind: input, shape index: {}]
  %s3 = inlined_call_operand.hbm [shape: f32[64,128], index: 3, kind: input, shape index: {}]
  %s4 = inlined_call_operand.hbm [shape: bf16[128,128], index: 4, kind: input, shape index: {}]
  %s5 = inlined_call_operand.hbm [shape: bf16[128,128], index: 5, kind: input, shape index: {}]
  %s6 = inlined_call_operand.vmem [shape: f32[1,128], index: 6, kind: input, shape index: {}]
  %s7 = inlined_call_operand.vmem [shape: f32[1,128], index: 7, kind: input, shape index: {}]
  %s8 = inlined_call_operand.vmem [shape: f32[1,128], index: 8, kind: input, shape index: {}]
  %s9 = inlined_call_operand.hbm [shape: bf16[128,128], index: 9, kind: input, shape index: {}]
  %s10 = inlined_call_operand.vmem [shape: f32[1,128], index: 10, kind: input, shape index: {}]
  %s11 = inlined_call_operand.hbm [shape: bf16[128,128], index: 11, kind: input, shape index: {}]
  %s12 = inlined_call_operand.vmem [shape: f32[1,128], index: 12, kind: input, shape index: {}]
  %s13 = inlined_call_operand.hbm [shape: f32[4,128,128], index: 13, kind: output, shape index: {}]
  %s14 = sld [smem:[#allocation0]]
  $region113: #{tpu_custom_call.1} parent=0
    _
  %s16 = ssub.s32 1, %s14
  %s17 = scalar_select 0, %s16, %s14
  $region1: #{tpu_custom_call.1} parent=0
    #allocation3 [shape = 'u8[131072]{0}', space=vmem, size = 0x20000, scoped, tag = 'input window, operand 0']
    #allocation4 [shape = 's32[2]{0}', space=sflag, size = 0x8, scoped, tag = 'scoped memory for tpu_custom_call.1']
    #allocation5 [shape = 's32[2]{0}', space=sflag, size = 0x8, scoped, tag = 'scoped memory for tpu_custom_call.1']
    #allocation6 [shape = 'u8[32768]{0}', space=vmem, size = 0x8000, scoped, tag = 'input window, operand 3, single buffered']
    #allocation7 [shape = 's32[1]{0}', space=sflag, size = 0x4, scoped, tag = 'scoped memory for tpu_custom_call.1']
    #allocation8 [shape = 'u8[32768]{0}', space=vmem, size = 0x8000, scoped, tag = 'input window, operand 4, single buffered']
    #allocation9 [shape = 'u8[32768]{0}', space=vmem, size = 0x8000, scoped, tag = 'input window, operand 5, single buffered']
    #allocation10 [shape = 's32[1]{0}', space=sflag, size = 0x4, scoped, tag = 'scoped memory for tpu_custom_call.1']
    #allocation11 [shape = 'u8[32768]{0}', space=vmem, size = 0x8000, scoped, tag = 'input window, operand 9, single buffered']
    #allocation12 [shape = 'u8[32768]{0}', space=vmem, size = 0x8000, scoped, tag = 'input window, operand 11, single buffered']
    #allocation13 [shape = 's32[1]{0}', space=sflag, size = 0x4, scoped, tag = 'scoped memory for tpu_custom_call.1']
    #allocation14 [shape = 'u8[131072]{0}', space=vmem, size = 0x20000, scoped, tag = 'output window, operand 0']
    %18 = vsyncpa [#allocation4], 0
    %s19 = scalar_lea.sflag [#allocation4], 1
    %20 = vsyncpa %s19, 0
    %21 = vsyncpa [#allocation7], 0
    %22 = vsyncpa [#allocation10], 0
    %23 = vsyncpa [#allocation13], 0
    %24 = vsyncpa [#allocation5], 0
    %s25 = scalar_lea.sflag [#allocation5], 1
    %26 = vsyncpa %s25, 0
    loop: start=0, step=1, limit=6
    $region2: #{tpu_custom_call.1} parent=1 // loop_pre_header
      _
    $region3: #{tpu_custom_call.1} parent=1 // loop_header
      %s28 = sphi 0, %s32
      %p29 = scmp.ge.s32.totalorder %s28, 6
      %s35 = sphi 0, %s47
      %s36 = sphi 0, %s43
      %s37 = sphi 0, %s35
      %s38 = sphi 0, %s36
      %s39 = sphi 0, %s37
      %s40 = sphi 0, %s38
      %s52 = sphi 0, %s54
      %s55 = sphi 0, %s52
      %s56 = sphi 0, %s55
      %s72 = sphi 0, %s56
      %s76 = sphi 0, %s76
      %s78 = sphi 0, %s76
      %s79 = sphi 0, %s78
      %s93 = sphi 0, %s79
      %s97 = sphi 0, %s97
      %s99 = sphi 0, %s97
      %s100 = sphi 0, %s99
      %s114 = sphi 0, %s100
      %s118 = sphi 0, %s118
      %s120 = sphi 0, %s118
      %s121 = sphi 0, %s120
      %s135 = sphi 0, %s121
      %s139 = sphi 0, %s139
      %s141 = sphi 0, %s139
      %s142 = sphi 0, %s141
      %s156 = sphi 0, %s142
      %s160 = sphi 0, %s160
      %s162 = sphi 0, %s160
      %s163 = sphi 0, %s162
      %s177 = sphi 0, %s163
      %s181 = sphi 0, %s181
      %s183 = sphi 0, %s181
      %s184 = sphi 0, %s183
      %s198 = sphi 0, %s184
      %s202 = sphi 0, %s202
      %s204 = sphi 0, %s202
      %s205 = sphi 0, %s204
      %s219 = sphi 0, %s205
      %s223 = sphi 0, %s223
      %s225 = sphi 0, %s223
      %s226 = sphi 0, %s225
      %s240 = sphi 0, %s226
      %s244 = sphi 0, %s244
      %s246 = sphi 0, %s244
      %s247 = sphi 0, %s246
      %s261 = sphi 0, %s247
      %s265 = sphi 0, %s265
      %s267 = sphi 0, %s265
      %s268 = sphi 0, %s267
      %s282 = sphi 0, %s268
      %s286 = sphi 0, %s286
      %s288 = sphi 0, %s286
      %s289 = sphi 0, %s288
      %s303 = sphi 0, %s289
      %s307 = sphi 0, %s307
      %s309 = sphi 0, %s307
      %s310 = sphi 0, %s309
      %s324 = sphi 0, %s310
      %s332 = sphi 0, %s334
      %s335 = sphi 0, %s332
      %s336 = sphi 0, %s335
      %s352 = sphi 0, %s336
    $region4: #{tpu_custom_call.1} parent=1 // loop_header_branch
      %31 = sbr.rel (%p29) target = $region8
    $region5: #{tpu_custom_call.1} parent=1 // loop_body
      %s33 = ssub.s32 %s28, 1
      %s34 = ssub.s32 %s28, 2
      %s41 = sadd.s32 1, %s36
      %p42 = scmp.ge.s32.totalorder %s41, 2
      %s43 = scalar_select %p42, 0, %s41
      %s44 = sadd.s32 1, %s35
      %s45 = scalar_select %p42, %s44, %s35
      %p46 = scmp.ge.s32.totalorder %s45, 2
      %s47 = scalar_select %p46, 0, %s45
      %s48 = ssub.s32 %s35, %s47
      %s49 = ssub.s32 %s36, %s43
      %s50 = sor.u32 %s48, %s49
      %p51 = scmp.eq.s32.totalorder %s50, 0
      %s53 = sadd.s32 %s52, 1
      %s54 = scalar_select %p51, %s52, %s53
      %p57 = pneg %p51
      %p58 = scmp.eq.s32.totalorder %s28, 3
      %p59 = por %p57, %p58
      %p60 = scmp.ne.s32.totalorder %s52, %s55
      %p61 = scmp.eq.s32.totalorder %s28, 0
      %p62 = por %p60, %p61
      %p63 = scmp.ne.s32.totalorder %s52, %s55
      %p64 = scmp.eq.s32.totalorder %s33, 3
      %p65 = por %p63, %p64
      %p66 = scmp.ne.s32.totalorder %s55, %s56
      %p67 = scmp.eq.s32.totalorder %s33, 0
      %p68 = por %p66, %p67
      %p69 = scmp.ne.s32.totalorder %s55, %s56
      %p70 = scmp.eq.s32.totalorder %s34, 3
      %p71 = por %p69, %p70
      %p73 = scmp.ne.s32.totalorder %s56, %s72
      %p74 = scmp.eq.s32.totalorder %s34, 0
      %p75 = por %p73, %p74
      %s77 = sadd.s32 %s76, 1
      %p80 = scmp.eq.s32.totalorder %s28, 3
      %p81 = scmp.ne.s32.totalorder %s76, %s78
      %p82 = scmp.eq.s32.totalorder %s28, 0
      %p83 = por %p81, %p82
      %p84 = scmp.ne.s32.totalorder %s76, %s78
      %p85 = scmp.eq.s32.totalorder %s33, 3
      %p86 = por %p84, %p85
      %p87 = scmp.ne.s32.totalorder %s78, %s79
      %p88 = scmp.eq.s32.totalorder %s33, 0
      %p89 = por %p87, %p88
      %p90 = scmp.ne.s32.totalorder %s78, %s79
      %p91 = scmp.eq.s32.totalorder %s34, 3
      %p92 = por %p90, %p91
      %p94 = scmp.ne.s32.totalorder %s79, %s93
      %p95 = scmp.eq.s32.totalorder %s34, 0
      %p96 = por %p94, %p95
      %s98 = sadd.s32 %s97, 1
      %p101 = scmp.eq.s32.totalorder %s28, 3
      %p102 = scmp.ne.s32.totalorder %s97, %s99
      %p103 = scmp.eq.s32.totalorder %s28, 0
      %p104 = por %p102, %p103
      %p105 = scmp.ne.s32.totalorder %s97, %s99
      %p106 = scmp.eq.s32.totalorder %s33, 3
      %p107 = por %p105, %p106
      %p108 = scmp.ne.s32.totalorder %s99, %s100
      %p109 = scmp.eq.s32.totalorder %s33, 0
      %p110 = por %p108, %p109
      %p111 = scmp.ne.s32.totalorder %s99, %s100
      %p112 = scmp.eq.s32.totalorder %s34, 3
      %p113 = por %p111, %p112
      %p115 = scmp.ne.s32.totalorder %s100, %s114
      %p116 = scmp.eq.s32.totalorder %s34, 0
      %p117 = por %p115, %p116
      %s119 = sadd.s32 %s118, 1
      %p122 = scmp.eq.s32.totalorder %s28, 3
      %p123 = scmp.ne.s32.totalorder %s118, %s120
      %p124 = scmp.eq.s32.totalorder %s28, 0
      %p125 = por %p123, %p124
      %p126 = scmp.ne.s32.totalorder %s118, %s120
      %p127 = scmp.eq.s32.totalorder %s33, 3
      %p128 = por %p126, %p127
      %p129 = scmp.ne.s32.totalorder %s120, %s121
      %p130 = scmp.eq.s32.totalorder %s33, 0
      %p131 = por %p129, %p130
      %p132 = scmp.ne.s32.totalorder %s120, %s121
      %p133 = scmp.eq.s32.totalorder %s34, 3
      %p134 = por %p132, %p133
      %p136 = scmp.ne.s32.totalorder %s121, %s135
      %p137 = scmp.eq.s32.totalorder %s34, 0
      %p138 = por %p136, %p137
      %s140 = sadd.s32 %s139, 1
      %p143 = scmp.eq.s32.totalorder %s28, 3
      %p144 = scmp.ne.s32.totalorder %s139, %s141
      %p145 = scmp.eq.s32.totalorder %s28, 0
      %p146 = por %p144, %p145
      %p147 = scmp.ne.s32.totalorder %s139, %s141
      %p148 = scmp.eq.s32.totalorder %s33, 3
      %p149 = por %p147, %p148
      %p150 = scmp.ne.s32.totalorder %s141, %s142
      %p151 = scmp.eq.s32.totalorder %s33, 0
      %p152 = por %p150, %p151
      %p153 = scmp.ne.s32.totalorder %s141, %s142
      %p154 = scmp.eq.s32.totalorder %s34, 3
      %p155 = por %p153, %p154
      %p157 = scmp.ne.s32.totalorder %s142, %s156
      %p158 = scmp.eq.s32.totalorder %s34, 0
      %p159 = por %p157, %p158
      %s161 = sadd.s32 %s160, 1
      %p164 = scmp.eq.s32.totalorder %s28, 3
      %p165 = scmp.ne.s32.totalorder %s160, %s162
      %p166 = scmp.eq.s32.totalorder %s28, 0
      %p167 = por %p165, %p166
      %p168 = scmp.ne.s32.totalorder %s160, %s162
      %p169 = scmp.eq.s32.totalorder %s33, 3
      %p170 = por %p168, %p169
      %p171 = scmp.ne.s32.totalorder %s162, %s163
      %p172 = scmp.eq.s32.totalorder %s33, 0
      %p173 = por %p171, %p172
      %p174 = scmp.ne.s32.totalorder %s162, %s163
      %p175 = scmp.eq.s32.totalorder %s34, 3
      %p176 = por %p174, %p175
      %p178 = scmp.ne.s32.totalorder %s163, %s177
      %p179 = scmp.eq.s32.totalorder %s34, 0
      %p180 = por %p178, %p179
      %s182 = sadd.s32 %s181, 1
      %p185 = scmp.eq.s32.totalorder %s28, 3
      %p186 = scmp.ne.s32.totalorder %s181, %s183
      %p187 = scmp.eq.s32.totalorder %s28, 0
      %p188 = por %p186, %p187
      %p189 = scmp.ne.s32.totalorder %s181, %s183
      %p190 = scmp.eq.s32.totalorder %s33, 3
      %p191 = por %p189, %p190
      %p192 = scmp.ne.s32.totalorder %s183, %s184
      %p193 = scmp.eq.s32.totalorder %s33, 0
      %p194 = por %p192, %p193
      %p195 = scmp.ne.s32.totalorder %s183, %s184
      %p196 = scmp.eq.s32.totalorder %s34, 3
      %p197 = por %p195, %p196
      %p199 = scmp.ne.s32.totalorder %s184, %s198
      %p200 = scmp.eq.s32.totalorder %s34, 0
      %p201 = por %p199, %p200
      %s203 = sadd.s32 %s202, 1
      %p206 = scmp.eq.s32.totalorder %s28, 3
      %p207 = scmp.ne.s32.totalorder %s202, %s204
      %p208 = scmp.eq.s32.totalorder %s28, 0
      %p209 = por %p207, %p208
      %p210 = scmp.ne.s32.totalorder %s202, %s204
      %p211 = scmp.eq.s32.totalorder %s33, 3
      %p212 = por %p210, %p211
      %p213 = scmp.ne.s32.totalorder %s204, %s205
      %p214 = scmp.eq.s32.totalorder %s33, 0
      %p215 = por %p213, %p214
      %p216 = scmp.ne.s32.totalorder %s204, %s205
      %p217 = scmp.eq.s32.totalorder %s34, 3
      %p218 = por %p216, %p217
      %p220 = scmp.ne.s32.totalorder %s205, %s219
      %p221 = scmp.eq.s32.totalorder %s34, 0
      %p222 = por %p220, %p221
      %s224 = sadd.s32 %s223, 1
      %p227 = scmp.eq.s32.totalorder %s28, 3
      %p228 = scmp.ne.s32.totalorder %s223, %s225
      %p229 = scmp.eq.s32.totalorder %s28, 0
      %p230 = por %p228, %p229
      %p231 = scmp.ne.s32.totalorder %s223, %s225
      %p232 = scmp.eq.s32.totalorder %s33, 3
      %p233 = por %p231, %p232
      %p234 = scmp.ne.s32.totalorder %s225, %s226
      %p235 = scmp.eq.s32.totalorder %s33, 0
      %p236 = por %p234, %p235
      %p237 = scmp.ne.s32.totalorder %s225, %s226
      %p238 = scmp.eq.s32.totalorder %s34, 3
      %p239 = por %p237, %p238
      %p241 = scmp.ne.s32.totalorder %s226, %s240
      %p242 = scmp.eq.s32.totalorder %s34, 0
      %p243 = por %p241, %p242
      %s245 = sadd.s32 %s244, 1
      %p248 = scmp.eq.s32.totalorder %s28, 3
      %p249 = scmp.ne.s32.totalorder %s244, %s246
      %p250 = scmp.eq.s32.totalorder %s28, 0
      %p251 = por %p249, %p250
      %p252 = scmp.ne.s32.totalorder %s244, %s246
      %p253 = scmp.eq.s32.totalorder %s33, 3
      %p254 = por %p252, %p253
      %p255 = scmp.ne.s32.totalorder %s246, %s247
      %p256 = scmp.eq.s32.totalorder %s33, 0
      %p257 = por %p255, %p256
      %p258 = scmp.ne.s32.totalorder %s246, %s247
      %p259 = scmp.eq.s32.totalorder %s34, 3
      %p260 = por %p258, %p259
      %p262 = scmp.ne.s32.totalorder %s247, %s261
      %p263 = scmp.eq.s32.totalorder %s34, 0
      %p264 = por %p262, %p263
      %s266 = sadd.s32 %s265, 1
      %p269 = scmp.eq.s32.totalorder %s28, 3
      %p270 = scmp.ne.s32.totalorder %s265, %s267
      %p271 = scmp.eq.s32.totalorder %s28, 0
      %p272 = por %p270, %p271
      %p273 = scmp.ne.s32.totalorder %s265, %s267
      %p274 = scmp.eq.s32.totalorder %s33, 3
      %p275 = por %p273, %p274
      %p276 = scmp.ne.s32.totalorder %s267, %s268
      %p277 = scmp.eq.s32.totalorder %s33, 0
      %p278 = por %p276, %p277
      %p279 = scmp.ne.s32.totalorder %s267, %s268
      %p280 = scmp.eq.s32.totalorder %s34, 3
      %p281 = por %p279, %p280
      %p283 = scmp.ne.s32.totalorder %s268, %s282
      %p284 = scmp.eq.s32.totalorder %s34, 0
      %p285 = por %p283, %p284
      %s287 = sadd.s32 %s286, 1
      %p290 = scmp.eq.s32.totalorder %s28, 3
      %p291 = scmp.ne.s32.totalorder %s286, %s288
      %p292 = scmp.eq.s32.totalorder %s28, 0
      %p293 = por %p291, %p292
      %p294 = scmp.ne.s32.totalorder %s286, %s288
      %p295 = scmp.eq.s32.totalorder %s33, 3
      %p296 = por %p294, %p295
      %p297 = scmp.ne.s32.totalorder %s288, %s289
      %p298 = scmp.eq.s32.totalorder %s33, 0
      %p299 = por %p297, %p298
      %p300 = scmp.ne.s32.totalorder %s288, %s289
      %p301 = scmp.eq.s32.totalorder %s34, 3
      %p302 = por %p300, %p301
      %p304 = scmp.ne.s32.totalorder %s289, %s303
      %p305 = scmp.eq.s32.totalorder %s34, 0
      %p306 = por %p304, %p305
      %s308 = sadd.s32 %s307, 1
      %p311 = scmp.eq.s32.totalorder %s28, 3
      %p312 = scmp.ne.s32.totalorder %s307, %s309
      %p313 = scmp.eq.s32.totalorder %s28, 0
      %p314 = por %p312, %p313
      %p315 = scmp.ne.s32.totalorder %s307, %s309
      %p316 = scmp.eq.s32.totalorder %s33, 3
      %p317 = por %p315, %p316
      %p318 = scmp.ne.s32.totalorder %s309, %s310
      %p319 = scmp.eq.s32.totalorder %s33, 0
      %p320 = por %p318, %p319
      %p321 = scmp.ne.s32.totalorder %s309, %s310
      %p322 = scmp.eq.s32.totalorder %s34, 3
      %p323 = por %p321, %p322
      %p325 = scmp.ne.s32.totalorder %s310, %s324
      %p326 = scmp.eq.s32.totalorder %s34, 0
      %p327 = por %p325, %p326
      %s328 = ssub.s32 %s35, %s47
      %s329 = ssub.s32 %s36, %s43
      %s330 = sor.u32 %s328, %s329
      %p331 = scmp.eq.s32.totalorder %s330, 0
      %s333 = sadd.s32 %s332, 1
      %s334 = scalar_select %p331, %s332, %s333
      %p337 = pneg %p331
      %p338 = scmp.eq.s32.totalorder %s28, 3
      %p339 = por %p337, %p338
      %p340 = scmp.ne.s32.totalorder %s332, %s335
      %p341 = scmp.eq.s32.totalorder %s28, 0
      %p342 = por %p340, %p341
      %p343 = scmp.ne.s32.totalorder %s332, %s335
      %p344 = scmp.eq.s32.totalorder %s33, 3
      %p345 = por %p343, %p344
      %p346 = scmp.ne.s32.totalorder %s335, %s336
      %p347 = scmp.eq.s32.totalorder %s33, 0
      %p348 = por %p346, %p347
      %p349 = scmp.ne.s32.totalorder %s335, %s336
      %p350 = scmp.eq.s32.totalorder %s34, 3
      %p351 = por %p349, %p350
      %p353 = scmp.ne.s32.totalorder %s336, %s352
      %p354 = scmp.eq.s32.totalorder %s34, 0
      %p355 = por %p353, %p354
      %p356 = scmp.le.s32.totalorder 1, %s28
      %p357 = scmp.lt.s32.totalorder %s28, 5
      %p358 = pnand %p356, %p357
      %p359 = pneg %p358
      // Predicated region
      $region9: #{tpu_custom_call.1} parent=5 // pred_check
        _
      $region10: #{tpu_custom_call.1} parent=5 // pred_check_branch
        %361 = sbr.rel (%p358) target = $region12
      $region11: #{tpu_custom_call.1} parent=5 // pred_region
        %s362 = ssub.s32 %s28, 1
        // Predicated region
        $region13: #{tpu_custom_call.1} parent=11 // pred_check
          %p363 = pneg %p89
        $region14: #{tpu_custom_call.1} parent=11 // pred_check_branch
          %365 = sbr.rel (%p363) target = $region16
        $region15: #{tpu_custom_call.1} parent=11 // pred_region
          _
        $region16: #{tpu_custom_call.1} parent=11 // pred_fallthru
          _
        // Predicated region
        $region17: #{tpu_custom_call.1} parent=11 // pred_check
          %p366 = pneg %p110
        $region18: #{tpu_custom_call.1} parent=11 // pred_check_branch
          %368 = sbr.rel (%p366) target = $region20
        $region19: #{tpu_custom_call.1} parent=11 // pred_region
          _
        $region20: #{tpu_custom_call.1} parent=11 // pred_fallthru
          _
        // Predicated region
        $region21: #{tpu_custom_call.1} parent=11 // pred_check
          %p369 = pneg %p131
        $region22: #{tpu_custom_call.1} parent=11 // pred_check_branch
          %371 = sbr.rel (%p369) target = $region24
        $region23: #{tpu_custom_call.1} parent=11 // pred_region
          %s373 = ssub.s32 1024, 1024
          %374 = vsyncadd [#allocation7], %s373
          %s375 = sshll.u32 [#allocation6], 4
          %s376 = int_to_ptr.vmem [resolvable:$true] %s375
          %381 = dma.hbm_to_vmem [thread:$0]  %s3, 1024, %s376, [#allocation7], 128, 128, 8
        $region24: #{tpu_custom_call.1} parent=11 // pred_fallthru
          _
        // Predicated region
        $region25: #{tpu_custom_call.1} parent=11 // pred_check
          %p382 = pneg %p152
        $region26: #{tpu_custom_call.1} parent=11 // pred_check_branch
          %384 = sbr.rel (%p382) target = $region28
        $region27: #{tpu_custom_call.1} parent=11 // pred_region
          %s386 = ssub.s32 1024, 1024
          %387 = vsyncadd [#allocation7], %s386
          %s388 = sshll.u32 [#allocation8], 4
          %s389 = int_to_ptr.vmem [resolvable:$true] %s388
          %394 = dma.hbm_to_vmem [thread:$0]  %s4, 1024, %s389, [#allocation7], 64, 64, 4
        $region28: #{tpu_custom_call.1} parent=11 // pred_fallthru
          _
        // Predicated region
        $region29: #{tpu_custom_call.1} parent=11 // pred_check
          %p395 = pneg %p173
        $region30: #{tpu_custom_call.1} parent=11 // pred_check_branch
          %397 = sbr.rel (%p395) target = $region32
        $region31: #{tpu_custom_call.1} parent=11 // pred_region
          %s399 = ssub.s32 1024, 1024
          %400 = vsyncadd [#allocation10], %s399
          %s401 = sshll.u32 [#allocation9], 4
          %s402 = int_to_ptr.vmem [resolvable:$true] %s401
          %407 = dma.hbm_to_vmem [thread:$0]  %s5, 1024, %s402, [#allocation10], 64, 64, 4
        $region32: #{tpu_custom_call.1} parent=11 // pred_fallthru
          _
        // Predicated region
        $region33: #{tpu_custom_call.1} parent=11 // pred_check
          %p408 = pneg %p194
        $region34: #{tpu_custom_call.1} parent=11 // pred_check_branch
          %410 = sbr.rel (%p408) target = $region36
        $region35: #{tpu_custom_call.1} parent=11 // pred_region
          _
        $region36: #{tpu_custom_call.1} parent=11 // pred_fallthru
          _
        // Predicated region
        $region37: #{tpu_custom_call.1} parent=11 // pred_check
          %p411 = pneg %p215
        $region38: #{tpu_custom_call.1} parent=11 // pred_check_branch
          %413 = sbr.rel (%p411) target = $region40
        $region39: #{tpu_custom_call.1} parent=11 // pred_region
          _
        $region40: #{tpu_custom_call.1} parent=11 // pred_fallthru
          _
        // Predicated region
        $region41: #{tpu_custom_call.1} parent=11 // pred_check
          %p414 = pneg %p236
        $region42: #{tpu_custom_call.1} parent=11 // pred_check_branch
          %416 = sbr.rel (%p414) target = $region44
        $region43: #{tpu_custom_call.1} parent=11 // pred_region
          _
        $region44: #{tpu_custom_call.1} parent=11 // pred_fallthru
          _
        // Predicated region
        $region45: #{tpu_custom_call.1} parent=11 // pred_check
          %p417 = pneg %p257
        $region46: #{tpu_custom_call.1} parent=11 // pred_check_branch
          %419 = sbr.rel (%p417) target = $region48
        $region47: #{tpu_custom_call.1} parent=11 // pred_region
          %s421 = ssub.s32 1024, 1024
          %422 = vsyncadd [#allocation10], %s421
          %s423 = sshll.u32 [#allocation11], 4
          %s424 = int_to_ptr.vmem [resolvable:$true] %s423
          %429 = dma.hbm_to_vmem [thread:$0]  %s9, 1024, %s424, [#allocation10], 64, 64, 4
        $region48: #{tpu_custom_call.1} parent=11 // pred_fallthru
          _
        // Predicated region
        $region49: #{tpu_custom_call.1} parent=11 // pred_check
          %p430 = pneg %p278
        $region50: #{tpu_custom_call.1} parent=11 // pred_check_branch
          %432 = sbr.rel (%p430) target = $region52
        $region51: #{tpu_custom_call.1} parent=11 // pred_region
          _
        $region52: #{tpu_custom_call.1} parent=11 // pred_fallthru
          _
        // Predicated region
        $region53: #{tpu_custom_call.1} parent=11 // pred_check
          %p433 = pneg %p299
        $region54: #{tpu_custom_call.1} parent=11 // pred_check_branch
          %435 = sbr.rel (%p433) target = $region56
        $region55: #{tpu_custom_call.1} parent=11 // pred_region
          %s437 = ssub.s32 1024, 1024
          %438 = vsyncadd [#allocation13], %s437
          %s439 = sshll.u32 [#allocation12], 4
          %s440 = int_to_ptr.vmem [resolvable:$true] %s439
          %445 = dma.hbm_to_vmem [thread:$0]  %s11, 1024, %s440, [#allocation13], 64, 64, 4
        $region56: #{tpu_custom_call.1} parent=11 // pred_fallthru
          _
        // Predicated region
        $region57: #{tpu_custom_call.1} parent=11 // pred_check
          %p446 = pneg %p320
        $region58: #{tpu_custom_call.1} parent=11 // pred_check_branch
          %448 = sbr.rel (%p446) target = $region60
        $region59: #{tpu_custom_call.1} parent=11 // pred_region
          _
        $region60: #{tpu_custom_call.1} parent=11 // pred_fallthru
          _
      $region12: #{tpu_custom_call.1} parent=5 // pred_fallthru
        _
      %p449 = scmp.lt.s32.totalorder %s28, 4
      // Predicated region
      $region61: #{tpu_custom_call.1} parent=5 // pred_check
        %p450 = pneg %p449
      $region62: #{tpu_custom_call.1} parent=5 // pred_check_branch
        %452 = sbr.rel (%p450) target = $region64
      $region63: #{tpu_custom_call.1} parent=5 // pred_region
        // Predicated region
        $region65: #{tpu_custom_call.1} parent=63 // pred_check
          %p453 = pneg %p62
        $region66: #{tpu_custom_call.1} parent=63 // pred_check_branch
          %455 = sbr.rel (%p453) target = $region68
        $region67: #{tpu_custom_call.1} parent=63 // pred_region
          #allocation16 [shape = 'u32[6]{0}', space=smem, size = 0x18, scoped, tag = 'DMA stride descriptor']
          %s456 = sand.u32 %s52, 1
          %s457 = scalar_lea.sflag [#allocation4], %s456
          %s458 = sand.u32 %s52, 1
          %s459 = smul.addr %s458, 128
          %s460 = scalar_lea.vmem [#allocation3], %s459
          %s461 = smul.u32 2, %s35
          %s462 = smul.u32 8, %s36
          %s464 = ssub.s32 2048, 2048
          %465 = vsyncadd %s457, %s464
          %s466 = smul.addr %s461, 16
          %s467 = sadd.s32 %s462, %s466
          %s468 = smul.addr %s467, 128
          %s469 = scalar_lea.hbm %s0, %s468
          %s471 = sshll.u32 1, 14
          %s472 = sxor.u32 4294967295, %s471
          %s474 = sld [smem:[#allocation0]]
          %s475 = sadd.s32 2, %s474
          %s477 = sshll.u32 7, 26
          %s478 = sxor.u32 4294967295, %s477
          %s479 = sand.u32 0, %s478
          %s480 = sshll.u32 %s475, 26
          %s481 = sor.u32 %s479, %s480
          %s482 = sshll.u32 %s460, 4
          %s483 = int_to_ptr.vmem [resolvable:$true] %s482
          %489 = sst [smem:[#allocation16]] 2048
          %s490 = scalar_lea.smem [#allocation16], 1
          %491 = sst [smem:[%s490]] 1024
          %s492 = scalar_lea.smem [#allocation16], 2
          %493 = sst [smem:[%s492]] 8
          %s494 = scalar_lea.smem [#allocation16], 3
          %495 = sst [smem:[%s494]] 128
          %s496 = scalar_lea.smem [#allocation16], 4
          %497 = sst [smem:[%s496]] 128
          %s498 = scalar_lea.smem [#allocation16], 5
          %499 = sst [smem:[%s498]] 8
          %501 = dma.general %s469, 2048, %s483, %s457, 131072, [#allocation16], %s481, 0
        $region68: #{tpu_custom_call.1} parent=63 // pred_fallthru
          _
      $region64: #{tpu_custom_call.1} parent=5 // pred_fallthru
        _
      %p502 = scmp.le.s32.totalorder 1, %s28
      %p503 = scmp.lt.s32.totalorder %s28, 5
      %p504 = pnand %p502, %p503
      %p505 = pneg %p504
      // Predicated region
      $region69: #{tpu_custom_call.1} parent=5 // pred_check
        _
      $region70: #{tpu_custom_call.1} parent=5 // pred_check_branch
        %507 = sbr.rel (%p504) target = $region72
      $region71: #{tpu_custom_call.1} parent=5 // pred_region
        %s508 = ssub.s32 %s28, 1
        %s509 = sand.u32 %s55, 1
        %s510 = scalar_lea.sflag [#allocation4], %s509
        %s511 = sand.u32 %s55, 1
        %s512 = smul.addr %s511, 128
        %s513 = scalar_lea.vmem [#allocation3], %s512
        // Predicated region
        $region73: #{tpu_custom_call.1} parent=71 // pred_check
          %p514 = pneg %p68
        $region74: #{tpu_custom_call.1} parent=71 // pred_check_branch
          %516 = sbr.rel (%p514) target = $region76
        $region75: #{tpu_custom_call.1} parent=71 // pred_region
          %517 = dma.done %s510, 2048
        $region76: #{tpu_custom_call.1} parent=71 // pred_fallthru
          _
        // Predicated region
        $region77: #{tpu_custom_call.1} parent=71 // pred_check
          %p518 = pneg %p131
        $region78: #{tpu_custom_call.1} parent=71 // pred_check_branch
          %520 = sbr.rel (%p518) target = $region80
        $region79: #{tpu_custom_call.1} parent=71 // pred_region
          %521 = dma.done [#allocation7], 1024
        $region80: #{tpu_custom_call.1} parent=71 // pred_fallthru
          _
        // Predicated region
        $region81: #{tpu_custom_call.1} parent=71 // pred_check
          %p522 = pneg %p152
        $region82: #{tpu_custom_call.1} parent=71 // pred_check_branch
          %524 = sbr.rel (%p522) target = $region84
        $region83: #{tpu_custom_call.1} parent=71 // pred_region
          %525 = dma.done [#allocation7], 1024
        $region84: #{tpu_custom_call.1} parent=71 // pred_fallthru
          _
        // Predicated region
        $region85: #{tpu_custom_call.1} parent=71 // pred_check
          %p526 = pneg %p173
        $region86: #{tpu_custom_call.1} parent=71 // pred_check_branch
          %528 = sbr.rel (%p526) target = $region88
        $region87: #{tpu_custom_call.1} parent=71 // pred_region
          %529 = dma.done [#allocation10], 1024
        $region88: #{tpu_custom_call.1} parent=71 // pred_fallthru
          _
        // Predicated region
        $region89: #{tpu_custom_call.1} parent=71 // pred_check
          %p530 = pneg %p257
        $region90: #{tpu_custom_call.1} parent=71 // pred_check_branch
          %532 = sbr.rel (%p530) target = $region92
        $region91: #{tpu_custom_call.1} parent=71 // pred_region
          %533 = dma.done [#allocation10], 1024
        $region92: #{tpu_custom_call.1} parent=71 // pred_fallthru
          _
        // Predicated region
        $region93: #{tpu_custom_call.1} parent=71 // pred_check
          %p534 = pneg %p299
        $region94: #{tpu_custom_call.1} parent=71 // pred_check_branch
          %536 = sbr.rel (%p534) target = $region96
        $region95: #{tpu_custom_call.1} parent=71 // pred_region
          %537 = dma.done [#allocation13], 1024
        $region96: #{tpu_custom_call.1} parent=71 // pred_fallthru
          _
        %s538 = sand.u32 %s55, 1
        %s539 = scalar_lea.sflag [#allocation4], %s538
        %s540 = sand.u32 %s55, 1
        %s541 = smul.addr %s540, 128
        %s542 = scalar_lea.vmem [#allocation3], %s541
        %p543 = pneg %p68
        %p544 = pneg %p65
        %p545 = pneg %p89
        %p546 = pneg %p86
        %p547 = pneg %p110
        %p548 = pneg %p107
        %p549 = pneg %p131
        %p550 = pneg %p128
        %p551 = pneg %p152
        %p552 = pneg %p149
        %p553 = pneg %p173
        %p554 = pneg %p170
        %p555 = pneg %p194
        %p556 = pneg %p191
        %p557 = pneg %p215
        %p558 = pneg %p212
        %p559 = pneg %p236
        %p560 = pneg %p233
        %p561 = pneg %p257
        %p562 = pneg %p254
        %p563 = pneg %p278
        %p564 = pneg %p275
        %p565 = pneg %p299
        %p566 = pneg %p296
        %p567 = pneg %p320
        %p568 = pneg %p317
        %p569 = pneg %p348
        %p570 = pneg %p345
        %s571 = sand.u32 %s335, 1
        %s572 = scalar_lea.sflag [#allocation5], %s571
        %s573 = sand.u32 %s335, 1
        %s574 = smul.addr %s573, 128
        %s575 = scalar_lea.vmem [#allocation14], %s574
        %s576 = smul.u32 2, %s37
        %s577 = smul.u32 8, %s38
        %s578 = smul.u32 2, %s37
        %s579 = smul.u32 8, %s38
        %p581 = scmp.eq.s32.totalorder %s38, 0
        // Predicated region
        $region97: #{tpu_custom_call.1} parent=71 // pred_check
          %p582 = pneg %p581
        $region98: #{tpu_custom_call.1} parent=71 // pred_check_branch
          %584 = sbr.rel (%p582) target = $region100
        $region99: #{tpu_custom_call.1} parent=71 // pred_region
          %585 = vst [vmem:[#allocation2] sm:$0x3] 0.0
        $region100: #{tpu_custom_call.1} parent=71 // pred_fallthru
          _
        %v586 = vld [vmem:[%s1] sm:$0x1]
        %v587 = vld [vmem:[%s2] sm:$0x1]
        %v588 = vld [vmem:[%s7] sm:$0x1]
        %v589 = vld [vmem:[%s8] sm:$0x1]
        %v590 = vld [vmem:[%s6] sm:$0x1]
        %v591 = vld [vmem:[%s10] sm:$0x1]
        %v592 = vld [vmem:[%s12] sm:$0x1]
        %v593 = vld [vmem:[#allocation6] sm:$0xff]
        %v594 = vld [vmem:[#allocation6 + $0x8] sm:$0xff]
        %v595 = vld [vmem:[#allocation6 + $0x10] sm:$0xff]
        %v596 = vld [vmem:[#allocation6 + $0x18] sm:$0xff]
        %v597 = vld [vmem:[#allocation6 + $0x20] sm:$0xff]
        %v598 = vld [vmem:[#allocation6 + $0x28] sm:$0xff]
        %v599 = vld [vmem:[#allocation6 + $0x30] sm:$0xff]
        %v600 = vld [vmem:[#allocation6 + $0x38] sm:$0xff]
        %v601 = vld [vmem:[%s513] sm:$0xff]
        %v602 = vld [vmem:[%s513 + $0x8] sm:$0xff]
        %v603 = vld [vmem:[%s513 + $0x10] sm:$0xff]
        %v604 = vld [vmem:[%s513 + $0x18] sm:$0xff]
        %v605 = vld [vmem:[%s513 + $0x20] sm:$0xff]
        %v606 = vld [vmem:[%s513 + $0x28] sm:$0xff]
        %v607 = vld [vmem:[%s513 + $0x30] sm:$0xff]
        %v608 = vld [vmem:[%s513 + $0x38] sm:$0xff]
        %v609 = vld [vmem:[%s513 + $0x40] sm:$0xff]
        %v610 = vld [vmem:[%s513 + $0x48] sm:$0xff]
        %v611 = vld [vmem:[%s513 + $0x50] sm:$0xff]
        %v612 = vld [vmem:[%s513 + $0x58] sm:$0xff]
        %v613 = vld [vmem:[%s513 + $0x60] sm:$0xff]
        %v614 = vld [vmem:[%s513 + $0x68] sm:$0xff]
        %v615 = vld [vmem:[%s513 + $0x70] sm:$0xff]
        %v616 = vld [vmem:[%s513 + $0x78] sm:$0xff]
        %617 = vadd.xlane.f32.xlu0 %v601
        %v618 = vpop.xlane.xlu0 %617
        %619 = vadd.xlane.f32.xlu0 %v602
        %v620 = vpop.xlane.xlu0 %619
        %621 = vadd.xlane.f32.xlu0 %v603
        %v622 = vpop.xlane.xlu0 %621
        %623 = vadd.xlane.f32.xlu0 %v604
        %v624 = vpop.xlane.xlu0 %623
        %625 = vadd.xlane.f32.xlu0 %v605
        %v626 = vpop.xlane.xlu0 %625
        %627 = vadd.xlane.f32.xlu0 %v606
        %v628 = vpop.xlane.xlu0 %627
        %629 = vadd.xlane.f32.xlu0 %v607
        %v630 = vpop.xlane.xlu0 %629
        %631 = vadd.xlane.f32.xlu0 %v608
        %v632 = vpop.xlane.xlu0 %631
        %633 = vadd.xlane.f32.xlu0 %v609
        %v634 = vpop.xlane.xlu0 %633
        %635 = vadd.xlane.f32.xlu0 %v610
        %v636 = vpop.xlane.xlu0 %635
        %637 = vadd.xlane.f32.xlu0 %v611
        %v638 = vpop.xlane.xlu0 %637
        %639 = vadd.xlane.f32.xlu0 %v612
        %v640 = vpop.xlane.xlu0 %639
        %641 = vadd.xlane.f32.xlu0 %v613
        %v642 = vpop.xlane.xlu0 %641
        %643 = vadd.xlane.f32.xlu0 %v614
        %v644 = vpop.xlane.xlu0 %643
        %645 = vadd.xlane.f32.xlu0 %v615
        %v646 = vpop.xlane.xlu0 %645
        %647 = vadd.xlane.f32.xlu0 %v616
        %v648 = vpop.xlane.xlu0 %647
        %v649 = vrcp.pop 128.0
        %v650 = vmul.f32 %v618, %v649
        %v651 = vmul.f32 %v620, %v649
        %v652 = vmul.f32 %v622, %v649
        %v653 = vmul.f32 %v624, %v649
        %v654 = vmul.f32 %v626, %v649
        %v655 = vmul.f32 %v628, %v649
        %v656 = vmul.f32 %v630, %v649
        %v657 = vmul.f32 %v632, %v649
        %v658 = vmul.f32 %v634, %v649
        %v659 = vmul.f32 %v636, %v649
        %v660 = vmul.f32 %v638, %v649
        %v661 = vmul.f32 %v640, %v649
        %v662 = vmul.f32 %v642, %v649
        %v663 = vmul.f32 %v644, %v649
        %v664 = vmul.f32 %v646, %v649
        %v665 = vmul.f32 %v648, %v649
        %v666 = vsub.f32 %v601, %v650
        %v667 = vsub.f32 %v602, %v651
        %v668 = vsub.f32 %v603, %v652
        %v669 = vsub.f32 %v604, %v653
        %v670 = vsub.f32 %v605, %v654
        %v671 = vsub.f32 %v606, %v655
        %v672 = vsub.f32 %v607, %v656
        %v673 = vsub.f32 %v608, %v657
        %v674 = vsub.f32 %v609, %v658
        %v675 = vsub.f32 %v610, %v659
        %v676 = vsub.f32 %v611, %v660
        %v677 = vsub.f32 %v612, %v661
        %v678 = vsub.f32 %v613, %v662
        %v679 = vsub.f32 %v614, %v663
        %v680 = vsub.f32 %v615, %v664
        %v681 = vsub.f32 %v616, %v665
        %v682 = vmul.f32 %v666, %v666
        %v683 = vmul.f32 %v667, %v667
        %v684 = vmul.f32 %v668, %v668
        %v685 = vmul.f32 %v669, %v669
        %v686 = vmul.f32 %v670, %v670
        %v687 = vmul.f32 %v671, %v671
        %v688 = vmul.f32 %v672, %v672
        %v689 = vmul.f32 %v673, %v673
        %v690 = vmul.f32 %v674, %v674
        %v691 = vmul.f32 %v675, %v675
        %v692 = vmul.f32 %v676, %v676
        %v693 = vmul.f32 %v677, %v677
        %v694 = vmul.f32 %v678, %v678
        %v695 = vmul.f32 %v679, %v679
        %v696 = vmul.f32 %v680, %v680
        %v697 = vmul.f32 %v681, %v681
        %698 = vadd.xlane.f32.xlu0 %v682
        %v699 = vpop.xlane.xlu0 %698
        %700 = vadd.xlane.f32.xlu0 %v683
        %v701 = vpop.xlane.xlu0 %700
        %702 = vadd.xlane.f32.xlu0 %v684
        %v703 = vpop.xlane.xlu0 %702
        %704 = vadd.xlane.f32.xlu0 %v685
        %v705 = vpop.xlane.xlu0 %704
        %706 = vadd.xlane.f32.xlu0 %v686
        %v707 = vpop.xlane.xlu0 %706
        %708 = vadd.xlane.f32.xlu0 %v687
        %v709 = vpop.xlane.xlu0 %708
        %710 = vadd.xlane.f32.xlu0 %v688
        %v711 = vpop.xlane.xlu0 %710
        %712 = vadd.xlane.f32.xlu0 %v689
        %v713 = vpop.xlane.xlu0 %712
        %714 = vadd.xlane.f32.xlu0 %v690
        %v715 = vpop.xlane.xlu0 %714
        %716 = vadd.xlane.f32.xlu0 %v691
        %v717 = vpop.xlane.xlu0 %716
        %718 = vadd.xlane.f32.xlu0 %v692
        %v719 = vpop.xlane.xlu0 %718
        %720 = vadd.xlane.f32.xlu0 %v693
        %v721 = vpop.xlane.xlu0 %720
        %722 = vadd.xlane.f32.xlu0 %v694
        %v723 = vpop.xlane.xlu0 %722
        %724 = vadd.xlane.f32.xlu0 %v695
        %v725 = vpop.xlane.xlu0 %724
        %726 = vadd.xlane.f32.xlu0 %v696
        %v727 = vpop.xlane.xlu0 %726
        %728 = vadd.xlane.f32.xlu0 %v697
        %v729 = vpop.xlane.xlu0 %728
        %v730 = vmul.f32 %v699, %v649
        %v731 = vmul.f32 %v701, %v649
        %v732 = vmul.f32 %v703, %v649
        %v733 = vmul.f32 %v705, %v649
        %v734 = vmul.f32 %v707, %v649
        %v735 = vmul.f32 %v709, %v649
        %v736 = vmul.f32 %v711, %v649
        %v737 = vmul.f32 %v713, %v649
        %v738 = vmul.f32 %v715, %v649
        %v739 = vmul.f32 %v717, %v649
        %v740 = vmul.f32 %v719, %v649
        %v741 = vmul.f32 %v721, %v649
        %v742 = vmul.f32 %v723, %v649
        %v743 = vmul.f32 %v725, %v649
        %v744 = vmul.f32 %v727, %v649
        %v745 = vmul.f32 %v729, %v649
        %v746 = vadd.f32 %v730, 1e-05
        %v747 = vadd.f32 %v731, 1e-05
        %v748 = vadd.f32 %v732, 1e-05
        %v749 = vadd.f32 %v733, 1e-05
        %v750 = vadd.f32 %v734, 1e-05
        %v751 = vadd.f32 %v735, 1e-05
        %v752 = vadd.f32 %v736, 1e-05
        %v753 = vadd.f32 %v737, 1e-05
        %v754 = vadd.f32 %v738, 1e-05
        %v755 = vadd.f32 %v739, 1e-05
        %v756 = vadd.f32 %v740, 1e-05
        %v757 = vadd.f32 %v741, 1e-05
        %v758 = vadd.f32 %v742, 1e-05
        %v759 = vadd.f32 %v743, 1e-05
        %v760 = vadd.f32 %v744, 1e-05
        %v761 = vadd.f32 %v745, 1e-05
        %v762 = vrsqrt.pop %v746
        %v763 = vrsqrt.pop %v747
        %v764 = vrsqrt.pop %v748
        %v765 = vrsqrt.pop %v749
        %v766 = vrsqrt.pop %v750
        %v767 = vrsqrt.pop %v751
        %v768 = vrsqrt.pop %v752
        %v769 = vrsqrt.pop %v753
        %v770 = vrsqrt.pop %v754
        %v771 = vrsqrt.pop %v755
        %v772 = vrsqrt.pop %v756
        %v773 = vrsqrt.pop %v757
        %v774 = vrsqrt.pop %v758
        %v775 = vrsqrt.pop %v759
        %v776 = vrsqrt.pop %v760
        %v777 = vrsqrt.pop %v761
        %v778 = vmul.f32 %v666, %v762
        %v779 = vmul.f32 %v667, %v763
        %v780 = vmul.f32 %v668, %v764
        %v781 = vmul.f32 %v669, %v765
        %v782 = vmul.f32 %v670, %v766
        %v783 = vmul.f32 %v671, %v767
        %v784 = vmul.f32 %v672, %v768
        %v785 = vmul.f32 %v673, %v769
        %v786 = vmul.f32 %v674, %v770
        %v787 = vmul.f32 %v675, %v771
        %v788 = vmul.f32 %v676, %v772
        %v789 = vmul.f32 %v677, %v773
        %v790 = vmul.f32 %v678, %v774
        %v791 = vmul.f32 %v679, %v775
        %v792 = vmul.f32 %v680, %v776
        %v793 = vmul.f32 %v681, %v777
        %v795 = vlaneseq
        %v796 = vshrl.u32 %v795, 7
        %v797 = vsub.s32 0, %v796
        %v798 = vrot.slane %v586, %v797
        %v800 = vmul.f32 %v778, %v798
        %v801 = vmul.f32 %v779, %v798
        %v802 = vmul.f32 %v780, %v798
        %v803 = vmul.f32 %v781, %v798
        %v804 = vmul.f32 %v782, %v798
        %v805 = vmul.f32 %v783, %v798
        %v806 = vmul.f32 %v784, %v798
        %v807 = vmul.f32 %v785, %v798
        %v808 = vmul.f32 %v786, %v798
        %v809 = vmul.f32 %v787, %v798
        %v810 = vmul.f32 %v788, %v798
        %v811 = vmul.f32 %v789, %v798
        %v812 = vmul.f32 %v790, %v798
        %v813 = vmul.f32 %v791, %v798
        %v814 = vmul.f32 %v792, %v798
        %v815 = vmul.f32 %v793, %v798
        %v817 = vlaneseq
        %v818 = vshrl.u32 %v817, 7
        %v819 = vsub.s32 0, %v818
        %v820 = vrot.slane %v587, %v819
        %v822 = vadd.f32 %v800, %v820
        %v823 = vadd.f32 %v801, %v820
        %v824 = vadd.f32 %v802, %v820
        %v825 = vadd.f32 %v803, %v820
        %v826 = vadd.f32 %v804, %v820
        %v827 = vadd.f32 %v805, %v820
        %v828 = vadd.f32 %v806, %v820
        %v829 = vadd.f32 %v807, %v820
        %v830 = vadd.f32 %v808, %v820
        %v831 = vadd.f32 %v809, %v820
        %v832 = vadd.f32 %v810, %v820
        %v833 = vadd.f32 %v811, %v820
        %v834 = vadd.f32 %v812, %v820
        %v835 = vadd.f32 %v813, %v820
        %v836 = vadd.f32 %v814, %v820
        %v837 = vadd.f32 %v815, %v820
        %v838 = vpack.c.bf16 %v823, %v822
        %v839 = vpack.c.bf16 %v825, %v824
        %v840 = vpack.c.bf16 %v827, %v826
        %v841 = vpack.c.bf16 %v829, %v828
        %v842 = vpack.c.bf16 %v831, %v830
        %v843 = vpack.c.bf16 %v833, %v832
        %v844 = vpack.c.bf16 %v835, %v834
        %v845 = vpack.c.bf16 %v837, %v836
        %v846 = vld [vmem:[#allocation8] sm:$0xf]
        %v847 = vld [vmem:[#allocation8 + $0x4] sm:$0xf]
        %v848 = vld [vmem:[#allocation8 + $0x8] sm:$0xf]
        %v849 = vld [vmem:[#allocation8 + $0xc] sm:$0xf]
        %v850 = vld [vmem:[#allocation8 + $0x10] sm:$0xf]
        %v851 = vld [vmem:[#allocation8 + $0x14] sm:$0xf]
        %v852 = vld [vmem:[#allocation8 + $0x18] sm:$0xf]
        %v853 = vld [vmem:[#allocation8 + $0x1c] sm:$0xf]
        %v854 = vld [vmem:[#allocation8 + $0x20] sm:$0xf]
        %v855 = vld [vmem:[#allocation8 + $0x24] sm:$0xf]
        %v856 = vld [vmem:[#allocation8 + $0x28] sm:$0xf]
        %v857 = vld [vmem:[#allocation8 + $0x2c] sm:$0xf]
        %v858 = vld [vmem:[#allocation8 + $0x30] sm:$0xf]
        %v859 = vld [vmem:[#allocation8 + $0x34] sm:$0xf]
        %v860 = vld [vmem:[#allocation8 + $0x38] sm:$0xf]
        %v861 = vld [vmem:[#allocation8 + $0x3c] sm:$0xf]
        %v878 = vunpack.c.l.b16 %v846
        %v879 = vunpack.c.l.b16 %v847
        %v880 = vunpack.c.l.b16 %v848
        %v881 = vunpack.c.l.b16 %v849
        %v882 = vunpack.c.l.b16 %v850
        %v883 = vunpack.c.l.b16 %v851
        %v884 = vunpack.c.l.b16 %v852
        %v885 = vunpack.c.l.b16 %v853
        %v886 = vunpack.c.l.b16 %v854
        %v887 = vunpack.c.l.b16 %v855
        %v888 = vunpack.c.l.b16 %v856
        %v889 = vunpack.c.l.b16 %v857
        %v890 = vunpack.c.l.b16 %v858
        %v891 = vunpack.c.l.b16 %v859
        %v892 = vunpack.c.l.b16 %v860
        %v893 = vunpack.c.l.b16 %v861
        %v894 = vpack.c.b16 %v879, %v878
        %v895 = vpack.c.b16 %v881, %v880
        %v896 = vpack.c.b16 %v883, %v882
        %v897 = vpack.c.b16 %v885, %v884
        %v898 = vpack.c.b16 %v887, %v886
        %v899 = vpack.c.b16 %v889, %v888
        %v900 = vpack.c.b16 %v891, %v890
        %v901 = vpack.c.b16 %v893, %v892
        %910 = vmatprep.subr.bf16.mxu0 0
        %911 = vmatpush1.bf16.msra.mxu0 %v901
        %912 = vmatprep.subr.bf16.mxu0 0
        %913 = vmatpush1.bf16.msra.mxu0 %v900
        %914 = vmatprep.subr.bf16.mxu0 0
        %915 = vmatpush1.bf16.msra.mxu0 %v899
        %916 = vmatprep.subr.bf16.mxu0 0
        %917 = vmatpush1.bf16.msra.mxu0 %v898
        %918 = vmatprep.subr.bf16.mxu0 0
        %919 = vmatpush1.bf16.msra.mxu0 %v897
        %920 = vmatprep.subr.bf16.mxu0 0
        %921 = vmatpush1.bf16.msra.mxu0 %v896
        %922 = vmatprep.subr.bf16.mxu0 0
        %923 = vmatpush1.bf16.msra.mxu0 %v895
        %924 = vmatprep.subr.bf16.mxu0 0
        %925 = vmatpush1.bf16.msra.mxu0 %v894
        %926 = vmatprep.subr.bf16.mxu0 0
        %927 = vmatpush2.bf16.msra.mxu0 0
        %928 = vmatprep.subr.bf16.mxu0 0
        %929 = vmatpush2.bf16.msra.mxu0 0
        %930 = vmatprep.subr.bf16.mxu0 0
        %931 = vmatpush2.bf16.msra.mxu0 0
        %932 = vmatprep.subr.bf16.mxu0 0
        %933 = vmatpush2.bf16.msra.mxu0 0
        %934 = vmatprep.subr.bf16.mxu0 0
        %935 = vmatpush2.bf16.msra.mxu0 0
        %936 = vmatprep.subr.bf16.mxu0 0
        %937 = vmatpush2.bf16.msra.mxu0 0
        %938 = vmatprep.subr.bf16.mxu0 0
        %939 = vmatpush2.bf16.msra.mxu0 0
        %940 = vmatprep.subr.bf16.mxu0 0
        %941 = vmatpush2.bf16.msra.mxu0 0
        %942 = vmatprep.mubr.bf16.mxu0 0
        %943 = vmatmul.mubr.bf16.gmra.mxu0 %v838
        %v944 = vpop.f32.mrf.mxu0
        %v945 = vadd.f32 0.0, %v944
        %v946 = vpop.f32.mrf.mxu0
        %v947 = vpop.f32.mrf.mxu0
        %v948 = vadd.f32 0.0, %v947
        %v949 = vpop.f32.mrf.mxu0
        %950 = vmatprep.mubr.bf16.mxu0 0
        %951 = vmatmul.mubr.bf16.gmra.mxu0 %v839
        %v952 = vpop.f32.mrf.mxu0
        %v953 = vadd.f32 0.0, %v952
        %v954 = vpop.f32.mrf.mxu0
        %v955 = vpop.f32.mrf.mxu0
        %v956 = vadd.f32 0.0, %v955
        %v957 = vpop.f32.mrf.mxu0
        %958 = vmatprep.mubr.bf16.mxu0 0
        %959 = vmatmul.mubr.bf16.gmra.mxu0 %v840
        %v960 = vpop.f32.mrf.mxu0
        %v961 = vadd.f32 0.0, %v960
        %v962 = vpop.f32.mrf.mxu0
        %v963 = vpop.f32.mrf.mxu0
        %v964 = vadd.f32 0.0, %v963
        %v965 = vpop.f32.mrf.mxu0
        %966 = vmatprep.mubr.bf16.mxu0 0
        %967 = vmatmul.mubr.bf16.gmra.mxu0 %v841
        %v968 = vpop.f32.mrf.mxu0
        %v969 = vadd.f32 0.0, %v968
        %v970 = vpop.f32.mrf.mxu0
        %v971 = vpop.f32.mrf.mxu0
        %v972 = vadd.f32 0.0, %v971
        %v973 = vpop.f32.mrf.mxu0
        %974 = vmatprep.mubr.bf16.mxu0 0
        %975 = vmatmul.mubr.bf16.gmra.mxu0 %v842
        %v976 = vpop.f32.mrf.mxu0
        %v977 = vadd.f32 0.0, %v976
        %v978 = vpop.f32.mrf.mxu0
        %v979 = vpop.f32.mrf.mxu0
        %v980 = vadd.f32 0.0, %v979
        %v981 = vpop.f32.mrf.mxu0
        %982 = vmatprep.mubr.bf16.mxu0 0
        %983 = vmatmul.mubr.bf16.gmra.mxu0 %v843
        %v984 = vpop.f32.mrf.mxu0
        %v985 = vadd.f32 0.0, %v984
        %v986 = vpop.f32.mrf.mxu0
        %v987 = vpop.f32.mrf.mxu0
        %v988 = vadd.f32 0.0, %v987
        %v989 = vpop.f32.mrf.mxu0
        %990 = vmatprep.mubr.bf16.mxu0 0
        %991 = vmatmul.mubr.bf16.gmra.mxu0 %v844
        %v992 = vpop.f32.mrf.mxu0
        %v993 = vadd.f32 0.0, %v992
        %v994 = vpop.f32.mrf.mxu0
        %v995 = vpop.f32.mrf.mxu0
        %v996 = vadd.f32 0.0, %v995
        %v997 = vpop.f32.mrf.mxu0
        %998 = vmatprep.mubr.bf16.mxu0 0
        %999 = vmatmul.mubr.bf16.gmra.mxu0 %v845
        %v1000 = vpop.f32.mrf.mxu0
        %v1001 = vadd.f32 0.0, %v1000
        %v1002 = vpop.f32.mrf.mxu0
        %v1003 = vpop.f32.mrf.mxu0
        %v1004 = vadd.f32 0.0, %v1003
        %v1005 = vpop.f32.mrf.mxu0
        %1006 = vdwg.mxu0
        %v1007 = vlaneseq
        %v1008 = vshrl.u32 %v1007, 7
        %v1009 = vadd.s32 %v1008, 8
        %v1010 = vadd.s32 %v1008, 16
        %v1011 = vadd.s32 %v1008, 24
        %v1012 = vadd.s32 %v1008, 32
        %v1013 = vadd.s32 %v1008, 40
        %v1014 = vadd.s32 %v1008, 48
        %v1015 = vadd.s32 %v1008, 56
        %v1016 = vrot.slane %v945, 7
        %v1017 = vrot.slane %v948, 7
        %v1018 = vrot.slane %v953, 7
        %v1019 = vrot.slane %v956, 7
        %v1020 = vrot.slane %v961, 7
        %v1021 = vrot.slane %v964, 7
        %v1022 = vrot.slane %v969, 7
        %v1023 = vrot.slane %v972, 7
        %v1024 = vrot.slane %v977, 7
        %v1025 = vrot.slane %v980, 7
        %v1026 = vrot.slane %v985, 7
        %v1027 = vrot.slane %v988, 7
        %v1028 = vrot.slane %v993, 7
        %v1029 = vrot.slane %v996, 7
        %v1030 = vrot.slane %v1001, 7
        %v1031 = vrot.slane %v1004, 7
        %vm1032 = vcmp.lt.s32.totalorder %v1008, 1
        %v1033 = vsel %vm1032, %v1030, %v1031
        %v1034 = vsel %vm1032, %v1029, %v1030
        %v1035 = vsel %vm1032, %v1028, %v1029
        %v1036 = vsel %vm1032, %v1027, %v1028
        %v1037 = vsel %vm1032, %v1026, %v1027
        %v1038 = vsel %vm1032, %v1025, %v1026
        %v1039 = vsel %vm1032, %v1024, %v1025
        %v1040 = vsel %vm1032, %v1023, %v1024
        %v1041 = vsel %vm1032, %v1022, %v1023
        %v1042 = vsel %vm1032, %v1021, %v1022
        %v1043 = vsel %vm1032, %v1020, %v1021
        %v1044 = vsel %vm1032, %v1019, %v1020
        %v1045 = vsel %vm1032, %v1018, %v1019
        %v1046 = vsel %vm1032, %v1017, %v1018
        %v1047 = vsel %vm1032, %v1016, %v1017
        %v1048 = vsel %vm1032, %v1031, %v1016
        %vm1049 = vcmp.ge.s32.totalorder %v1008, 1
        %vm1050 = vcmp.ge.s32.totalorder %v1009, 1
        %vm1051 = vcmp.ge.s32.totalorder %v1010, 1
        %vm1052 = vcmp.ge.s32.totalorder %v1011, 1
        %vm1053 = vcmp.ge.s32.totalorder %v1012, 1
        %vm1054 = vcmp.ge.s32.totalorder %v1013, 1
        %vm1055 = vcmp.ge.s32.totalorder %v1014, 1
        %vm1056 = vcmp.ge.s32.totalorder %v1015, 1
        %v1057 = vsel %vm1049, 1, 0
        %v1058 = vsel %vm1050, 1, 0
        %v1059 = vsel %vm1051, 1, 0
        %v1060 = vsel %vm1052, 1, 0
        %v1061 = vsel %vm1053, 1, 0
        %v1062 = vsel %vm1054, 1, 0
        %v1063 = vsel %vm1055, 1, 0
        %v1064 = vsel %vm1056, 1, 0
        %vm1065 = vcmp.eq.s32.totalorder %v1057, 1
        %vm1066 = vcmp.eq.s32.totalorder %v1058, 1
        %vm1067 = vcmp.eq.s32.totalorder %v1059, 1
        %vm1068 = vcmp.eq.s32.totalorder %v1060, 1
        %vm1069 = vcmp.eq.s32.totalorder %v1061, 1
        %vm1070 = vcmp.eq.s32.totalorder %v1062, 1
        %vm1071 = vcmp.eq.s32.totalorder %v1063, 1
        %vm1072 = vcmp.eq.s32.totalorder %v1064, 1
        %v1073 = vsel %vm1065, %v1048, 0.0
        %v1074 = vsel %vm1066, %v1047, 0.0
        %v1075 = vsel %vm1067, %v1046, 0.0
        %v1076 = vsel %vm1068, %v1045, 0.0
        %v1077 = vsel %vm1069, %v1044, 0.0
        %v1078 = vsel %vm1070, %v1043, 0.0
        %v1079 = vsel %vm1071, %v1042, 0.0
        %v1080 = vsel %vm1072, %v1041, 0.0
        %v1081 = vsel %vm1065, %v1040, 0.0
        %v1082 = vsel %vm1066, %v1039, 0.0
        %v1083 = vsel %vm1067, %v1038, 0.0
        %v1084 = vsel %vm1068, %v1037, 0.0
        %v1085 = vsel %vm1069, %v1036, 0.0
        %v1086 = vsel %vm1070, %v1035, 0.0
        %v1087 = vsel %vm1071, %v1034, 0.0
        %v1088 = vsel %vm1072, %v1033, 0.0
        %v1089 = vlaneseq
        %v1090 = vshrl.u32 %v1089, 7
        %v1091 = vsub.s32 0, %v1090
        %v1092 = vrot.slane %v593, %v1091
        %v1093 = vmul.f32 %v1092, %v1073
        %v1094 = vmul.f32 %v1092, %v1074
        %v1095 = vmul.f32 %v1092, %v1075
        %v1096 = vmul.f32 %v1092, %v1076
        %v1097 = vmul.f32 %v1092, %v1077
        %v1098 = vmul.f32 %v1092, %v1078
        %v1099 = vmul.f32 %v1092, %v1079
        %v1100 = vmul.f32 %v1092, %v1080
        %v1101 = vmul.f32 %v1092, %v1081
        %v1102 = vmul.f32 %v1092, %v1082
        %v1103 = vmul.f32 %v1092, %v1083
        %v1104 = vmul.f32 %v1092, %v1084
        %v1105 = vmul.f32 %v1092, %v1085
        %v1106 = vmul.f32 %v1092, %v1086
        %v1107 = vmul.f32 %v1092, %v1087
        %v1108 = vmul.f32 %v1092, %v1088
        %v1109 = vadd.f32 %v945, %v1093
        %v1110 = vadd.f32 %v948, %v1094
        %v1111 = vadd.f32 %v953, %v1095
        %v1112 = vadd.f32 %v956, %v1096
        %v1113 = vadd.f32 %v961, %v1097
        %v1114 = vadd.f32 %v964, %v1098
        %v1115 = vadd.f32 %v969, %v1099
        %v1116 = vadd.f32 %v972, %v1100
        %v1117 = vadd.f32 %v977, %v1101
        %v1118 = vadd.f32 %v980, %v1102
        %v1119 = vadd.f32 %v985, %v1103
        %v1120 = vadd.f32 %v988, %v1104
        %v1121 = vadd.f32 %v993, %v1105
        %v1122 = vadd.f32 %v996, %v1106
        %v1123 = vadd.f32 %v1001, %v1107
        %v1124 = vadd.f32 %v1004, %v1108
        %v1125 = vrot.slane %v1109, 6
        %v1126 = vrot.slane %v1110, 6
        %v1127 = vrot.slane %v1111, 6
        %v1128 = vrot.slane %v1112, 6
        %v1129 = vrot.slane %v1113, 6
        %v1130 = vrot.slane %v1114, 6
        %v1131 = vrot.slane %v1115, 6
        %v1132 = vrot.slane %v1116, 6
        %v1133 = vrot.slane %v1117, 6
        %v1134 = vrot.slane %v1118, 6
        %v1135 = vrot.slane %v1119, 6
        %v1136 = vrot.slane %v1120, 6
        %v1137 = vrot.slane %v1121, 6
        %v1138 = vrot.slane %v1122, 6
        %v1139 = vrot.slane %v1123, 6
        %v1140 = vrot.slane %v1124, 6
        %vm1141 = vcmp.lt.s32.totalorder %v1008, 2
        %v1142 = vsel %vm1141, %v1139, %v1140
        %v1143 = vsel %vm1141, %v1138, %v1139
        %v1144 = vsel %vm1141, %v1137, %v1138
        %v1145 = vsel %vm1141, %v1136, %v1137
        %v1146 = vsel %vm1141, %v1135, %v1136
        %v1147 = vsel %vm1141, %v1134, %v1135
        %v1148 = vsel %vm1141, %v1133, %v1134
        %v1149 = vsel %vm1141, %v1132, %v1133
        %v1150 = vsel %vm1141, %v1131, %v1132
        %v1151 = vsel %vm1141, %v1130, %v1131
        %v1152 = vsel %vm1141, %v1129, %v1130
        %v1153 = vsel %vm1141, %v1128, %v1129
        %v1154 = vsel %vm1141, %v1127, %v1128
        %v1155 = vsel %vm1141, %v1126, %v1127
        %v1156 = vsel %vm1141, %v1125, %v1126
        %v1157 = vsel %vm1141, %v1140, %v1125
        %vm1158 = vcmp.ge.s32.totalorder %v1008, 2
        %vm1159 = vcmp.ge.s32.totalorder %v1009, 2
        %vm1160 = vcmp.ge.s32.totalorder %v1010, 2
        %vm1161 = vcmp.ge.s32.totalorder %v1011, 2
        %vm1162 = vcmp.ge.s32.totalorder %v1012, 2
        %vm1163 = vcmp.ge.s32.totalorder %v1013, 2
        %vm1164 = vcmp.ge.s32.totalorder %v1014, 2
        %vm1165 = vcmp.ge.s32.totalorder %v1015, 2
        %v1166 = vsel %vm1158, 1, 0
        %v1167 = vsel %vm1159, 1, 0
        %v1168 = vsel %vm1160, 1, 0
        %v1169 = vsel %vm1161, 1, 0
        %v1170 = vsel %vm1162, 1, 0
        %v1171 = vsel %vm1163, 1, 0
        %v1172 = vsel %vm1164, 1, 0
        %v1173 = vsel %vm1165, 1, 0
        %vm1174 = vcmp.eq.s32.totalorder %v1166, 1
        %vm1175 = vcmp.eq.s32.totalorder %v1167, 1
        %vm1176 = vcmp.eq.s32.totalorder %v1168, 1
        %vm1177 = vcmp.eq.s32.totalorder %v1169, 1
        %vm1178 = vcmp.eq.s32.totalorder %v1170, 1
        %vm1179 = vcmp.eq.s32.totalorder %v1171, 1
        %vm1180 = vcmp.eq.s32.totalorder %v1172, 1
        %vm1181 = vcmp.eq.s32.totalorder %v1173, 1
        %v1182 = vsel %vm1174, %v1157, 0.0
        %v1183 = vsel %vm1175, %v1156, 0.0
        %v1184 = vsel %vm1176, %v1155, 0.0
        %v1185 = vsel %vm1177, %v1154, 0.0
        %v1186 = vsel %vm1178, %v1153, 0.0
        %v1187 = vsel %vm1179, %v1152, 0.0
        %v1188 = vsel %vm1180, %v1151, 0.0
        %v1189 = vsel %vm1181, %v1150, 0.0
        %v1190 = vsel %vm1174, %v1149, 0.0
        %v1191 = vsel %vm1175, %v1148, 0.0
        %v1192 = vsel %vm1176, %v1147, 0.0
        %v1193 = vsel %vm1177, %v1146, 0.0
        %v1194 = vsel %vm1178, %v1145, 0.0
        %v1195 = vsel %vm1179, %v1144, 0.0
        %v1196 = vsel %vm1180, %v1143, 0.0
        %v1197 = vsel %vm1181, %v1142, 0.0
        %v1198 = vlaneseq
        %v1199 = vshrl.u32 %v1198, 7
        %v1200 = vsub.s32 1, %v1199
        %v1201 = vrot.slane %v593, %v1200
        %v1202 = vmul.f32 %v1201, %v1182
        %v1203 = vmul.f32 %v1201, %v1183
        %v1204 = vmul.f32 %v1201, %v1184
        %v1205 = vmul.f32 %v1201, %v1185
        %v1206 = vmul.f32 %v1201, %v1186
        %v1207 = vmul.f32 %v1201, %v1187
        %v1208 = vmul.f32 %v1201, %v1188
        %v1209 = vmul.f32 %v1201, %v1189
        %v1210 = vmul.f32 %v1201, %v1190
        %v1211 = vmul.f32 %v1201, %v1191
        %v1212 = vmul.f32 %v1201, %v1192
        %v1213 = vmul.f32 %v1201, %v1193
        %v1214 = vmul.f32 %v1201, %v1194
        %v1215 = vmul.f32 %v1201, %v1195
        %v1216 = vmul.f32 %v1201, %v1196
        %v1217 = vmul.f32 %v1201, %v1197
        %v1218 = vadd.f32 %v1109, %v1202
        %v1219 = vadd.f32 %v1110, %v1203
        %v1220 = vadd.f32 %v1111, %v1204
        %v1221 = vadd.f32 %v1112, %v1205
        %v1222 = vadd.f32 %v1113, %v1206
        %v1223 = vadd.f32 %v1114, %v1207
        %v1224 = vadd.f32 %v1115, %v1208
        %v1225 = vadd.f32 %v1116, %v1209
        %v1226 = vadd.f32 %v1117, %v1210
        %v1227 = vadd.f32 %v1118, %v1211
        %v1228 = vadd.f32 %v1119, %v1212
        %v1229 = vadd.f32 %v1120, %v1213
        %v1230 = vadd.f32 %v1121, %v1214
        %v1231 = vadd.f32 %v1122, %v1215
        %v1232 = vadd.f32 %v1123, %v1216
        %v1233 = vadd.f32 %v1124, %v1217
        %v1234 = vrot.slane %v1218, 4
        %v1235 = vrot.slane %v1219, 4
        %v1236 = vrot.slane %v1220, 4
        %v1237 = vrot.slane %v1221, 4
        %v1238 = vrot.slane %v1222, 4
        %v1239 = vrot.slane %v1223, 4
        %v1240 = vrot.slane %v1224, 4
        %v1241 = vrot.slane %v1225, 4
        %v1242 = vrot.slane %v1226, 4
        %v1243 = vrot.slane %v1227, 4
        %v1244 = vrot.slane %v1228, 4
        %v1245 = vrot.slane %v1229, 4
        %v1246 = vrot.slane %v1230, 4
        %v1247 = vrot.slane %v1231, 4
        %v1248 = vrot.slane %v1232, 4
        %v1249 = vrot.slane %v1233, 4
        %vm1250 = vcmp.lt.s32.totalorder %v1008, 4
        %v1251 = vsel %vm1250, %v1248, %v1249
        %v1252 = vsel %vm1250, %v1247, %v1248
        %v1253 = vsel %vm1250, %v1246, %v1247
        %v1254 = vsel %vm1250, %v1245, %v1246
        %v1255 = vsel %vm1250, %v1244, %v1245
        %v1256 = vsel %vm1250, %v1243, %v1244
        %v1257 = vsel %vm1250, %v1242, %v1243
        %v1258 = vsel %vm1250, %v1241, %v1242
        %v1259 = vsel %vm1250, %v1240, %v1241
        %v1260 = vsel %vm1250, %v1239, %v1240
        %v1261 = vsel %vm1250, %v1238, %v1239
        %v1262 = vsel %vm1250, %v1237, %v1238
        %v1263 = vsel %vm1250, %v1236, %v1237
        %v1264 = vsel %vm1250, %v1235, %v1236
        %v1265 = vsel %vm1250, %v1234, %v1235
        %v1266 = vsel %vm1250, %v1249, %v1234
        %vm1267 = vcmp.ge.s32.totalorder %v1008, 4
        %vm1268 = vcmp.ge.s32.totalorder %v1009, 4
        %vm1269 = vcmp.ge.s32.totalorder %v1010, 4
        %vm1270 = vcmp.ge.s32.totalorder %v1011, 4
        %vm1271 = vcmp.ge.s32.totalorder %v1012, 4
        %vm1272 = vcmp.ge.s32.totalorder %v1013, 4
        %vm1273 = vcmp.ge.s32.totalorder %v1014, 4
        %vm1274 = vcmp.ge.s32.totalorder %v1015, 4
        %v1275 = vsel %vm1267, 1, 0
        %v1276 = vsel %vm1268, 1, 0
        %v1277 = vsel %vm1269, 1, 0
        %v1278 = vsel %vm1270, 1, 0
        %v1279 = vsel %vm1271, 1, 0
        %v1280 = vsel %vm1272, 1, 0
        %v1281 = vsel %vm1273, 1, 0
        %v1282 = vsel %vm1274, 1, 0
        %vm1283 = vcmp.eq.s32.totalorder %v1275, 1
        %vm1284 = vcmp.eq.s32.totalorder %v1276, 1
        %vm1285 = vcmp.eq.s32.totalorder %v1277, 1
        %vm1286 = vcmp.eq.s32.totalorder %v1278, 1
        %vm1287 = vcmp.eq.s32.totalorder %v1279, 1
        %vm1288 = vcmp.eq.s32.totalorder %v1280, 1
        %vm1289 = vcmp.eq.s32.totalorder %v1281, 1
        %vm1290 = vcmp.eq.s32.totalorder %v1282, 1
        %v1291 = vsel %vm1283, %v1266, 0.0
        %v1292 = vsel %vm1284, %v1265, 0.0
        %v1293 = vsel %vm1285, %v1264, 0.0
        %v1294 = vsel %vm1286, %v1263, 0.0
        %v1295 = vsel %vm1287, %v1262, 0.0
        %v1296 = vsel %vm1288, %v1261, 0.0
        %v1297 = vsel %vm1289, %v1260, 0.0
        %v1298 = vsel %vm1290, %v1259, 0.0
        %v1299 = vsel %vm1283, %v1258, 0.0
        %v1300 = vsel %vm1284, %v1257, 0.0
        %v1301 = vsel %vm1285, %v1256, 0.0
        %v1302 = vsel %vm1286, %v1255, 0.0
        %v1303 = vsel %vm1287, %v1254, 0.0
        %v1304 = vsel %vm1288, %v1253, 0.0
        %v1305 = vsel %vm1289, %v1252, 0.0
        %v1306 = vsel %vm1290, %v1251, 0.0
        %v1307 = vlaneseq
        %v1308 = vshrl.u32 %v1307, 7
        %v1309 = vsub.s32 3, %v1308
        %v1310 = vrot.slane %v593, %v1309
        %v1311 = vmul.f32 %v1310, %v1291
        %v1312 = vmul.f32 %v1310, %v1292
        %v1313 = vmul.f32 %v1310, %v1293
        %v1314 = vmul.f32 %v1310, %v1294
        %v1315 = vmul.f32 %v1310, %v1295
        %v1316 = vmul.f32 %v1310, %v1296
        %v1317 = vmul.f32 %v1310, %v1297
        %v1318 = vmul.f32 %v1310, %v1298
        %v1319 = vmul.f32 %v1310, %v1299
        %v1320 = vmul.f32 %v1310, %v1300
        %v1321 = vmul.f32 %v1310, %v1301
        %v1322 = vmul.f32 %v1310, %v1302
        %v1323 = vmul.f32 %v1310, %v1303
        %v1324 = vmul.f32 %v1310, %v1304
        %v1325 = vmul.f32 %v1310, %v1305
        %v1326 = vmul.f32 %v1310, %v1306
        %v1327 = vadd.f32 %v1218, %v1311
        %v1328 = vadd.f32 %v1219, %v1312
        %v1329 = vadd.f32 %v1220, %v1313
        %v1330 = vadd.f32 %v1221, %v1314
        %v1331 = vadd.f32 %v1222, %v1315
        %v1332 = vadd.f32 %v1223, %v1316
        %v1333 = vadd.f32 %v1224, %v1317
        %v1334 = vadd.f32 %v1225, %v1318
        %v1335 = vadd.f32 %v1226, %v1319
        %v1336 = vadd.f32 %v1227, %v1320
        %v1337 = vadd.f32 %v1228, %v1321
        %v1338 = vadd.f32 %v1229, %v1322
        %v1339 = vadd.f32 %v1230, %v1323
        %v1340 = vadd.f32 %v1231, %v1324
        %v1341 = vadd.f32 %v1232, %v1325
        %v1342 = vadd.f32 %v1233, %v1326
        %vm1343 = vcmp.ge.s32.totalorder %v1008, 8
        %vm1344 = vcmp.ge.s32.totalorder %v1009, 8
        %vm1345 = vcmp.ge.s32.totalorder %v1010, 8
        %vm1346 = vcmp.ge.s32.totalorder %v1011, 8
        %vm1347 = vcmp.ge.s32.totalorder %v1012, 8
        %vm1348 = vcmp.ge.s32.totalorder %v1013, 8
        %vm1349 = vcmp.ge.s32.totalorder %v1014, 8
        %vm1350 = vcmp.ge.s32.totalorder %v1015, 8
        %v1351 = vsel %vm1343, 1, 0
        %v1352 = vsel %vm1344, 1, 0
        %v1353 = vsel %vm1345, 1, 0
        %v1354 = vsel %vm1346, 1, 0
        %v1355 = vsel %vm1347, 1, 0
        %v1356 = vsel %vm1348, 1, 0
        %v1357 = vsel %vm1349, 1, 0
        %v1358 = vsel %vm1350, 1, 0
        %vm1359 = vcmp.eq.s32.totalorder %v1351, 1
        %vm1360 = vcmp.eq.s32.totalorder %v1352, 1
        %vm1361 = vcmp.eq.s32.totalorder %v1353, 1
        %vm1362 = vcmp.eq.s32.totalorder %v1354, 1
        %vm1363 = vcmp.eq.s32.totalorder %v1355, 1
        %vm1364 = vcmp.eq.s32.totalorder %v1356, 1
        %vm1365 = vcmp.eq.s32.totalorder %v1357, 1
        %vm1366 = vcmp.eq.s32.totalorder %v1358, 1
        %v1367 = vsel %vm1359, %v1342, 0.0
        %v1368 = vsel %vm1360, %v1327, 0.0
        %v1369 = vsel %vm1361, %v1328, 0.0
        %v1370 = vsel %vm1362, %v1329, 0.0
        %v1371 = vsel %vm1363, %v1330, 0.0
        %v1372 = vsel %vm1364, %v1331, 0.0
        %v1373 = vsel %vm1365, %v1332, 0.0
        %v1374 = vsel %vm1366, %v1333, 0.0
        %v1375 = vsel %vm1359, %v1334, 0.0
        %v1376 = vsel %vm1360, %v1335, 0.0
        %v1377 = vsel %vm1361, %v1336, 0.0
        %v1378 = vsel %vm1362, %v1337, 0.0
        %v1379 = vsel %vm1363, %v1338, 0.0
        %v1380 = vsel %vm1364, %v1339, 0.0
        %v1381 = vsel %vm1365, %v1340, 0.0
        %v1382 = vsel %vm1366, %v1341, 0.0
        %v1383 = vlaneseq
        %v1384 = vshrl.u32 %v1383, 7
        %v1385 = vsub.s32 7, %v1384
        %v1386 = vrot.slane %v593, %v1385
        %v1387 = vmul.f32 %v1386, %v1367
        %v1388 = vmul.f32 %v1386, %v1368
        %v1389 = vmul.f32 %v1386, %v1369
        %v1390 = vmul.f32 %v1386, %v1370
        %v1391 = vmul.f32 %v1386, %v1371
        %v1392 = vmul.f32 %v1386, %v1372
        %v1393 = vmul.f32 %v1386, %v1373
        %v1394 = vmul.f32 %v1386, %v1374
        %v1395 = vmul.f32 %v1386, %v1375
        %v1396 = vmul.f32 %v1386, %v1376
        %v1397 = vmul.f32 %v1386, %v1377
        %v1398 = vmul.f32 %v1386, %v1378
        %v1399 = vmul.f32 %v1386, %v1379
        %v1400 = vmul.f32 %v1386, %v1380
        %v1401 = vmul.f32 %v1386, %v1381
        %v1402 = vmul.f32 %v1386, %v1382
        %v1403 = vadd.f32 %v1327, %v1387
        %v1404 = vadd.f32 %v1328, %v1388
        %v1405 = vadd.f32 %v1329, %v1389
        %v1406 = vadd.f32 %v1330, %v1390
        %v1407 = vadd.f32 %v1331, %v1391
        %v1408 = vadd.f32 %v1332, %v1392
        %v1409 = vadd.f32 %v1333, %v1393
        %v1410 = vadd.f32 %v1334, %v1394
        %v1411 = vadd.f32 %v1335, %v1395
        %v1412 = vadd.f32 %v1336, %v1396
        %v1413 = vadd.f32 %v1337, %v1397
        %v1414 = vadd.f32 %v1338, %v1398
        %v1415 = vadd.f32 %v1339, %v1399
        %v1416 = vadd.f32 %v1340, %v1400
        %v1417 = vadd.f32 %v1341, %v1401
        %v1418 = vadd.f32 %v1342, %v1402
        %vm1419 = vcmp.ge.s32.totalorder %v1008, 16
        %vm1420 = vcmp.ge.s32.totalorder %v1009, 16
        %vm1421 = vcmp.ge.s32.totalorder %v1010, 16
        %vm1422 = vcmp.ge.s32.totalorder %v1011, 16
        %vm1423 = vcmp.ge.s32.totalorder %v1012, 16
        %vm1424 = vcmp.ge.s32.totalorder %v1013, 16
        %vm1425 = vcmp.ge.s32.totalorder %v1014, 16
        %vm1426 = vcmp.ge.s32.totalorder %v1015, 16
        %v1427 = vsel %vm1419, 1, 0
        %v1428 = vsel %vm1420, 1, 0
        %v1429 = vsel %vm1421, 1, 0
        %v1430 = vsel %vm1422, 1, 0
        %v1431 = vsel %vm1423, 1, 0
        %v1432 = vsel %vm1424, 1, 0
        %v1433 = vsel %vm1425, 1, 0
        %v1434 = vsel %vm1426, 1, 0
        %vm1435 = vcmp.eq.s32.totalorder %v1427, 1
        %vm1436 = vcmp.eq.s32.totalorder %v1428, 1
        %vm1437 = vcmp.eq.s32.totalorder %v1429, 1
        %vm1438 = vcmp.eq.s32.totalorder %v1430, 1
        %vm1439 = vcmp.eq.s32.totalorder %v1431, 1
        %vm1440 = vcmp.eq.s32.totalorder %v1432, 1
        %vm1441 = vcmp.eq.s32.totalorder %v1433, 1
        %vm1442 = vcmp.eq.s32.totalorder %v1434, 1
        %v1443 = vsel %vm1435, %v1417, 0.0
        %v1444 = vsel %vm1436, %v1418, 0.0
        %v1445 = vsel %vm1437, %v1403, 0.0
        %v1446 = vsel %vm1438, %v1404, 0.0
        %v1447 = vsel %vm1439, %v1405, 0.0
        %v1448 = vsel %vm1440, %v1406, 0.0
        %v1449 = vsel %vm1441, %v1407, 0.0
        %v1450 = vsel %vm1442, %v1408, 0.0
        %v1451 = vsel %vm1435, %v1409, 0.0
        %v1452 = vsel %vm1436, %v1410, 0.0
        %v1453 = vsel %vm1437, %v1411, 0.0
        %v1454 = vsel %vm1438, %v1412, 0.0
        %v1455 = vsel %vm1439, %v1413, 0.0
        %v1456 = vsel %vm1440, %v1414, 0.0
        %v1457 = vsel %vm1441, %v1415, 0.0
        %v1458 = vsel %vm1442, %v1416, 0.0
        %v1459 = vlaneseq
        %v1460 = vshrl.u32 %v1459, 7
        %v1461 = vsub.s32 7, %v1460
        %v1462 = vrot.slane %v594, %v1461
        %v1463 = vmul.f32 %v1462, %v1443
        %v1464 = vmul.f32 %v1462, %v1444
        %v1465 = vmul.f32 %v1462, %v1445
        %v1466 = vmul.f32 %v1462, %v1446
        %v1467 = vmul.f32 %v1462, %v1447
        %v1468 = vmul.f32 %v1462, %v1448
        %v1469 = vmul.f32 %v1462, %v1449
        %v1470 = vmul.f32 %v1462, %v1450
        %v1471 = vmul.f32 %v1462, %v1451
        %v1472 = vmul.f32 %v1462, %v1452
        %v1473 = vmul.f32 %v1462, %v1453
        %v1474 = vmul.f32 %v1462, %v1454
        %v1475 = vmul.f32 %v1462, %v1455
        %v1476 = vmul.f32 %v1462, %v1456
        %v1477 = vmul.f32 %v1462, %v1457
        %v1478 = vmul.f32 %v1462, %v1458
        %v1479 = vadd.f32 %v1403, %v1463
        %v1480 = vadd.f32 %v1404, %v1464
        %v1481 = vadd.f32 %v1405, %v1465
        %v1482 = vadd.f32 %v1406, %v1466
        %v1483 = vadd.f32 %v1407, %v1467
        %v1484 = vadd.f32 %v1408, %v1468
        %v1485 = vadd.f32 %v1409, %v1469
        %v1486 = vadd.f32 %v1410, %v1470
        %v1487 = vadd.f32 %v1411, %v1471
        %v1488 = vadd.f32 %v1412, %v1472
        %v1489 = vadd.f32 %v1413, %v1473
        %v1490 = vadd.f32 %v1414, %v1474
        %v1491 = vadd.f32 %v1415, %v1475
        %v1492 = vadd.f32 %v1416, %v1476
        %v1493 = vadd.f32 %v1417, %v1477
        %v1494 = vadd.f32 %v1418, %v1478
        %vm1495 = vcmp.ge.s32.totalorder %v1008, 32
        %vm1496 = vcmp.ge.s32.totalorder %v1009, 32
        %vm1497 = vcmp.ge.s32.totalorder %v1010, 32
        %vm1498 = vcmp.ge.s32.totalorder %v1011, 32
        %vm1499 = vcmp.ge.s32.totalorder %v1012, 32
        %vm1500 = vcmp.ge.s32.totalorder %v1013, 32
        %vm1501 = vcmp.ge.s32.totalorder %v1014, 32
        %vm1502 = vcmp.ge.s32.totalorder %v1015, 32
        %v1503 = vsel %vm1495, 1, 0
        %v1504 = vsel %vm1496, 1, 0
        %v1505 = vsel %vm1497, 1, 0
        %v1506 = vsel %vm1498, 1, 0
        %v1507 = vsel %vm1499, 1, 0
        %v1508 = vsel %vm1500, 1, 0
        %v1509 = vsel %vm1501, 1, 0
        %v1510 = vsel %vm1502, 1, 0
        %vm1511 = vcmp.eq.s32.totalorder %v1503, 1
        %vm1512 = vcmp.eq.s32.totalorder %v1504, 1
        %vm1513 = vcmp.eq.s32.totalorder %v1505, 1
        %vm1514 = vcmp.eq.s32.totalorder %v1506, 1
        %vm1515 = vcmp.eq.s32.totalorder %v1507, 1
        %vm1516 = vcmp.eq.s32.totalorder %v1508, 1
        %vm1517 = vcmp.eq.s32.totalorder %v1509, 1
        %vm1518 = vcmp.eq.s32.totalorder %v1510, 1
        %v1519 = vsel %vm1511, %v1491, 0.0
        %v1520 = vsel %vm1512, %v1492, 0.0
        %v1521 = vsel %vm1513, %v1493, 0.0
        %v1522 = vsel %vm1514, %v1494, 0.0
        %v1523 = vsel %vm1515, %v1479, 0.0
        %v1524 = vsel %vm1516, %v1480, 0.0
        %v1525 = vsel %vm1517, %v1481, 0.0
        %v1526 = vsel %vm1518, %v1482, 0.0
        %v1527 = vsel %vm1511, %v1483, 0.0
        %v1528 = vsel %vm1512, %v1484, 0.0
        %v1529 = vsel %vm1513, %v1485, 0.0
        %v1530 = vsel %vm1514, %v1486, 0.0
        %v1531 = vsel %vm1515, %v1487, 0.0
        %v1532 = vsel %vm1516, %v1488, 0.0
        %v1533 = vsel %vm1517, %v1489, 0.0
        %v1534 = vsel %vm1518, %v1490, 0.0
        %v1535 = vlaneseq
        %v1536 = vshrl.u32 %v1535, 7
        %v1537 = vsub.s32 7, %v1536
        %v1538 = vrot.slane %v596, %v1537
        %v1539 = vmul.f32 %v1538, %v1519
        %v1540 = vmul.f32 %v1538, %v1520
        %v1541 = vmul.f32 %v1538, %v1521
        %v1542 = vmul.f32 %v1538, %v1522
        %v1543 = vmul.f32 %v1538, %v1523
        %v1544 = vmul.f32 %v1538, %v1524
        %v1545 = vmul.f32 %v1538, %v1525
        %v1546 = vmul.f32 %v1538, %v1526
        %v1547 = vmul.f32 %v1538, %v1527
        %v1548 = vmul.f32 %v1538, %v1528
        %v1549 = vmul.f32 %v1538, %v1529
        %v1550 = vmul.f32 %v1538, %v1530
        %v1551 = vmul.f32 %v1538, %v1531
        %v1552 = vmul.f32 %v1538, %v1532
        %v1553 = vmul.f32 %v1538, %v1533
        %v1554 = vmul.f32 %v1538, %v1534
        %v1555 = vadd.f32 %v1479, %v1539
        %v1556 = vadd.f32 %v1480, %v1540
        %v1557 = vadd.f32 %v1481, %v1541
        %v1558 = vadd.f32 %v1482, %v1542
        %v1559 = vadd.f32 %v1483, %v1543
        %v1560 = vadd.f32 %v1484, %v1544
        %v1561 = vadd.f32 %v1485, %v1545
        %v1562 = vadd.f32 %v1486, %v1546
        %v1563 = vadd.f32 %v1487, %v1547
        %v1564 = vadd.f32 %v1488, %v1548
        %v1565 = vadd.f32 %v1489, %v1549
        %v1566 = vadd.f32 %v1490, %v1550
        %v1567 = vadd.f32 %v1491, %v1551
        %v1568 = vadd.f32 %v1492, %v1552
        %v1569 = vadd.f32 %v1493, %v1553
        %v1570 = vadd.f32 %v1494, %v1554
        %v1571 = vld [vmem:[#allocation2] sm:$0x3]
        %v1574 = vunpack.c.l.s4 1966171168
        %v1575 = vunpack.c.0.s8 %v1574
        %v1576 = vlaneseq
        %v1577 = vshrl.u32 %v1576, 7
        %v1578 = vsub.s32 %v1575, %v1577
        %v1579 = vrot.slane %v1571, %v1578
        %v1580 = vcombine.high %v1579, %v1579
        %v1582 = vunpack.c.l.s4 1966171168
        %v1583 = vunpack.c.0.s8 %v1582
        %v1584 = vlaneseq
        %v1585 = vshrl.u32 %v1584, 7
        %v1586 = vsub.s32 %v1583, %v1585
        %v1587 = vrot.slane %v1579, %v1586
        %v1589 = vunpack.c.l.s4 1966171168
        %v1590 = vunpack.c.0.s8 %v1589
        %v1591 = vlaneseq
        %v1592 = vshrl.u32 %v1591, 7
        %v1593 = vsub.s32 %v1590, %v1592
        %v1594 = vrot.slane %v1580, %v1593
        %v1595 = vlaneseq
        %v1596 = vshrl.u32 %v1595, 7
        %v1597 = vsub.s32 0, %v1596
        %v1598 = vrot.slane %v1587, %v1597
        %v1599 = vlaneseq
        %v1600 = vshrl.u32 %v1599, 7
        %v1601 = vsub.s32 0, %v1600
        %v1602 = vrot.slane %v1594, %v1601
        %v1605 = vmul.f32 %v593, %v1598
        %v1606 = vmul.f32 %v594, %v1598
        %v1607 = vmul.f32 %v595, %v1598
        %v1608 = vmul.f32 %v596, %v1598
        %v1609 = vmul.f32 %v597, %v1598
        %v1610 = vmul.f32 %v598, %v1598
        %v1611 = vmul.f32 %v599, %v1598
        %v1612 = vmul.f32 %v600, %v1598
        %v1613 = vmul.f32 %v593, %v1602
        %v1614 = vmul.f32 %v594, %v1602
        %v1615 = vmul.f32 %v595, %v1602
        %v1616 = vmul.f32 %v596, %v1602
        %v1617 = vmul.f32 %v597, %v1602
        %v1618 = vmul.f32 %v598, %v1602
        %v1619 = vmul.f32 %v599, %v1602
        %v1620 = vmul.f32 %v600, %v1602
        %v1621 = vadd.f32 %v1555, %v1605
        %v1622 = vadd.f32 %v1556, %v1606
        %v1623 = vadd.f32 %v1557, %v1607
        %v1624 = vadd.f32 %v1558, %v1608
        %v1625 = vadd.f32 %v1559, %v1609
        %v1626 = vadd.f32 %v1560, %v1610
        %v1627 = vadd.f32 %v1561, %v1611
        %v1628 = vadd.f32 %v1562, %v1612
        %v1629 = vadd.f32 %v1563, %v1613
        %v1630 = vadd.f32 %v1564, %v1614
        %v1631 = vadd.f32 %v1565, %v1615
        %v1632 = vadd.f32 %v1566, %v1616
        %v1633 = vadd.f32 %v1567, %v1617
        %v1634 = vadd.f32 %v1568, %v1618
        %v1635 = vadd.f32 %v1569, %v1619
        %v1636 = vadd.f32 %v1570, %v1620
        %v1639 = vrot.slane %v1636, 7
        %1642 = vst [vmem:[#allocation2 - $0x7] sm:$0x80] %v1628
        %1643 = vst [vmem:[#allocation2 + $0x1] sm:$0x1] %v1639
        %v1644 = vpack.c.bf16 %v1622, %v1621
        %v1645 = vpack.c.bf16 %v1624, %v1623
        %v1646 = vpack.c.bf16 %v1626, %v1625
        %v1647 = vpack.c.bf16 %v1628, %v1627
        %v1648 = vpack.c.bf16 %v1630, %v1629
        %v1649 = vpack.c.bf16 %v1632, %v1631
        %v1650 = vpack.c.bf16 %v1634, %v1633
        %v1651 = vpack.c.bf16 %v1636, %v1635
        %v1652 = vld [vmem:[#allocation9] sm:$0xf]
        %v1653 = vld [vmem:[#allocation9 + $0x4] sm:$0xf]
        %v1654 = vld [vmem:[#allocation9 + $0x8] sm:$0xf]
        %v1655 = vld [vmem:[#allocation9 + $0xc] sm:$0xf]
        %v1656 = vld [vmem:[#allocation9 + $0x10] sm:$0xf]
        %v1657 = vld [vmem:[#allocation9 + $0x14] sm:$0xf]
        %v1658 = vld [vmem:[#allocation9 + $0x18] sm:$0xf]
        %v1659 = vld [vmem:[#allocation9 + $0x1c] sm:$0xf]
        %v1660 = vld [vmem:[#allocation9 + $0x20] sm:$0xf]
        %v1661 = vld [vmem:[#allocation9 + $0x24] sm:$0xf]
        %v1662 = vld [vmem:[#allocation9 + $0x28] sm:$0xf]
        %v1663 = vld [vmem:[#allocation9 + $0x2c] sm:$0xf]
        %v1664 = vld [vmem:[#allocation9 + $0x30] sm:$0xf]
        %v1665 = vld [vmem:[#allocation9 + $0x34] sm:$0xf]
        %v1666 = vld [vmem:[#allocation9 + $0x38] sm:$0xf]
        %v1667 = vld [vmem:[#allocation9 + $0x3c] sm:$0xf]
        %v1669 = vlaneseq
        %v1670 = vshrl.u32 %v1669, 7
        %v1671 = vsub.s32 0, %v1670
        %v1672 = vrot.slane %v590, %v1671
        %v1674 = vmul.f32 %v822, %v1672
        %v1675 = vmul.f32 %v823, %v1672
        %v1676 = vmul.f32 %v824, %v1672
        %v1677 = vmul.f32 %v825, %v1672
        %v1678 = vmul.f32 %v826, %v1672
        %v1679 = vmul.f32 %v827, %v1672
        %v1680 = vmul.f32 %v828, %v1672
        %v1681 = vmul.f32 %v829, %v1672
        %v1682 = vmul.f32 %v830, %v1672
        %v1683 = vmul.f32 %v831, %v1672
        %v1684 = vmul.f32 %v832, %v1672
        %v1685 = vmul.f32 %v833, %v1672
        %v1686 = vmul.f32 %v834, %v1672
        %v1687 = vmul.f32 %v835, %v1672
        %v1688 = vmul.f32 %v836, %v1672
        %v1689 = vmul.f32 %v837, %v1672
        %v1706 = vunpack.c.l.b16 %v1652
        %v1707 = vunpack.c.l.b16 %v1653
        %v1708 = vunpack.c.l.b16 %v1654
        %v1709 = vunpack.c.l.b16 %v1655
        %v1710 = vunpack.c.l.b16 %v1656
        %v1711 = vunpack.c.l.b16 %v1657
        %v1712 = vunpack.c.l.b16 %v1658
        %v1713 = vunpack.c.l.b16 %v1659
        %v1714 = vunpack.c.l.b16 %v1660
        %v1715 = vunpack.c.l.b16 %v1661
        %v1716 = vunpack.c.l.b16 %v1662
        %v1717 = vunpack.c.l.b16 %v1663
        %v1718 = vunpack.c.l.b16 %v1664
        %v1719 = vunpack.c.l.b16 %v1665
        %v1720 = vunpack.c.l.b16 %v1666
        %v1721 = vunpack.c.l.b16 %v1667
        %v1722 = vpack.c.b16 %v1707, %v1706
        %v1723 = vpack.c.b16 %v1709, %v1708
        %v1724 = vpack.c.b16 %v1711, %v1710
        %v1725 = vpack.c.b16 %v1713, %v1712
        %v1726 = vpack.c.b16 %v1715, %v1714
        %v1727 = vpack.c.b16 %v1717, %v1716
        %v1728 = vpack.c.b16 %v1719, %v1718
        %v1729 = vpack.c.b16 %v1721, %v1720
        %1738 = vmatprep.subr.bf16.mxu0 0
        %1739 = vmatpush1.bf16.msra.mxu0 %v1729
        %1740 = vmatprep.subr.bf16.mxu0 0
        %1741 = vmatpush1.bf16.msra.mxu0 %v1728
        %1742 = vmatprep.subr.bf16.mxu0 0
        %1743 = vmatpush1.bf16.msra.mxu0 %v1727
        %1744 = vmatprep.subr.bf16.mxu0 0
        %1745 = vmatpush1.bf16.msra.mxu0 %v1726
        %1746 = vmatprep.subr.bf16.mxu0 0
        %1747 = vmatpush1.bf16.msra.mxu0 %v1725
        %1748 = vmatprep.subr.bf16.mxu0 0
        %1749 = vmatpush1.bf16.msra.mxu0 %v1724
        %1750 = vmatprep.subr.bf16.mxu0 0
        %1751 = vmatpush1.bf16.msra.mxu0 %v1723
        %1752 = vmatprep.subr.bf16.mxu0 0
        %1753 = vmatpush1.bf16.msra.mxu0 %v1722
        %1754 = vmatprep.subr.bf16.mxu0 0
        %1755 = vmatpush2.bf16.msra.mxu0 0
        %1756 = vmatprep.subr.bf16.mxu0 0
        %1757 = vmatpush2.bf16.msra.mxu0 0
        %1758 = vmatprep.subr.bf16.mxu0 0
        %1759 = vmatpush2.bf16.msra.mxu0 0
        %1760 = vmatprep.subr.bf16.mxu0 0
        %1761 = vmatpush2.bf16.msra.mxu0 0
        %1762 = vmatprep.subr.bf16.mxu0 0
        %1763 = vmatpush2.bf16.msra.mxu0 0
        %1764 = vmatprep.subr.bf16.mxu0 0
        %1765 = vmatpush2.bf16.msra.mxu0 0
        %1766 = vmatprep.subr.bf16.mxu0 0
        %1767 = vmatpush2.bf16.msra.mxu0 0
        %1768 = vmatprep.subr.bf16.mxu0 0
        %1769 = vmatpush2.bf16.msra.mxu0 0
        %1770 = vmatprep.mubr.bf16.mxu0 0
        %1771 = vmatmul.mubr.bf16.gmra.mxu0 %v1644
        %v1772 = vpop.f32.mrf.mxu0
        %v1773 = vadd.f32 %v1674, %v1772
        %v1774 = vpop.f32.mrf.mxu0
        %v1775 = vpop.f32.mrf.mxu0
        %v1776 = vadd.f32 %v1675, %v1775
        %v1777 = vpop.f32.mrf.mxu0
        %1778 = vmatprep.mubr.bf16.mxu0 0
        %1779 = vmatmul.mubr.bf16.gmra.mxu0 %v1645
        %v1780 = vpop.f32.mrf.mxu0
        %v1781 = vadd.f32 %v1676, %v1780
        %v1782 = vpop.f32.mrf.mxu0
        %v1783 = vpop.f32.mrf.mxu0
        %v1784 = vadd.f32 %v1677, %v1783
        %v1785 = vpop.f32.mrf.mxu0
        %1786 = vmatprep.mubr.bf16.mxu0 0
        %1787 = vmatmul.mubr.bf16.gmra.mxu0 %v1646
        %v1788 = vpop.f32.mrf.mxu0
        %v1789 = vadd.f32 %v1678, %v1788
        %v1790 = vpop.f32.mrf.mxu0
        %v1791 = vpop.f32.mrf.mxu0
        %v1792 = vadd.f32 %v1679, %v1791
        %v1793 = vpop.f32.mrf.mxu0
        %1794 = vmatprep.mubr.bf16.mxu0 0
        %1795 = vmatmul.mubr.bf16.gmra.mxu0 %v1647
        %v1796 = vpop.f32.mrf.mxu0
        %v1797 = vadd.f32 %v1680, %v1796
        %v1798 = vpop.f32.mrf.mxu0
        %v1799 = vpop.f32.mrf.mxu0
        %v1800 = vadd.f32 %v1681, %v1799
        %v1801 = vpop.f32.mrf.mxu0
        %1802 = vmatprep.mubr.bf16.mxu0 0
        %1803 = vmatmul.mubr.bf16.gmra.mxu0 %v1648
        %v1804 = vpop.f32.mrf.mxu0
        %v1805 = vadd.f32 %v1682, %v1804
        %v1806 = vpop.f32.mrf.mxu0
        %v1807 = vpop.f32.mrf.mxu0
        %v1808 = vadd.f32 %v1683, %v1807
        %v1809 = vpop.f32.mrf.mxu0
        %1810 = vmatprep.mubr.bf16.mxu0 0
        %1811 = vmatmul.mubr.bf16.gmra.mxu0 %v1649
        %v1812 = vpop.f32.mrf.mxu0
        %v1813 = vadd.f32 %v1684, %v1812
        %v1814 = vpop.f32.mrf.mxu0
        %v1815 = vpop.f32.mrf.mxu0
        %v1816 = vadd.f32 %v1685, %v1815
        %v1817 = vpop.f32.mrf.mxu0
        %1818 = vmatprep.mubr.bf16.mxu0 0
        %1819 = vmatmul.mubr.bf16.gmra.mxu0 %v1650
        %v1820 = vpop.f32.mrf.mxu0
        %v1821 = vadd.f32 %v1686, %v1820
        %v1822 = vpop.f32.mrf.mxu0
        %v1823 = vpop.f32.mrf.mxu0
        %v1824 = vadd.f32 %v1687, %v1823
        %v1825 = vpop.f32.mrf.mxu0
        %1826 = vmatprep.mubr.bf16.mxu0 0
        %1827 = vmatmul.mubr.bf16.gmra.mxu0 %v1651
        %v1828 = vpop.f32.mrf.mxu0
        %v1829 = vadd.f32 %v1688, %v1828
        %v1830 = vpop.f32.mrf.mxu0
        %v1831 = vpop.f32.mrf.mxu0
        %v1832 = vadd.f32 %v1689, %v1831
        %v1833 = vpop.f32.mrf.mxu0
        %1834 = vdwg.mxu0
        %v1835 = vadd.f32 %v601, %v1773
        %v1836 = vadd.f32 %v602, %v1776
        %v1837 = vadd.f32 %v603, %v1781
        %v1838 = vadd.f32 %v604, %v1784
        %v1839 = vadd.f32 %v605, %v1789
        %v1840 = vadd.f32 %v606, %v1792
        %v1841 = vadd.f32 %v607, %v1797
        %v1842 = vadd.f32 %v608, %v1800
        %v1843 = vadd.f32 %v609, %v1805
        %v1844 = vadd.f32 %v610, %v1808
        %v1845 = vadd.f32 %v611, %v1813
        %v1846 = vadd.f32 %v612, %v1816
        %v1847 = vadd.f32 %v613, %v1821
        %v1848 = vadd.f32 %v614, %v1824
        %v1849 = vadd.f32 %v615, %v1829
        %v1850 = vadd.f32 %v616, %v1832
        %1851 = vadd.xlane.f32.xlu0 %v1835
        %v1852 = vpop.xlane.xlu0 %1851
        %1853 = vadd.xlane.f32.xlu0 %v1836
        %v1854 = vpop.xlane.xlu0 %1853
        %1855 = vadd.xlane.f32.xlu0 %v1837
        %v1856 = vpop.xlane.xlu0 %1855
        %1857 = vadd.xlane.f32.xlu0 %v1838
        %v1858 = vpop.xlane.xlu0 %1857
        %1859 = vadd.xlane.f32.xlu0 %v1839
        %v1860 = vpop.xlane.xlu0 %1859
        %1861 = vadd.xlane.f32.xlu0 %v1840
        %v1862 = vpop.xlane.xlu0 %1861
        %1863 = vadd.xlane.f32.xlu0 %v1841
        %v1864 = vpop.xlane.xlu0 %1863
        %1865 = vadd.xlane.f32.xlu0 %v1842
        %v1866 = vpop.xlane.xlu0 %1865
        %1867 = vadd.xlane.f32.xlu0 %v1843
        %v1868 = vpop.xlane.xlu0 %1867
        %1869 = vadd.xlane.f32.xlu0 %v1844
        %v1870 = vpop.xlane.xlu0 %1869
        %1871 = vadd.xlane.f32.xlu0 %v1845
        %v1872 = vpop.xlane.xlu0 %1871
        %1873 = vadd.xlane.f32.xlu0 %v1846
        %v1874 = vpop.xlane.xlu0 %1873
        %1875 = vadd.xlane.f32.xlu0 %v1847
        %v1876 = vpop.xlane.xlu0 %1875
        %1877 = vadd.xlane.f32.xlu0 %v1848
        %v1878 = vpop.xlane.xlu0 %1877
        %1879 = vadd.xlane.f32.xlu0 %v1849
        %v1880 = vpop.xlane.xlu0 %1879
        %1881 = vadd.xlane.f32.xlu0 %v1850
        %v1882 = vpop.xlane.xlu0 %1881
        %v1883 = vmul.f32 %v1852, %v649
        %v1884 = vmul.f32 %v1854, %v649
        %v1885 = vmul.f32 %v1856, %v649
        %v1886 = vmul.f32 %v1858, %v649
        %v1887 = vmul.f32 %v1860, %v649
        %v1888 = vmul.f32 %v1862, %v649
        %v1889 = vmul.f32 %v1864, %v649
        %v1890 = vmul.f32 %v1866, %v649
        %v1891 = vmul.f32 %v1868, %v649
        %v1892 = vmul.f32 %v1870, %v649
        %v1893 = vmul.f32 %v1872, %v649
        %v1894 = vmul.f32 %v1874, %v649
        %v1895 = vmul.f32 %v1876, %v649
        %v1896 = vmul.f32 %v1878, %v649
        %v1897 = vmul.f32 %v1880, %v649
        %v1898 = vmul.f32 %v1882, %v649
        %v1899 = vsub.f32 %v1835, %v1883
        %v1900 = vsub.f32 %v1836, %v1884
        %v1901 = vsub.f32 %v1837, %v1885
        %v1902 = vsub.f32 %v1838, %v1886
        %v1903 = vsub.f32 %v1839, %v1887
        %v1904 = vsub.f32 %v1840, %v1888
        %v1905 = vsub.f32 %v1841, %v1889
        %v1906 = vsub.f32 %v1842, %v1890
        %v1907 = vsub.f32 %v1843, %v1891
        %v1908 = vsub.f32 %v1844, %v1892
        %v1909 = vsub.f32 %v1845, %v1893
        %v1910 = vsub.f32 %v1846, %v1894
        %v1911 = vsub.f32 %v1847, %v1895
        %v1912 = vsub.f32 %v1848, %v1896
        %v1913 = vsub.f32 %v1849, %v1897
        %v1914 = vsub.f32 %v1850, %v1898
        %v1915 = vmul.f32 %v1899, %v1899
        %v1916 = vmul.f32 %v1900, %v1900
        %v1917 = vmul.f32 %v1901, %v1901
        %v1918 = vmul.f32 %v1902, %v1902
        %v1919 = vmul.f32 %v1903, %v1903
        %v1920 = vmul.f32 %v1904, %v1904
        %v1921 = vmul.f32 %v1905, %v1905
        %v1922 = vmul.f32 %v1906, %v1906
        %v1923 = vmul.f32 %v1907, %v1907
        %v1924 = vmul.f32 %v1908, %v1908
        %v1925 = vmul.f32 %v1909, %v1909
        %v1926 = vmul.f32 %v1910, %v1910
        %v1927 = vmul.f32 %v1911, %v1911
        %v1928 = vmul.f32 %v1912, %v1912
        %v1929 = vmul.f32 %v1913, %v1913
        %v1930 = vmul.f32 %v1914, %v1914
        %1931 = vadd.xlane.f32.xlu0 %v1915
        %v1932 = vpop.xlane.xlu0 %1931
        %1933 = vadd.xlane.f32.xlu0 %v1916
        %v1934 = vpop.xlane.xlu0 %1933
        %1935 = vadd.xlane.f32.xlu0 %v1917
        %v1936 = vpop.xlane.xlu0 %1935
        %1937 = vadd.xlane.f32.xlu0 %v1918
        %v1938 = vpop.xlane.xlu0 %1937
        %1939 = vadd.xlane.f32.xlu0 %v1919
        %v1940 = vpop.xlane.xlu0 %1939
        %1941 = vadd.xlane.f32.xlu0 %v1920
        %v1942 = vpop.xlane.xlu0 %1941
        %1943 = vadd.xlane.f32.xlu0 %v1921
        %v1944 = vpop.xlane.xlu0 %1943
        %1945 = vadd.xlane.f32.xlu0 %v1922
        %v1946 = vpop.xlane.xlu0 %1945
        %1947 = vadd.xlane.f32.xlu0 %v1923
        %v1948 = vpop.xlane.xlu0 %1947
        %1949 = vadd.xlane.f32.xlu0 %v1924
        %v1950 = vpop.xlane.xlu0 %1949
        %1951 = vadd.xlane.f32.xlu0 %v1925
        %v1952 = vpop.xlane.xlu0 %1951
        %1953 = vadd.xlane.f32.xlu0 %v1926
        %v1954 = vpop.xlane.xlu0 %1953
        %1955 = vadd.xlane.f32.xlu0 %v1927
        %v1956 = vpop.xlane.xlu0 %1955
        %1957 = vadd.xlane.f32.xlu0 %v1928
        %v1958 = vpop.xlane.xlu0 %1957
        %1959 = vadd.xlane.f32.xlu0 %v1929
        %v1960 = vpop.xlane.xlu0 %1959
        %1961 = vadd.xlane.f32.xlu0 %v1930
        %v1962 = vpop.xlane.xlu0 %1961
        %v1963 = vmul.f32 %v1932, %v649
        %v1964 = vmul.f32 %v1934, %v649
        %v1965 = vmul.f32 %v1936, %v649
        %v1966 = vmul.f32 %v1938, %v649
        %v1967 = vmul.f32 %v1940, %v649
        %v1968 = vmul.f32 %v1942, %v649
        %v1969 = vmul.f32 %v1944, %v649
        %v1970 = vmul.f32 %v1946, %v649
        %v1971 = vmul.f32 %v1948, %v649
        %v1972 = vmul.f32 %v1950, %v649
        %v1973 = vmul.f32 %v1952, %v649
        %v1974 = vmul.f32 %v1954, %v649
        %v1975 = vmul.f32 %v1956, %v649
        %v1976 = vmul.f32 %v1958, %v649
        %v1977 = vmul.f32 %v1960, %v649
        %v1978 = vmul.f32 %v1962, %v649
        %v1979 = vadd.f32 %v1963, 1e-05
        %v1980 = vadd.f32 %v1964, 1e-05
        %v1981 = vadd.f32 %v1965, 1e-05
        %v1982 = vadd.f32 %v1966, 1e-05
        %v1983 = vadd.f32 %v1967, 1e-05
        %v1984 = vadd.f32 %v1968, 1e-05
        %v1985 = vadd.f32 %v1969, 1e-05
        %v1986 = vadd.f32 %v1970, 1e-05
        %v1987 = vadd.f32 %v1971, 1e-05
        %v1988 = vadd.f32 %v1972, 1e-05
        %v1989 = vadd.f32 %v1973, 1e-05
        %v1990 = vadd.f32 %v1974, 1e-05
        %v1991 = vadd.f32 %v1975, 1e-05
        %v1992 = vadd.f32 %v1976, 1e-05
        %v1993 = vadd.f32 %v1977, 1e-05
        %v1994 = vadd.f32 %v1978, 1e-05
        %v1995 = vrsqrt.pop %v1979
        %v1996 = vrsqrt.pop %v1980
        %v1997 = vrsqrt.pop %v1981
        %v1998 = vrsqrt.pop %v1982
        %v1999 = vrsqrt.pop %v1983
        %v2000 = vrsqrt.pop %v1984
        %v2001 = vrsqrt.pop %v1985
        %v2002 = vrsqrt.pop %v1986
        %v2003 = vrsqrt.pop %v1987
        %v2004 = vrsqrt.pop %v1988
        %v2005 = vrsqrt.pop %v1989
        %v2006 = vrsqrt.pop %v1990
        %v2007 = vrsqrt.pop %v1991
        %v2008 = vrsqrt.pop %v1992
        %v2009 = vrsqrt.pop %v1993
        %v2010 = vrsqrt.pop %v1994
        %v2011 = vmul.f32 %v1899, %v1995
        %v2012 = vmul.f32 %v1900, %v1996
        %v2013 = vmul.f32 %v1901, %v1997
        %v2014 = vmul.f32 %v1902, %v1998
        %v2015 = vmul.f32 %v1903, %v1999
        %v2016 = vmul.f32 %v1904, %v2000
        %v2017 = vmul.f32 %v1905, %v2001
        %v2018 = vmul.f32 %v1906, %v2002
        %v2019 = vmul.f32 %v1907, %v2003
        %v2020 = vmul.f32 %v1908, %v2004
        %v2021 = vmul.f32 %v1909, %v2005
        %v2022 = vmul.f32 %v1910, %v2006
        %v2023 = vmul.f32 %v1911, %v2007
        %v2024 = vmul.f32 %v1912, %v2008
        %v2025 = vmul.f32 %v1913, %v2009
        %v2026 = vmul.f32 %v1914, %v2010
        %v2028 = vlaneseq
        %v2029 = vshrl.u32 %v2028, 7
        %v2030 = vsub.s32 0, %v2029
        %v2031 = vrot.slane %v588, %v2030
        %v2033 = vmul.f32 %v2011, %v2031
        %v2034 = vmul.f32 %v2012, %v2031
        %v2035 = vmul.f32 %v2013, %v2031
        %v2036 = vmul.f32 %v2014, %v2031
        %v2037 = vmul.f32 %v2015, %v2031
        %v2038 = vmul.f32 %v2016, %v2031
        %v2039 = vmul.f32 %v2017, %v2031
        %v2040 = vmul.f32 %v2018, %v2031
        %v2041 = vmul.f32 %v2019, %v2031
        %v2042 = vmul.f32 %v2020, %v2031
        %v2043 = vmul.f32 %v2021, %v2031
        %v2044 = vmul.f32 %v2022, %v2031
        %v2045 = vmul.f32 %v2023, %v2031
        %v2046 = vmul.f32 %v2024, %v2031
        %v2047 = vmul.f32 %v2025, %v2031
        %v2048 = vmul.f32 %v2026, %v2031
        %v2050 = vlaneseq
        %v2051 = vshrl.u32 %v2050, 7
        %v2052 = vsub.s32 0, %v2051
        %v2053 = vrot.slane %v589, %v2052
        %v2055 = vadd.f32 %v2033, %v2053
        %v2056 = vadd.f32 %v2034, %v2053
        %v2057 = vadd.f32 %v2035, %v2053
        %v2058 = vadd.f32 %v2036, %v2053
        %v2059 = vadd.f32 %v2037, %v2053
        %v2060 = vadd.f32 %v2038, %v2053
        %v2061 = vadd.f32 %v2039, %v2053
        %v2062 = vadd.f32 %v2040, %v2053
        %v2063 = vadd.f32 %v2041, %v2053
        %v2064 = vadd.f32 %v2042, %v2053
        %v2065 = vadd.f32 %v2043, %v2053
        %v2066 = vadd.f32 %v2044, %v2053
        %v2067 = vadd.f32 %v2045, %v2053
        %v2068 = vadd.f32 %v2046, %v2053
        %v2069 = vadd.f32 %v2047, %v2053
        %v2070 = vadd.f32 %v2048, %v2053
        %v2071 = vpack.c.bf16 %v2056, %v2055
        %v2072 = vpack.c.bf16 %v2058, %v2057
        %v2073 = vpack.c.bf16 %v2060, %v2059
        %v2074 = vpack.c.bf16 %v2062, %v2061
        %v2075 = vpack.c.bf16 %v2064, %v2063
        %v2076 = vpack.c.bf16 %v2066, %v2065
        %v2077 = vpack.c.bf16 %v2068, %v2067
        %v2078 = vpack.c.bf16 %v2070, %v2069
        %v2079 = vld [vmem:[#allocation11] sm:$0xf]
        %v2080 = vld [vmem:[#allocation11 + $0x4] sm:$0xf]
        %v2081 = vld [vmem:[#allocation11 + $0x8] sm:$0xf]
        %v2082 = vld [vmem:[#allocation11 + $0xc] sm:$0xf]
        %v2083 = vld [vmem:[#allocation11 + $0x10] sm:$0xf]
        %v2084 = vld [vmem:[#allocation11 + $0x14] sm:$0xf]
        %v2085 = vld [vmem:[#allocation11 + $0x18] sm:$0xf]
        %v2086 = vld [vmem:[#allocation11 + $0x1c] sm:$0xf]
        %v2087 = vld [vmem:[#allocation11 + $0x20] sm:$0xf]
        %v2088 = vld [vmem:[#allocation11 + $0x24] sm:$0xf]
        %v2089 = vld [vmem:[#allocation11 + $0x28] sm:$0xf]
        %v2090 = vld [vmem:[#allocation11 + $0x2c] sm:$0xf]
        %v2091 = vld [vmem:[#allocation11 + $0x30] sm:$0xf]
        %v2092 = vld [vmem:[#allocation11 + $0x34] sm:$0xf]
        %v2093 = vld [vmem:[#allocation11 + $0x38] sm:$0xf]
        %v2094 = vld [vmem:[#allocation11 + $0x3c] sm:$0xf]
        %v2096 = vlaneseq
        %v2097 = vshrl.u32 %v2096, 7
        %v2098 = vsub.s32 0, %v2097
        %v2099 = vrot.slane %v591, %v2098
        %v2117 = vunpack.c.l.b16 %v2079
        %v2118 = vunpack.c.l.b16 %v2080
        %v2119 = vunpack.c.l.b16 %v2081
        %v2120 = vunpack.c.l.b16 %v2082
        %v2121 = vunpack.c.l.b16 %v2083
        %v2122 = vunpack.c.l.b16 %v2084
        %v2123 = vunpack.c.l.b16 %v2085
        %v2124 = vunpack.c.l.b16 %v2086
        %v2125 = vunpack.c.l.b16 %v2087
        %v2126 = vunpack.c.l.b16 %v2088
        %v2127 = vunpack.c.l.b16 %v2089
        %v2128 = vunpack.c.l.b16 %v2090
        %v2129 = vunpack.c.l.b16 %v2091
        %v2130 = vunpack.c.l.b16 %v2092
        %v2131 = vunpack.c.l.b16 %v2093
        %v2132 = vunpack.c.l.b16 %v2094
        %v2133 = vpack.c.b16 %v2118, %v2117
        %v2134 = vpack.c.b16 %v2120, %v2119
        %v2135 = vpack.c.b16 %v2122, %v2121
        %v2136 = vpack.c.b16 %v2124, %v2123
        %v2137 = vpack.c.b16 %v2126, %v2125
        %v2138 = vpack.c.b16 %v2128, %v2127
        %v2139 = vpack.c.b16 %v2130, %v2129
        %v2140 = vpack.c.b16 %v2132, %v2131
        %2149 = vmatprep.subr.bf16.mxu0 0
        %2150 = vmatpush1.bf16.msra.mxu0 %v2140
        %2151 = vmatprep.subr.bf16.mxu0 0
        %2152 = vmatpush1.bf16.msra.mxu0 %v2139
        %2153 = vmatprep.subr.bf16.mxu0 0
        %2154 = vmatpush1.bf16.msra.mxu0 %v2138
        %2155 = vmatprep.subr.bf16.mxu0 0
        %2156 = vmatpush1.bf16.msra.mxu0 %v2137
        %2157 = vmatprep.subr.bf16.mxu0 0
        %2158 = vmatpush1.bf16.msra.mxu0 %v2136
        %2159 = vmatprep.subr.bf16.mxu0 0
        %2160 = vmatpush1.bf16.msra.mxu0 %v2135
        %2161 = vmatprep.subr.bf16.mxu0 0
        %2162 = vmatpush1.bf16.msra.mxu0 %v2134
        %2163 = vmatprep.subr.bf16.mxu0 0
        %2164 = vmatpush1.bf16.msra.mxu0 %v2133
        %2165 = vmatprep.subr.bf16.mxu0 0
        %2166 = vmatpush2.bf16.msra.mxu0 0
        %2167 = vmatprep.subr.bf16.mxu0 0
        %2168 = vmatpush2.bf16.msra.mxu0 0
        %2169 = vmatprep.subr.bf16.mxu0 0
        %2170 = vmatpush2.bf16.msra.mxu0 0
        %2171 = vmatprep.subr.bf16.mxu0 0
        %2172 = vmatpush2.bf16.msra.mxu0 0
        %2173 = vmatprep.subr.bf16.mxu0 0
        %2174 = vmatpush2.bf16.msra.mxu0 0
        %2175 = vmatprep.subr.bf16.mxu0 0
        %2176 = vmatpush2.bf16.msra.mxu0 0
        %2177 = vmatprep.subr.bf16.mxu0 0
        %2178 = vmatpush2.bf16.msra.mxu0 0
        %2179 = vmatprep.subr.bf16.mxu0 0
        %2180 = vmatpush2.bf16.msra.mxu0 0
        %2181 = vmatprep.mubr.bf16.mxu0 0
        %2182 = vmatmul.mubr.bf16.gmra.mxu0 %v2071
        %v2183 = vpop.f32.mrf.mxu0
        %v2184 = vadd.f32 %v2099, %v2183
        %v2185 = vpop.f32.mrf.mxu0
        %v2186 = vpop.f32.mrf.mxu0
        %v2187 = vadd.f32 %v2099, %v2186
        %v2188 = vpop.f32.mrf.mxu0
        %2189 = vmatprep.mubr.bf16.mxu0 0
        %2190 = vmatmul.mubr.bf16.gmra.mxu0 %v2072
        %v2191 = vpop.f32.mrf.mxu0
        %v2192 = vadd.f32 %v2099, %v2191
        %v2193 = vpop.f32.mrf.mxu0
        %v2194 = vpop.f32.mrf.mxu0
        %v2195 = vadd.f32 %v2099, %v2194
        %v2196 = vpop.f32.mrf.mxu0
        %2197 = vmatprep.mubr.bf16.mxu0 0
        %2198 = vmatmul.mubr.bf16.gmra.mxu0 %v2073
        %v2199 = vpop.f32.mrf.mxu0
        %v2200 = vadd.f32 %v2099, %v2199
        %v2201 = vpop.f32.mrf.mxu0
        %v2202 = vpop.f32.mrf.mxu0
        %v2203 = vadd.f32 %v2099, %v2202
        %v2204 = vpop.f32.mrf.mxu0
        %2205 = vmatprep.mubr.bf16.mxu0 0
        %2206 = vmatmul.mubr.bf16.gmra.mxu0 %v2074
        %v2207 = vpop.f32.mrf.mxu0
        %v2208 = vadd.f32 %v2099, %v2207
        %v2209 = vpop.f32.mrf.mxu0
        %v2210 = vpop.f32.mrf.mxu0
        %v2211 = vadd.f32 %v2099, %v2210
        %v2212 = vpop.f32.mrf.mxu0
        %2213 = vmatprep.mubr.bf16.mxu0 0
        %2214 = vmatmul.mubr.bf16.gmra.mxu0 %v2075
        %v2215 = vpop.f32.mrf.mxu0
        %v2216 = vadd.f32 %v2099, %v2215
        %v2217 = vpop.f32.mrf.mxu0
        %v2218 = vpop.f32.mrf.mxu0
        %v2219 = vadd.f32 %v2099, %v2218
        %v2220 = vpop.f32.mrf.mxu0
        %2221 = vmatprep.mubr.bf16.mxu0 0
        %2222 = vmatmul.mubr.bf16.gmra.mxu0 %v2076
        %v2223 = vpop.f32.mrf.mxu0
        %v2224 = vadd.f32 %v2099, %v2223
        %v2225 = vpop.f32.mrf.mxu0
        %v2226 = vpop.f32.mrf.mxu0
        %v2227 = vadd.f32 %v2099, %v2226
        %v2228 = vpop.f32.mrf.mxu0
        %2229 = vmatprep.mubr.bf16.mxu0 0
        %2230 = vmatmul.mubr.bf16.gmra.mxu0 %v2077
        %v2231 = vpop.f32.mrf.mxu0
        %v2232 = vadd.f32 %v2099, %v2231
        %v2233 = vpop.f32.mrf.mxu0
        %v2234 = vpop.f32.mrf.mxu0
        %v2235 = vadd.f32 %v2099, %v2234
        %v2236 = vpop.f32.mrf.mxu0
        %2237 = vmatprep.mubr.bf16.mxu0 0
        %2238 = vmatmul.mubr.bf16.gmra.mxu0 %v2078
        %v2239 = vpop.f32.mrf.mxu0
        %v2240 = vadd.f32 %v2099, %v2239
        %v2241 = vpop.f32.mrf.mxu0
        %v2242 = vpop.f32.mrf.mxu0
        %v2243 = vadd.f32 %v2099, %v2242
        %v2244 = vpop.f32.mrf.mxu0
        %2245 = vdwg.mxu0
        %v2246 = vmul.f32 %v2184, %v2184
        %v2247 = vmul.f32 %v2187, %v2187
        %v2248 = vmul.f32 %v2192, %v2192
        %v2249 = vmul.f32 %v2195, %v2195
        %v2250 = vmul.f32 %v2200, %v2200
        %v2251 = vmul.f32 %v2203, %v2203
        %v2252 = vmul.f32 %v2208, %v2208
        %v2253 = vmul.f32 %v2211, %v2211
        %v2254 = vmul.f32 %v2216, %v2216
        %v2255 = vmul.f32 %v2219, %v2219
        %v2256 = vmul.f32 %v2224, %v2224
        %v2257 = vmul.f32 %v2227, %v2227
        %v2258 = vmul.f32 %v2232, %v2232
        %v2259 = vmul.f32 %v2235, %v2235
        %v2260 = vmul.f32 %v2240, %v2240
        %v2261 = vmul.f32 %v2243, %v2243
        %v2262 = vmul.f32 %v2184, %v2246
        %v2263 = vmul.f32 %v2187, %v2247
        %v2264 = vmul.f32 %v2192, %v2248
        %v2265 = vmul.f32 %v2195, %v2249
        %v2266 = vmul.f32 %v2200, %v2250
        %v2267 = vmul.f32 %v2203, %v2251
        %v2268 = vmul.f32 %v2208, %v2252
        %v2269 = vmul.f32 %v2211, %v2253
        %v2270 = vmul.f32 %v2216, %v2254
        %v2271 = vmul.f32 %v2219, %v2255
        %v2272 = vmul.f32 %v2224, %v2256
        %v2273 = vmul.f32 %v2227, %v2257
        %v2274 = vmul.f32 %v2232, %v2258
        %v2275 = vmul.f32 %v2235, %v2259
        %v2276 = vmul.f32 %v2240, %v2260
        %v2277 = vmul.f32 %v2243, %v2261
        %v2278 = vmul.f32 %v2262, 0.044715
        %v2279 = vmul.f32 %v2263, 0.044715
        %v2280 = vmul.f32 %v2264, 0.044715
        %v2281 = vmul.f32 %v2265, 0.044715
        %v2282 = vmul.f32 %v2266, 0.044715
        %v2283 = vmul.f32 %v2267, 0.044715
        %v2284 = vmul.f32 %v2268, 0.044715
        %v2285 = vmul.f32 %v2269, 0.044715
        %v2286 = vmul.f32 %v2270, 0.044715
        %v2287 = vmul.f32 %v2271, 0.044715
        %v2288 = vmul.f32 %v2272, 0.044715
        %v2289 = vmul.f32 %v2273, 0.044715
        %v2290 = vmul.f32 %v2274, 0.044715
        %v2291 = vmul.f32 %v2275, 0.044715
        %v2292 = vmul.f32 %v2276, 0.044715
        %v2293 = vmul.f32 %v2277, 0.044715
        %v2294 = vadd.f32 %v2184, %v2278
        %v2295 = vadd.f32 %v2187, %v2279
        %v2296 = vadd.f32 %v2192, %v2280
        %v2297 = vadd.f32 %v2195, %v2281
        %v2298 = vadd.f32 %v2200, %v2282
        %v2299 = vadd.f32 %v2203, %v2283
        %v2300 = vadd.f32 %v2208, %v2284
        %v2301 = vadd.f32 %v2211, %v2285
        %v2302 = vadd.f32 %v2216, %v2286
        %v2303 = vadd.f32 %v2219, %v2287
        %v2304 = vadd.f32 %v2224, %v2288
        %v2305 = vadd.f32 %v2227, %v2289
        %v2306 = vadd.f32 %v2232, %v2290
        %v2307 = vadd.f32 %v2235, %v2291
        %v2308 = vadd.f32 %v2240, %v2292
        %v2309 = vadd.f32 %v2243, %v2293
        %v2310 = vmul.f32 %v2294, 0.7978846
        %v2311 = vmul.f32 %v2295, 0.7978846
        %v2312 = vmul.f32 %v2296, 0.7978846
        %v2313 = vmul.f32 %v2297, 0.7978846
        %v2314 = vmul.f32 %v2298, 0.7978846
        %v2315 = vmul.f32 %v2299, 0.7978846
        %v2316 = vmul.f32 %v2300, 0.7978846
        %v2317 = vmul.f32 %v2301, 0.7978846
        %v2318 = vmul.f32 %v2302, 0.7978846
        %v2319 = vmul.f32 %v2303, 0.7978846
        %v2320 = vmul.f32 %v2304, 0.7978846
        %v2321 = vmul.f32 %v2305, 0.7978846
        %v2322 = vmul.f32 %v2306, 0.7978846
        %v2323 = vmul.f32 %v2307, 0.7978846
        %v2324 = vmul.f32 %v2308, 0.7978846
        %v2325 = vmul.f32 %v2309, 0.7978846
        %v2326 = vtanh.pop %v2310
        %v2327 = vtanh.pop %v2311
        %v2328 = vtanh.pop %v2312
        %v2329 = vtanh.pop %v2313
        %v2330 = vtanh.pop %v2314
        %v2331 = vtanh.pop %v2315
        %v2332 = vtanh.pop %v2316
        %v2333 = vtanh.pop %v2317
        %v2334 = vtanh.pop %v2318
        %v2335 = vtanh.pop %v2319
        %v2336 = vtanh.pop %v2320
        %v2337 = vtanh.pop %v2321
        %v2338 = vtanh.pop %v2322
        %v2339 = vtanh.pop %v2323
        %v2340 = vtanh.pop %v2324
        %v2341 = vtanh.pop %v2325
        %v2342 = vadd.f32 %v2326, 1.0
        %v2343 = vadd.f32 %v2327, 1.0
        %v2344 = vadd.f32 %v2328, 1.0
        %v2345 = vadd.f32 %v2329, 1.0
        %v2346 = vadd.f32 %v2330, 1.0
        %v2347 = vadd.f32 %v2331, 1.0
        %v2348 = vadd.f32 %v2332, 1.0
        %v2349 = vadd.f32 %v2333, 1.0
        %v2350 = vadd.f32 %v2334, 1.0
        %v2351 = vadd.f32 %v2335, 1.0
        %v2352 = vadd.f32 %v2336, 1.0
        %v2353 = vadd.f32 %v2337, 1.0
        %v2354 = vadd.f32 %v2338, 1.0
        %v2355 = vadd.f32 %v2339, 1.0
        %v2356 = vadd.f32 %v2340, 1.0
        %v2357 = vadd.f32 %v2341, 1.0
        %v2358 = vmul.f32 %v2342, 0.5
        %v2359 = vmul.f32 %v2343, 0.5
        %v2360 = vmul.f32 %v2344, 0.5
        %v2361 = vmul.f32 %v2345, 0.5
        %v2362 = vmul.f32 %v2346, 0.5
        %v2363 = vmul.f32 %v2347, 0.5
        %v2364 = vmul.f32 %v2348, 0.5
        %v2365 = vmul.f32 %v2349, 0.5
        %v2366 = vmul.f32 %v2350, 0.5
        %v2367 = vmul.f32 %v2351, 0.5
        %v2368 = vmul.f32 %v2352, 0.5
        %v2369 = vmul.f32 %v2353, 0.5
        %v2370 = vmul.f32 %v2354, 0.5
        %v2371 = vmul.f32 %v2355, 0.5
        %v2372 = vmul.f32 %v2356, 0.5
        %v2373 = vmul.f32 %v2357, 0.5
        %v2374 = vmul.f32 %v2184, %v2358
        %v2375 = vmul.f32 %v2187, %v2359
        %v2376 = vmul.f32 %v2192, %v2360
        %v2377 = vmul.f32 %v2195, %v2361
        %v2378 = vmul.f32 %v2200, %v2362
        %v2379 = vmul.f32 %v2203, %v2363
        %v2380 = vmul.f32 %v2208, %v2364
        %v2381 = vmul.f32 %v2211, %v2365
        %v2382 = vmul.f32 %v2216, %v2366
        %v2383 = vmul.f32 %v2219, %v2367
        %v2384 = vmul.f32 %v2224, %v2368
        %v2385 = vmul.f32 %v2227, %v2369
        %v2386 = vmul.f32 %v2232, %v2370
        %v2387 = vmul.f32 %v2235, %v2371
        %v2388 = vmul.f32 %v2240, %v2372
        %v2389 = vmul.f32 %v2243, %v2373
        %v2390 = vpack.c.bf16 %v2375, %v2374
        %v2391 = vpack.c.bf16 %v2377, %v2376
        %v2392 = vpack.c.bf16 %v2379, %v2378
        %v2393 = vpack.c.bf16 %v2381, %v2380
        %v2394 = vpack.c.bf16 %v2383, %v2382
        %v2395 = vpack.c.bf16 %v2385, %v2384
        %v2396 = vpack.c.bf16 %v2387, %v2386
        %v2397 = vpack.c.bf16 %v2389, %v2388
        %v2398 = vld [vmem:[#allocation12] sm:$0xf]
        %v2399 = vld [vmem:[#allocation12 + $0x4] sm:$0xf]
        %v2400 = vld [vmem:[#allocation12 + $0x8] sm:$0xf]
        %v2401 = vld [vmem:[#allocation12 + $0xc] sm:$0xf]
        %v2402 = vld [vmem:[#allocation12 + $0x10] sm:$0xf]
        %v2403 = vld [vmem:[#allocation12 + $0x14] sm:$0xf]
        %v2404 = vld [vmem:[#allocation12 + $0x18] sm:$0xf]
        %v2405 = vld [vmem:[#allocation12 + $0x1c] sm:$0xf]
        %v2406 = vld [vmem:[#allocation12 + $0x20] sm:$0xf]
        %v2407 = vld [vmem:[#allocation12 + $0x24] sm:$0xf]
        %v2408 = vld [vmem:[#allocation12 + $0x28] sm:$0xf]
        %v2409 = vld [vmem:[#allocation12 + $0x2c] sm:$0xf]
        %v2410 = vld [vmem:[#allocation12 + $0x30] sm:$0xf]
        %v2411 = vld [vmem:[#allocation12 + $0x34] sm:$0xf]
        %v2412 = vld [vmem:[#allocation12 + $0x38] sm:$0xf]
        %v2413 = vld [vmem:[#allocation12 + $0x3c] sm:$0xf]
        %v2415 = vlaneseq
        %v2416 = vshrl.u32 %v2415, 7
        %v2417 = vsub.s32 0, %v2416
        %v2418 = vrot.slane %v592, %v2417
        %v2436 = vunpack.c.l.b16 %v2398
        %v2437 = vunpack.c.l.b16 %v2399
        %v2438 = vunpack.c.l.b16 %v2400
        %v2439 = vunpack.c.l.b16 %v2401
        %v2440 = vunpack.c.l.b16 %v2402
        %v2441 = vunpack.c.l.b16 %v2403
        %v2442 = vunpack.c.l.b16 %v2404
        %v2443 = vunpack.c.l.b16 %v2405
        %v2444 = vunpack.c.l.b16 %v2406
        %v2445 = vunpack.c.l.b16 %v2407
        %v2446 = vunpack.c.l.b16 %v2408
        %v2447 = vunpack.c.l.b16 %v2409
        %v2448 = vunpack.c.l.b16 %v2410
        %v2449 = vunpack.c.l.b16 %v2411
        %v2450 = vunpack.c.l.b16 %v2412
        %v2451 = vunpack.c.l.b16 %v2413
        %v2452 = vpack.c.b16 %v2437, %v2436
        %v2453 = vpack.c.b16 %v2439, %v2438
        %v2454 = vpack.c.b16 %v2441, %v2440
        %v2455 = vpack.c.b16 %v2443, %v2442
        %v2456 = vpack.c.b16 %v2445, %v2444
        %v2457 = vpack.c.b16 %v2447, %v2446
        %v2458 = vpack.c.b16 %v2449, %v2448
        %v2459 = vpack.c.b16 %v2451, %v2450
        %2468 = vmatprep.subr.bf16.mxu0 0
        %2469 = vmatpush1.bf16.msra.mxu0 %v2459
        %2470 = vmatprep.subr.bf16.mxu0 0
        %2471 = vmatpush1.bf16.msra.mxu0 %v2458
        %2472 = vmatprep.subr.bf16.mxu0 0
        %2473 = vmatpush1.bf16.msra.mxu0 %v2457
        %2474 = vmatprep.subr.bf16.mxu0 0
        %2475 = vmatpush1.bf16.msra.mxu0 %v2456
        %2476 = vmatprep.subr.bf16.mxu0 0
        %2477 = vmatpush1.bf16.msra.mxu0 %v2455
        %2478 = vmatprep.subr.bf16.mxu0 0
        %2479 = vmatpush1.bf16.msra.mxu0 %v2454
        %2480 = vmatprep.subr.bf16.mxu0 0
        %2481 = vmatpush1.bf16.msra.mxu0 %v2453
        %2482 = vmatprep.subr.bf16.mxu0 0
        %2483 = vmatpush1.bf16.msra.mxu0 %v2452
        %2484 = vmatprep.subr.bf16.mxu0 0
        %2485 = vmatpush2.bf16.msra.mxu0 0
        %2486 = vmatprep.subr.bf16.mxu0 0
        %2487 = vmatpush2.bf16.msra.mxu0 0
        %2488 = vmatprep.subr.bf16.mxu0 0
        %2489 = vmatpush2.bf16.msra.mxu0 0
        %2490 = vmatprep.subr.bf16.mxu0 0
        %2491 = vmatpush2.bf16.msra.mxu0 0
        %2492 = vmatprep.subr.bf16.mxu0 0
        %2493 = vmatpush2.bf16.msra.mxu0 0
        %2494 = vmatprep.subr.bf16.mxu0 0
        %2495 = vmatpush2.bf16.msra.mxu0 0
        %2496 = vmatprep.subr.bf16.mxu0 0
        %2497 = vmatpush2.bf16.msra.mxu0 0
        %2498 = vmatprep.subr.bf16.mxu0 0
        %2499 = vmatpush2.bf16.msra.mxu0 0
        %2500 = vmatprep.mubr.bf16.mxu0 0
        %2501 = vmatmul.mubr.bf16.gmra.mxu0 %v2390
        %v2502 = vpop.f32.mrf.mxu0
        %v2503 = vadd.f32 %v2418, %v2502
        %v2504 = vpop.f32.mrf.mxu0
        %v2505 = vpop.f32.mrf.mxu0
        %v2506 = vadd.f32 %v2418, %v2505
        %v2507 = vpop.f32.mrf.mxu0
        %2508 = vmatprep.mubr.bf16.mxu0 0
        %2509 = vmatmul.mubr.bf16.gmra.mxu0 %v2391
        %v2510 = vpop.f32.mrf.mxu0
        %v2511 = vadd.f32 %v2418, %v2510
        %v2512 = vpop.f32.mrf.mxu0
        %v2513 = vpop.f32.mrf.mxu0
        %v2514 = vadd.f32 %v2418, %v2513
        %v2515 = vpop.f32.mrf.mxu0
        %2516 = vmatprep.mubr.bf16.mxu0 0
        %2517 = vmatmul.mubr.bf16.gmra.mxu0 %v2392
        %v2518 = vpop.f32.mrf.mxu0
        %v2519 = vadd.f32 %v2418, %v2518
        %v2520 = vpop.f32.mrf.mxu0
        %v2521 = vpop.f32.mrf.mxu0
        %v2522 = vadd.f32 %v2418, %v2521
        %v2523 = vpop.f32.mrf.mxu0
        %2524 = vmatprep.mubr.bf16.mxu0 0
        %2525 = vmatmul.mubr.bf16.gmra.mxu0 %v2393
        %v2526 = vpop.f32.mrf.mxu0
        %v2527 = vadd.f32 %v2418, %v2526
        %v2528 = vpop.f32.mrf.mxu0
        %v2529 = vpop.f32.mrf.mxu0
        %v2530 = vadd.f32 %v2418, %v2529
        %v2531 = vpop.f32.mrf.mxu0
        %2532 = vmatprep.mubr.bf16.mxu0 0
        %2533 = vmatmul.mubr.bf16.gmra.mxu0 %v2394
        %v2534 = vpop.f32.mrf.mxu0
        %v2535 = vadd.f32 %v2418, %v2534
        %v2536 = vpop.f32.mrf.mxu0
        %v2537 = vpop.f32.mrf.mxu0
        %v2538 = vadd.f32 %v2418, %v2537
        %v2539 = vpop.f32.mrf.mxu0
        %2540 = vmatprep.mubr.bf16.mxu0 0
        %2541 = vmatmul.mubr.bf16.gmra.mxu0 %v2395
        %v2542 = vpop.f32.mrf.mxu0
        %v2543 = vadd.f32 %v2418, %v2542
        %v2544 = vpop.f32.mrf.mxu0
        %v2545 = vpop.f32.mrf.mxu0
        %v2546 = vadd.f32 %v2418, %v2545
        %v2547 = vpop.f32.mrf.mxu0
        %2548 = vmatprep.mubr.bf16.mxu0 0
        %2549 = vmatmul.mubr.bf16.gmra.mxu0 %v2396
        %v2550 = vpop.f32.mrf.mxu0
        %v2551 = vadd.f32 %v2418, %v2550
        %v2552 = vpop.f32.mrf.mxu0
        %v2553 = vpop.f32.mrf.mxu0
        %v2554 = vadd.f32 %v2418, %v2553
        %v2555 = vpop.f32.mrf.mxu0
        %2556 = vmatprep.mubr.bf16.mxu0 0
        %2557 = vmatmul.mubr.bf16.gmra.mxu0 %v2397
        %v2558 = vpop.f32.mrf.mxu0
        %v2559 = vadd.f32 %v2418, %v2558
        %v2560 = vpop.f32.mrf.mxu0
        %v2561 = vpop.f32.mrf.mxu0
        %v2562 = vadd.f32 %v2418, %v2561
        %v2563 = vpop.f32.mrf.mxu0
        %2564 = vdwg.mxu0
        %v2565 = vadd.f32 %v1835, %v2503
        %v2566 = vadd.f32 %v1836, %v2506
        %v2567 = vadd.f32 %v1837, %v2511
        %v2568 = vadd.f32 %v1838, %v2514
        %v2569 = vadd.f32 %v1839, %v2519
        %v2570 = vadd.f32 %v1840, %v2522
        %v2571 = vadd.f32 %v1841, %v2527
        %v2572 = vadd.f32 %v1842, %v2530
        %v2573 = vadd.f32 %v1843, %v2535
        %v2574 = vadd.f32 %v1844, %v2538
        %v2575 = vadd.f32 %v1845, %v2543
        %v2576 = vadd.f32 %v1846, %v2546
        %v2577 = vadd.f32 %v1847, %v2551
        %v2578 = vadd.f32 %v1848, %v2554
        %v2579 = vadd.f32 %v1849, %v2559
        %v2580 = vadd.f32 %v1850, %v2562
        %2581 = vst [vmem:[%s575] sm:$0xff] %v2565
        %2582 = vst [vmem:[%s575 + $0x8] sm:$0xff] %v2566
        %2583 = vst [vmem:[%s575 + $0x10] sm:$0xff] %v2567
        %2584 = vst [vmem:[%s575 + $0x18] sm:$0xff] %v2568
        %2585 = vst [vmem:[%s575 + $0x20] sm:$0xff] %v2569
        %2586 = vst [vmem:[%s575 + $0x28] sm:$0xff] %v2570
        %2587 = vst [vmem:[%s575 + $0x30] sm:$0xff] %v2571
        %2588 = vst [vmem:[%s575 + $0x38] sm:$0xff] %v2572
        %2589 = vst [vmem:[%s575 + $0x40] sm:$0xff] %v2573
        %2590 = vst [vmem:[%s575 + $0x48] sm:$0xff] %v2574
        %2591 = vst [vmem:[%s575 + $0x50] sm:$0xff] %v2575
        %2592 = vst [vmem:[%s575 + $0x58] sm:$0xff] %v2576
        %2593 = vst [vmem:[%s575 + $0x60] sm:$0xff] %v2577
        %2594 = vst [vmem:[%s575 + $0x68] sm:$0xff] %v2578
        %2595 = vst [vmem:[%s575 + $0x70] sm:$0xff] %v2579
        %2596 = vst [vmem:[%s575 + $0x78] sm:$0xff] %v2580
        %s2597 = sand.u32 %s335, 1
        %s2598 = scalar_lea.sflag [#allocation5], %s2597
        %s2599 = sand.u32 %s335, 1
        %s2600 = smul.addr %s2599, 128
        %s2601 = scalar_lea.vmem [#allocation14], %s2600
        // Predicated region
        $region101: #{tpu_custom_call.1} parent=71 // pred_check
          %p2602 = pneg %p345
        $region102: #{tpu_custom_call.1} parent=71 // pred_check_branch
          %2604 = sbr.rel (%p2602) target = $region104
        $region103: #{tpu_custom_call.1} parent=71 // pred_region
          #allocation18 [shape = 'u32[6]{0}', space=smem, size = 0x18, scoped, tag = 'DMA stride descriptor']
          %s2605 = smul.u32 2, %s37
          %s2606 = smul.u32 8, %s38
          %s2608 = ssub.s32 2048, 2048
          %2609 = vsyncadd %s2598, %s2608
          %s2610 = smul.addr %s2605, 16
          %s2611 = sadd.s32 %s2606, %s2610
          %s2612 = smul.addr %s2611, 128
          %s2613 = scalar_lea.hbm %s13, %s2612
          %s2615 = sshll.u32 1, 14
          %s2616 = sxor.u32 4294967295, %s2615
          %s2619 = sshll.u32 7, 18
          %s2620 = sxor.u32 4294967295, %s2619
          %s2621 = sand.u32 0, %s2620
          %s2623 = sor.u32 %s2621, 0
          %s2624 = sshll.u32 %s2601, 4
          %s2625 = int_to_ptr.vmem [resolvable:$true] %s2624
          %2631 = sst [smem:[#allocation18]] 1024
          %s2632 = scalar_lea.smem [#allocation18], 1
          %2633 = sst [smem:[%s2632]] 2048
          %s2634 = scalar_lea.smem [#allocation18], 2
          %2635 = sst [smem:[%s2634]] 8
          %s2636 = scalar_lea.smem [#allocation18], 3
          %2637 = sst [smem:[%s2636]] 128
          %s2638 = scalar_lea.smem [#allocation18], 4
          %2639 = sst [smem:[%s2638]] 128
          %s2640 = scalar_lea.smem [#allocation18], 5
          %2641 = sst [smem:[%s2640]] 8
          %2643 = dma.general %s2625, 2048, %s2613, %s2598, 131072, [#allocation18], %s2623, 0
        $region104: #{tpu_custom_call.1} parent=71 // pred_fallthru
          _
      $region72: #{tpu_custom_call.1} parent=5 // pred_fallthru
        _
      %p2644 = scmp.le.s32.totalorder 2, %s28
      // Predicated region
      $region105: #{tpu_custom_call.1} parent=5 // pred_check
        %p2645 = pneg %p2644
      $region106: #{tpu_custom_call.1} parent=5 // pred_check_branch
        %2647 = sbr.rel (%p2645) target = $region108
      $region107: #{tpu_custom_call.1} parent=5 // pred_region
        %s2648 = ssub.s32 %s28, 2
        // Predicated region
        $region109: #{tpu_custom_call.1} parent=107 // pred_check
          %p2649 = pneg %p351
        $region110: #{tpu_custom_call.1} parent=107 // pred_check_branch
          %2651 = sbr.rel (%p2649) target = $region112
        $region111: #{tpu_custom_call.1} parent=107 // pred_region
          %s2652 = sand.u32 %s336, 1
          %s2653 = scalar_lea.sflag [#allocation5], %s2652
          %s2654 = sand.u32 %s336, 1
          %s2655 = smul.addr %s2654, 128
          %s2656 = scalar_lea.vmem [#allocation14], %s2655
          %2657 = dma.done %s2653, 2048
        $region112: #{tpu_custom_call.1} parent=107 // pred_fallthru
          _
      $region108: #{tpu_custom_call.1} parent=5 // pred_fallthru
        _
    $region6: #{tpu_custom_call.1} parent=1 // loop_footer
      %s32 = sadd.s32 1, %s28
    $region7: #{tpu_custom_call.1} parent=1 // loop_footer_branch
      %27 = sbr.rel target = $region3
    $region8: #{tpu_custom_call.1} parent=1 // loop_exit
      _
    %2658 = vsyncpa [#allocation4], 1
    %s2659 = scalar_lea.sflag [#allocation4], 1
    %2660 = vsyncpa %s2659, 1
    %2661 = vsyncpa [#allocation7], 1
    %2662 = vsyncpa [#allocation10], 1
    %2663 = vsyncpa [#allocation13], 1
    %2664 = vsyncpa [#allocation5], 1
    %s2665 = scalar_lea.sflag [#allocation5], 1
    %2666 = vsyncpa %s2665, 1

</llo_original>
